<compile_context>
chip_gen: v7x
topology: tpu7x:2x2x1
jax: 0.10.0
libtpu: 0.0.40
codegen_flags: <defaults>
</compile_context>

<pallas_src>
import functools
import math

import jax
import jax.numpy as jnp
from jax import lax
from jax.experimental import pallas as pl
from jax.experimental.pallas import tpu as pltpu

PAD_NUM = 0
LN_EPS = 1e-5
NEG_INF = -1e9
# MXU input dtype (f32 accumulation everywhere; softmax / LayerNorm stay f32).
COMPUTE_DTYPE = jnp.bfloat16
# Explicit scoped-VMEM budget: above the 16/32 MiB defaults, below v7x physical.
VMEM_LIMIT_BYTES = 48 * 1024 * 1024


# ----------------------------------------------------------------------------
# Fused per-decoder-block kernel (grid = (batch, q_tile), both parallel)
# ----------------------------------------------------------------------------
def _decoder_block_kernel(
        xq_ref, xk_ref, enc_ref, dbias_ref, ebias_ref,
        wq1_ref, bq1_ref, wkv1_ref, bkv1_ref, wo1_ref, bo1_ref, g1_ref, be1_ref,
        wq2_ref, bq2_ref, wkv2_ref, bkv2_ref, wo2_ref, bo2_ref, g2_ref, be2_ref,
        wf1_ref, bf1_ref, wf2_ref, bf2_ref, g3_ref, be3_ref,
        o_ref, *, head, qk, vd, eps):
    cdt = COMPUTE_DTYPE
    xq = xq_ref[0]                     # (tq, E)     f32  query rows / residual
    xk = xk_ref[0]                     # (S, E)      f32  full decoder seq (K/V)
    enc = enc_ref[0]                   # (S_enc, E)  f32
    tq, E = xq.shape
    S = xk.shape[0]
    Hqk = head * qk
    scale = 1.0 / math.sqrt(qk)

    def mm(a, w_ref, b_ref):           # bf16 MXU inputs, f32 accumulation
        return jnp.dot(a.astype(cdt), w_ref[...],
                       preferred_element_type=jnp.float32) + b_ref[...]

    def add_ln(z, res, g_ref, b_ref):  # residual add + LayerNorm (f32 VPU math)
        y = z + res
        mu = jnp.mean(y, axis=-1, keepdims=True)
        var = jnp.mean(jnp.square(y - mu), axis=-1, keepdims=True)
        return (y - mu) * lax.rsqrt(var + eps) * g_ref[...] + b_ref[...]

    def mha(q, k, v, mask, wo_ref, bo_ref):
        # q: (tq, Hqk) bf16 (scale already folded in), k: (Sk, Hqk) bf16,
        # v: (Sk, HV) bf16.  Per-head scores/softmax; head outputs are written
        # into one (tq, HV) slab so the output projection is a single matmul
        # with contraction width HV (= E) instead of per-head vd-wide matmuls.
        heads_out = []
        for h in range(head):
            s = lax.dot_general(q[:, h * qk:(h + 1) * qk],
                                k[:, h * qk:(h + 1) * qk],
                                (((1,), (1,)), ((), ())),
                                preferred_element_type=jnp.float32)   # (tq, Sk)
            s = s + mask
            s = s - jnp.max(s, axis=-1, keepdims=True)
            e = jnp.exp(s)
            p = e * (1.0 / jnp.sum(e, axis=-1, keepdims=True))        # exact
            heads_out.append(jnp.dot(p.astype(cdt), v[:, h * vd:(h + 1) * vd],
                                     preferred_element_type=jnp.float32))
        o_slab = jnp.concatenate(heads_out, axis=-1).astype(cdt)     # (tq, HV)
        return jnp.dot(o_slab, wo_ref[...],
                       preferred_element_type=jnp.float32) + bo_ref[...]

    # Attention masks built per q-tile from precomputed additive PAD bias rows.
    # Reference: mask where (key_is_PAD OR tril(ones, diagonal=1)) -> -1e9.
    qi = pl.program_id(1)
    row = lax.broadcasted_iota(jnp.int32, (tq, S), 0) + qi * tq       # global q row
    col = lax.broadcasted_iota(jnp.int32, (tq, S), 1)
    tri = col <= row + 1
    mask1 = jnp.where(tri, jnp.float32(NEG_INF), dbias_ref[0])        # (tq, S)
    mask2 = ebias_ref[0]                                              # (1, S_enc)

    # ---- masked self-attention -> proj -> add & LN
    q1 = (mm(xq, wq1_ref, bq1_ref) * scale).astype(cdt)               # (tq, Hqk)
    kv1 = mm(xk, wkv1_ref, bkv1_ref).astype(cdt)                      # (S, Hqk+HV)
    z = mha(q1, kv1[:, :Hqk], kv1[:, Hqk:], mask1, wo1_ref, bo1_ref)
    h1 = add_ln(z, xq, g1_ref, be1_ref)

    # ---- cross-attention (K/V from encoder_result) -> proj -> add & LN
    q2 = (mm(h1, wq2_ref, bq2_ref) * scale).astype(cdt)               # (tq, Hqk)
    kv2 = mm(enc, wkv2_ref, bkv2_ref).astype(cdt)                     # (S_enc, Hqk+HV)
    z = mha(q2, kv2[:, :Hqk], kv2[:, Hqk:], mask2, wo2_ref, bo2_ref)
    h2 = add_ln(z, h1, g2_ref, be2_ref)

    # ---- feed-forward (linear-ReLU-linear) -> add & LN
    f1 = jnp.maximum(mm(h2, wf1_ref, bf1_ref), 0.0)
    z = mm(f1, wf2_ref, bf2_ref)
    o_ref[0] = add_ln(z, h2, g3_ref, be3_ref).astype(o_ref.dtype)


def _pick_q_tile(S):
    # Tile the query sequence when it divides evenly into large tiles;
    # K/V projections are recomputed per q-tile (cheap vs. spilled (S,S) scores).
    for t in (512, 256, 128):
        if S > t and S % t == 0:
            return t
    return S


def decoder_block_fused(blk, x, enc, dec_bias, enc_bias, *, head, qk, vd):
    B, S, E = x.shape
    S_enc = enc.shape[1]
    tq = _pick_q_tile(S)
    Hqk = head * qk
    HV = head * vd
    Dkv = Hqk + HV
    F = blk["wf1"].shape[1]

    def wspec(shape):
        # Grid-constant weights: single-buffered (no point double-buffering a
        # block whose index never changes; halves weight VMEM at real dims).
        return pl.BlockSpec(shape, lambda b, qi: (0, 0),
                            pipeline_mode=pl.Buffered(1))

    in_specs = [
        pl.BlockSpec((1, tq, E), lambda b, qi: (b, qi, 0)),      # x (query tile)
        pl.BlockSpec((1, S, E), lambda b, qi: (b, 0, 0)),        # x (full, self K/V)
        pl.BlockSpec((1, S_enc, E), lambda b, qi: (b, 0, 0)),    # encoder_result
        pl.BlockSpec((1, 1, S), lambda b, qi: (b, 0, 0)),        # dec PAD bias
        pl.BlockSpec((1, 1, S_enc), lambda b, qi: (b, 0, 0)),    # enc PAD bias
        wspec((E, Hqk)), wspec((1, Hqk)),                        # wq1, bq1
        wspec((E, Dkv)), wspec((1, Dkv)),                        # wkv1, bkv1
        wspec((HV, E)), wspec((1, E)), wspec((1, E)), wspec((1, E)),  # wo1, bo1, ln1
        wspec((E, Hqk)), wspec((1, Hqk)),                        # wq2, bq2
        wspec((E, Dkv)), wspec((1, Dkv)),                        # wkv2, bkv2
        wspec((HV, E)), wspec((1, E)), wspec((1, E)), wspec((1, E)),  # wo2, bo2, ln2
        wspec((E, F)), wspec((1, F)),                            # wf1, bf1
        wspec((F, E)), wspec((1, E)), wspec((1, E)), wspec((1, E)),   # wf2, bf2, ln3
    ]
    return pl.pallas_call(
        functools.partial(_decoder_block_kernel, head=head, qk=qk, vd=vd,
                          eps=LN_EPS),
        grid=(B, S // tq),
        in_specs=in_specs,
        out_specs=pl.BlockSpec((1, tq, E), lambda b, qi: (b, qi, 0)),
        out_shape=jax.ShapeDtypeStruct((B, S, E), jnp.float32),
        compiler_params=pltpu.CompilerParams(
            dimension_semantics=("parallel", "parallel"),
            vmem_limit_bytes=VMEM_LIMIT_BYTES),
    )(x, x, enc, dec_bias, enc_bias,
      blk["wq1"], blk["bq1"], blk["wkv1"], blk["bkv1"], blk["wo1"], blk["bo1"],
      blk["ln1_g"], blk["ln1_b"],
      blk["wq2"], blk["bq2"], blk["wkv2"], blk["bkv2"], blk["wo2"], blk["bo2"],
      blk["ln2_g"], blk["ln2_b"],
      blk["wf1"], blk["bf1"], blk["wf2"], blk["bf2"], blk["ln3_g"], blk["ln3_b"])


# ----------------------------------------------------------------------------
# Tiled linear for the final vocab projection (N outer so W streams once)
# ----------------------------------------------------------------------------
def _linear_kernel(x_ref, w_ref, b_ref, o_ref):
    o_ref[...] = (jnp.dot(x_ref[...].astype(COMPUTE_DTYPE), w_ref[...],
                          preferred_element_type=jnp.float32)
                  + b_ref[...]).astype(o_ref.dtype)


def _pick_tile(dim, prefs):
    for p in prefs:
        if dim > p and dim % p == 0:
            return p
    return dim


def pallas_linear(x2d, w, b2d):
    """y = x2d @ w + b.  x2d: (M,K) f32, w: (K,N) bf16, b2d: (1,N) f32.
    Vocab (N) is padded to a multiple of 128 lanes (lane-dense stores) and is
    the OUTER grid axis so each (K, tn) weight tile is DMA'd exactly once."""
    M, K = x2d.shape
    N = w.shape[1]
    N_pad = ((N + 127) // 128) * 128
    if N_pad != N:
        w = jnp.pad(w, ((0, 0), (0, N_pad - N)))
        b2d = jnp.pad(b2d, ((0, 0), (0, N_pad - N)))
    tm = _pick_tile(M, (256, 128))
    tn = _pick_tile(N_pad, (512, 256, 128))
    # K (= emb) is kept whole; for very large emb add a K grid axis + VMEM acc.
    out = pl.pallas_call(
        _linear_kernel,
        grid=(N_pad // tn, M // tm),                 # N outer, M inner
        in_specs=[pl.BlockSpec((tm, K), lambda j, i: (i, 0)),
                  pl.BlockSpec((K, tn), lambda j, i: (0, j)),
                  pl.BlockSpec((1, tn), lambda j, i: (0, j))],
        out_specs=pl.BlockSpec((tm, tn), lambda j, i: (i, j)),
        out_shape=jax.ShapeDtypeStruct((M, N_pad), jnp.float32),
        compiler_params=pltpu.CompilerParams(
            dimension_semantics=("parallel", "parallel"),
            vmem_limit_bytes=VMEM_LIMIT_BYTES),
    )(x2d, w, b2d)
    return out[:, :N] if N_pad != N else out


# ----------------------------------------------------------------------------
# Model glue (params, positional encoding, forward)
# ----------------------------------------------------------------------------
def sinusoid_pos_encoding(seq_len, emb):
    pos = jnp.arange(seq_len, dtype=jnp.float32)[:, None]
    i2 = jnp.arange(0, emb, 2, dtype=jnp.float32)
    angle = pos * jnp.exp(-i2 * math.log(10000.0) / emb)
    pe = jnp.zeros((seq_len, emb), jnp.float32)
    pe = pe.at[:, 0::2].set(jnp.sin(angle))
    pe = pe.at[:, 1::2].set(jnp.cos(angle))
    return pe


def _uniform(key, shape, fan_in):
    lim = 1.0 / math.sqrt(fan_in)
    return jax.random.uniform(key, shape, jnp.float32, -lim, lim)


def init_params(key, vocab, emb, qk, vd, f, head, nblocks):
    cdt = COMPUTE_DTYPE
    keys = jax.random.split(key, nblocks + 2)
    params = {"emb_table": jax.random.normal(keys[0], (vocab, emb), jnp.float32)}
    hqk = head * qk
    hv = head * vd
    dkv = hqk + hv                     # fused [Wk | Wv] output width
    blocks = []
    for i in range(nblocks):
        bk = jax.random.split(keys[1 + i], 16)
        blk = {
            "wq1":  _uniform(bk[0], (emb, hqk), emb).astype(cdt),
            "bq1":  _uniform(bk[1], (1, hqk), emb),
            "wkv1": _uniform(bk[2], (emb, dkv), emb).astype(cdt),
            "bkv1": _uniform(bk[3], (1, dkv), emb),
            "wo1":  _uniform(bk[4], (hv, emb), hv).astype(cdt),
            "bo1":  _uniform(bk[5], (1, emb), hv),
            "wq2":  _uniform(bk[6], (emb, hqk), emb).astype(cdt),
            "bq2":  _uniform(bk[7], (1, hqk), emb),
            "wkv2": _uniform(bk[8], (emb, dkv), emb).astype(cdt),
            "bkv2": _uniform(bk[9], (1, dkv), emb),
            "wo2":  _uniform(bk[10], (hv, emb), hv).astype(cdt),
            "bo2":  _uniform(bk[11], (1, emb), hv),
            "wf1":  _uniform(bk[12], (emb, f), emb).astype(cdt),
            "bf1":  _uniform(bk[13], (1, f), emb),
            "wf2":  _uniform(bk[14], (f, emb), f).astype(cdt),
            "bf2":  _uniform(bk[15], (1, emb), f),
        }
        for n in ("ln1", "ln2", "ln3"):
            blk[n + "_g"] = jnp.ones((1, emb), jnp.float32)
            blk[n + "_b"] = jnp.zeros((1, emb), jnp.float32)
        blocks.append(blk)
    params["blocks"] = blocks
    kw, kb = jax.random.split(keys[-1])
    params["out_w"] = _uniform(kw, (emb, vocab), emb).astype(cdt)
    params["out_b"] = _uniform(kb, (1, vocab), emb)
    return params


def decoder_forward(params, x_ids, enc_ids, encoder_result, pos_table,
                    *, head, qk, vd):
    B, S = x_ids.shape
    E = params["emb_table"].shape[1]

    # EmbeddingWithPosition: gather + shared (S,E) table; dropout is identity.
    h = jnp.take(params["emb_table"], x_ids, axis=0) + pos_table[None, :S, :]

    # Precomputed additive PAD biases (-1e9 / 0); only these tiny rows go to HBM.
    dec_bias = jnp.where(x_ids == PAD_NUM, NEG_INF, 0.0).astype(
        jnp.float32)[:, None, :]                                     # (B,1,S)
    enc_bias = jnp.where(enc_ids == PAD_NUM, NEG_INF, 0.0).astype(
        jnp.float32)[:, None, :]                                     # (B,1,S_enc)

    for blk in params["blocks"]:
        h = decoder_block_fused(blk, h, encoder_result, dec_bias, enc_bias,
                                head=head, qk=qk, vd=vd)

    z = pallas_linear(h.reshape(B * S, E), params["out_w"], params["out_b"])
    return z.reshape(B, S, -1)


# ----------------------------------------------------------------------------
if __name__ == "__main__":
    vocab_size, emb_size, q_k_size, v_size, f_size, head, nblocks = 64, 32, 16, 16, 64, 2, 2
    B, S_dec, S_enc = 2, 8, 10

    key = jax.random.PRNGKey(0)
    kp, kx, ke, kr = jax.random.split(key, 4)

    params = init_params(kp, vocab_size, emb_size, q_k_size, v_size,
                         f_size, head, nblocks)
    pos_table = sinusoid_pos_encoding(max(S_dec, S_enc), emb_size)

    x = jax.random.randint(kx, (B, S_dec), 1, vocab_size, dtype=jnp.int32)
    x = x.at[:, -2:].set(PAD_NUM)                      # some PAD tokens
    encoder_input = jax.random.randint(ke, (B, S_enc), 1, vocab_size, dtype=jnp.int32)
    encoder_input = encoder_input.at[:, -3:].set(PAD_NUM)
    encoder_result = jax.random.normal(kr, (B, S_enc, emb_size), jnp.float32)

    fwd = jax.jit(functools.partial(decoder_forward, head=head,
                                    qk=q_k_size, vd=v_size))
    z = fwd(params, x, encoder_input, encoder_result, pos_table)
    jax.block_until_ready(z)
    assert z.shape == (B, S_dec, vocab_size) and z.dtype == jnp.float32
    print("KERNEL_OK")
</pallas_src>

<mosaic_0001>
module attributes {stable_mosaic.version = 11 : i64} {
  func.func @_linear_kernel(%arg0: i32, %arg1: i32, %arg2: memref<16x32xf32, #tpu.memory_space<vmem>>, %arg3: memref<32x128xbf16, #tpu.memory_space<vmem>>, %arg4: memref<1x128xf32, #tpu.memory_space<vmem>>, %arg5: memref<16x128xf32, #tpu.memory_space<vmem>>) attributes {dimension_semantics = [#tpu.dimension_semantics<parallel>, #tpu.dimension_semantics<parallel>], iteration_bounds = array<i64: 1, 1>, scalar_prefetch = 0 : i64, scratch_operands = 0 : i64, tpu.core_type = #tpu.core_type<tc>, window_params = [{transform_indices = @transform_0, window_bounds = array<i64: 16, 32>}, {transform_indices = @transform_1, window_bounds = array<i64: 32, 128>}, {transform_indices = @transform_2, window_bounds = array<i64: 1, 128>}, {transform_indices = @transform_3, window_bounds = array<i64: 16, 128>}]} {
    %c0 = arith.constant 0 : index
    %c0_0 = arith.constant 0 : index
    %0 = vector.load %arg2[%c0, %c0_0] : memref<16x32xf32, #tpu.memory_space<vmem>>, vector<16x32xf32>
    %1 = arith.truncf %0 : vector<16x32xf32> to vector<16x32xbf16>
    %c0_1 = arith.constant 0 : index
    %c0_2 = arith.constant 0 : index
    %2 = vector.load %arg3[%c0_1, %c0_2] : memref<32x128xbf16, #tpu.memory_space<vmem>>, vector<32x128xbf16>
    %cst = arith.constant dense<0.000000e+00> : vector<16x128xf32>
    %3 = tpu.matmul %1, %2, %cst {dimension_numbers = #tpu.dot_dimension_numbers<[1], [0], [0], [1], [0, 0, 1, 1], [], []>} : vector<16x32xbf16>, vector<32x128xbf16>, vector<16x128xf32> -> vector<16x128xf32>
    %c0_3 = arith.constant 0 : index
    %c0_4 = arith.constant 0 : index
    %4 = vector.load %arg4[%c0_3, %c0_4] : memref<1x128xf32, #tpu.memory_space<vmem>>, vector<1x128xf32>
    %5 = vector.broadcast %4 : vector<1x128xf32> to vector<16x128xf32>
    %6 = arith.addf %3, %5 : vector<16x128xf32>
    %c0_5 = arith.constant 0 : index
    %c0_6 = arith.constant 0 : index
    %7 = vector.load %arg5[%c0_5, %c0_6] : memref<16x128xf32, #tpu.memory_space<vmem>>, vector<16x128xf32>
    tpu.vector_store %arg5[%c0_5, %c0_6], %6 {strides = array<i32>} : memref<16x128xf32, #tpu.memory_space<vmem>>, vector<16x128xf32>,
    return
  }
  func.func @transform_0(%arg0: i32, %arg1: i32) -> (i32, i32) {
    %c0_i32 = arith.constant 0 : i32
    %c0_i32_0 = arith.constant 0 : i32
    return %arg1, %c0_i32 : i32, i32
  }
  func.func @transform_1(%arg0: i32, %arg1: i32) -> (i32, i32) {
    %c0_i32 = arith.constant 0 : i32
    %c0_i32_0 = arith.constant 0 : i32
    return %c0_i32, %arg0 : i32, i32
  }
  func.func @transform_2(%arg0: i32, %arg1: i32) -> (i32, i32) {
    %c0_i32 = arith.constant 0 : i32
    %c0_i32_0 = arith.constant 0 : i32
    return %c0_i32, %arg0 : i32, i32
  }
  func.func @transform_3(%arg0: i32, %arg1: i32) -> (i32, i32) {
    %c0_i32 = arith.constant 0 : i32
    return %arg1, %arg0 : i32, i32
  }
}

module attributes {stable_mosaic.version = 11 : i64} {
  func.func @_decoder_block_kernel(%arg0: i32, %arg1: i32, %arg2: memref<1x8x32xf32, #tpu.memory_space<vmem>>, %arg3: memref<1x8x32xf32, #tpu.memory_space<vmem>>, %arg4: memref<1x10x32xf32, #tpu.memory_space<vmem>>, %arg5: memref<1x1x8xf32, #tpu.memory_space<vmem>>, %arg6: memref<1x1x10xf32, #tpu.memory_space<vmem>>, %arg7: memref<32x32xbf16, #tpu.memory_space<vmem>>, %arg8: memref<1x32xf32, #tpu.memory_space<vmem>>, %arg9: memref<32x64xbf16, #tpu.memory_space<vmem>>, %arg10: memref<1x64xf32, #tpu.memory_space<vmem>>, %arg11: memref<32x32xbf16, #tpu.memory_space<vmem>>, %arg12: memref<1x32xf32, #tpu.memory_space<vmem>>, %arg13: memref<1x32xf32, #tpu.memory_space<vmem>>, %arg14: memref<1x32xf32, #tpu.memory_space<vmem>>, %arg15: memref<32x32xbf16, #tpu.memory_space<vmem>>, %arg16: memref<1x32xf32, #tpu.memory_space<vmem>>, %arg17: memref<32x64xbf16, #tpu.memory_space<vmem>>, %arg18: memref<1x64xf32, #tpu.memory_space<vmem>>, %arg19: memref<32x32xbf16, #tpu.memory_space<vmem>>, %arg20: memref<1x32xf32, #tpu.memory_space<vmem>>, %arg21: memref<1x32xf32, #tpu.memory_space<vmem>>, %arg22: memref<1x32xf32, #tpu.memory_space<vmem>>, %arg23: memref<32x64xbf16, #tpu.memory_space<vmem>>, %arg24: memref<1x64xf32, #tpu.memory_space<vmem>>, %arg25: memref<64x32xbf16, #tpu.memory_space<vmem>>, %arg26: memref<1x32xf32, #tpu.memory_space<vmem>>, %arg27: memref<1x32xf32, #tpu.memory_space<vmem>>, %arg28: memref<1x32xf32, #tpu.memory_space<vmem>>, %arg29: memref<1x8x32xf32, #tpu.memory_space<vmem>>) attributes {dimension_semantics = [#tpu.dimension_semantics<parallel>, #tpu.dimension_semantics<parallel>], iteration_bounds = array<i64: 2, 1>, scalar_prefetch = 0 : i64, scratch_operands = 0 : i64, tpu.core_type = #tpu.core_type<tc>, window_params = [{transform_indices = @transform_0, window_bounds = array<i64: 1, 8, 32>}, {transform_indices = @transform_1, window_bounds = array<i64: 1, 8, 32>}, {transform_indices = @transform_2, window_bounds = array<i64: 1, 10, 32>}, {transform_indices = @transform_3, window_bounds = array<i64: 1, 1, 8>}, {transform_indices = @transform_4, window_bounds = array<i64: 1, 1, 10>}, {pipeline_mode = #tpu.pipeline_mode<synchronous>, transform_indices = @transform_5, window_bounds = array<i64: 32, 32>}, {pipeline_mode = #tpu.pipeline_mode<synchronous>, transform_indices = @transform_6, window_bounds = array<i64: 1, 32>}, {pipeline_mode = #tpu.pipeline_mode<synchronous>, transform_indices = @transform_7, window_bounds = array<i64: 32, 64>}, {pipeline_mode = #tpu.pipeline_mode<synchronous>, transform_indices = @transform_8, window_bounds = array<i64: 1, 64>}, {pipeline_mode = #tpu.pipeline_mode<synchronous>, transform_indices = @transform_9, window_bounds = array<i64: 32, 32>}, {pipeline_mode = #tpu.pipeline_mode<synchronous>, transform_indices = @transform_10, window_bounds = array<i64: 1, 32>}, {pipeline_mode = #tpu.pipeline_mode<synchronous>, transform_indices = @transform_11, window_bounds = array<i64: 1, 32>}, {pipeline_mode = #tpu.pipeline_mode<synchronous>, transform_indices = @transform_12, window_bounds = array<i64: 1, 32>}, {pipeline_mode = #tpu.pipeline_mode<synchronous>, transform_indices = @transform_13, window_bounds = array<i64: 32, 32>}, {pipeline_mode = #tpu.pipeline_mode<synchronous>, transform_indices = @transform_14, window_bounds = array<i64: 1, 32>}, {pipeline_mode = #tpu.pipeline_mode<synchronous>, transform_indices = @transform_15, window_bounds = array<i64: 32, 64>}, {pipeline_mode = #tpu.pipeline_mode<synchronous>, transform_indices = @transform_16, window_bounds = array<i64: 1, 64>}, {pipeline_mode = #tpu.pipeline_mode<synchronous>, transform_indices = @transform_17, window_bounds = array<i64: 32, 32>}, {pipeline_mode = #tpu.pipeline_mode<synchronous>, transform_indices = @transform_18, window_bounds = array<i64: 1, 32>}, {pipeline_mode = #tpu.pipeline_mode<synchronous>, transform_indices = @transform_19, window_bounds = array<i64: 1, 32>}, {pipeline_mode = #tpu.pipeline_mode<synchronous>, transform_indices = @transform_20, window_bounds = array<i64: 1, 32>}, {pipeline_mode = #tpu.pipeline_mode<synchronous>, transform_indices = @transform_21, window_bounds = array<i64: 32, 64>}, {pipeline_mode = #tpu.pipeline_mode<synchronous>, transform_indices = @transform_22, window_bounds = array<i64: 1, 64>}, {pipeline_mode = #tpu.pipeline_mode<synchronous>, transform_indices = @transform_23, window_bounds = array<i64: 64, 32>}, {pipeline_mode = #tpu.pipeline_mode<synchronous>, transform_indices = @transform_24, window_bounds = array<i64: 1, 32>}, {pipeline_mode = #tpu.pipeline_mode<synchronous>, transform_indices = @transform_25, window_bounds = array<i64: 1, 32>}, {pipeline_mode = #tpu.pipeline_mode<synchronous>, transform_indices = @transform_26, window_bounds = array<i64: 1, 32>}, {transform_indices = @transform_27, window_bounds = array<i64: 1, 8, 32>}]} {
    %c0 = arith.constant 0 : index
    %c0_0 = arith.constant 0 : index
    %c0_1 = arith.constant 0 : index
    %0 = vector.load %arg2[%c0, %c0_0, %c0_1] : memref<1x8x32xf32, #tpu.memory_space<vmem>>, vector<1x8x32xf32>
    %1 = vector.shape_cast %0 : vector<1x8x32xf32> to vector<8x32xf32>
    %c0_2 = arith.constant 0 : index
    %c0_3 = arith.constant 0 : index
    %c0_4 = arith.constant 0 : index
    %2 = vector.load %arg3[%c0_2, %c0_3, %c0_4] : memref<1x8x32xf32, #tpu.memory_space<vmem>>, vector<1x8x32xf32>
    %3 = vector.shape_cast %2 : vector<1x8x32xf32> to vector<8x32xf32>
    %c0_5 = arith.constant 0 : index
    %c0_6 = arith.constant 0 : index
    %c0_7 = arith.constant 0 : index
    %4 = vector.load %arg4[%c0_5, %c0_6, %c0_7] : memref<1x10x32xf32, #tpu.memory_space<vmem>>, vector<1x10x32xf32>
    %5 = vector.shape_cast %4 : vector<1x10x32xf32> to vector<10x32xf32>
    %6 = tpu.iota {dimensions = array<i32: 0>} : vector<8x8xi32>
    %c8_i32 = arith.constant 8 : i32
    %7 = arith.muli %arg1, %c8_i32 : i32
    %8 = vector.broadcast %7 : i32 to vector<8x8xi32>
    %9 = arith.addi %6, %8 : vector<8x8xi32>
    %10 = tpu.iota {dimensions = array<i32: 1>} : vector<8x8xi32>
    %c1_i32 = arith.constant 1 : i32
    %11 = vector.broadcast %c1_i32 : i32 to vector<8x8xi32>
    %12 = arith.addi %9, %11 : vector<8x8xi32>
    %13 = arith.cmpi sle, %10, %12 : vector<8x8xi32>
    %c0_8 = arith.constant 0 : index
    %c0_9 = arith.constant 0 : index
    %c0_10 = arith.constant 0 : index
    %14 = vector.load %arg5[%c0_8, %c0_9, %c0_10] : memref<1x1x8xf32, #tpu.memory_space<vmem>>, vector<1x1x8xf32>
    %15 = vector.shape_cast %14 : vector<1x1x8xf32> to vector<1x8xf32>
    %cst = arith.constant -1.000000e+09 : f32
    %16 = vector.broadcast %cst : f32 to vector<8x8xf32>
    %17 = vector.shape_cast %15 : vector<1x8xf32> to vector<1x8xf32>
    %18 = vector.broadcast %17 : vector<1x8xf32> to vector<8x8xf32>
    %19 = arith.select %13, %16, %18 : vector<8x8xi1>, vector<8x8xf32>
    %c0_11 = arith.constant 0 : index
    %c0_12 = arith.constant 0 : index
    %c0_13 = arith.constant 0 : index
    %20 = vector.load %arg6[%c0_11, %c0_12, %c0_13] : memref<1x1x10xf32, #tpu.memory_space<vmem>>, vector<1x1x10xf32>
    %21 = vector.shape_cast %20 : vector<1x1x10xf32> to vector<1x10xf32>
    %22 = arith.truncf %1 : vector<8x32xf32> to vector<8x32xbf16>
    %c0_14 = arith.constant 0 : index
    %c0_15 = arith.constant 0 : index
    %23 = vector.load %arg7[%c0_14, %c0_15] : memref<32x32xbf16, #tpu.memory_space<vmem>>, vector<32x32xbf16>
    %cst_16 = arith.constant dense<0.000000e+00> : vector<8x32xf32>
    %24 = tpu.matmul %22, %23, %cst_16 {dimension_numbers = #tpu.dot_dimension_numbers<[1], [0], [0], [1], [0, 0, 1, 1], [], []>} : vector<8x32xbf16>, vector<32x32xbf16>, vector<8x32xf32> -> vector<8x32xf32>
    %c0_17 = arith.constant 0 : index
    %c0_18 = arith.constant 0 : index
    %25 = vector.load %arg8[%c0_17, %c0_18] : memref<1x32xf32, #tpu.memory_space<vmem>>, vector<1x32xf32>
    %26 = vector.broadcast %25 : vector<1x32xf32> to vector<8x32xf32>
    %27 = arith.addf %24, %26 : vector<8x32xf32>
    %cst_19 = arith.constant 2.500000e-01 : f32
    %28 = vector.broadcast %cst_19 : f32 to vector<8x32xf32>
    %29 = arith.mulf %27, %28 : vector<8x32xf32>
    %30 = arith.truncf %29 : vector<8x32xf32> to vector<8x32xbf16>
    %31 = arith.truncf %3 : vector<8x32xf32> to vector<8x32xbf16>
    %c0_20 = arith.constant 0 : index
    %c0_21 = arith.constant 0 : index
    %32 = vector.load %arg9[%c0_20, %c0_21] : memref<32x64xbf16, #tpu.memory_space<vmem>>, vector<32x64xbf16>
    %cst_22 = arith.constant dense<0.000000e+00> : vector<8x64xf32>
    %33 = tpu.matmul %31, %32, %cst_22 {dimension_numbers = #tpu.dot_dimension_numbers<[1], [0], [0], [1], [0, 0, 1, 1], [], []>} : vector<8x32xbf16>, vector<32x64xbf16>, vector<8x64xf32> -> vector<8x64xf32>
    %c0_23 = arith.constant 0 : index
    %c0_24 = arith.constant 0 : index
    %34 = vector.load %arg10[%c0_23, %c0_24] : memref<1x64xf32, #tpu.memory_space<vmem>>, vector<1x64xf32>
    %35 = vector.broadcast %34 : vector<1x64xf32> to vector<8x64xf32>
    %36 = arith.addf %33, %35 : vector<8x64xf32>
    %37 = arith.truncf %36 : vector<8x64xf32> to vector<8x64xbf16>
    %38 = vector.extract_strided_slice %37 {offsets = [0, 0], sizes = [8, 32], strides = [1, 1]} : vector<8x64xbf16> to vector<8x32xbf16>
    %39 = vector.extract_strided_slice %37 {offsets = [0, 32], sizes = [8, 32], strides = [1, 1]} : vector<8x64xbf16> to vector<8x32xbf16>
    %40 = vector.extract_strided_slice %30 {offsets = [0, 0], sizes = [8, 16], strides = [1, 1]} : vector<8x32xbf16> to vector<8x16xbf16>
    %41 = vector.extract_strided_slice %38 {offsets = [0, 0], sizes = [8, 16], strides = [1, 1]} : vector<8x32xbf16> to vector<8x16xbf16>
    %cst_25 = arith.constant dense<0.000000e+00> : vector<8x8xf32>
    %42 = tpu.matmul %40, %41, %cst_25 {dimension_numbers = #tpu.dot_dimension_numbers<[1], [1], [0], [0], [0, 0, 1, 0], [], []>} : vector<8x16xbf16>, vector<8x16xbf16>, vector<8x8xf32> -> vector<8x8xf32>
    %43 = arith.addf %42, %19 : vector<8x8xf32>
    %cst_26 = arith.constant dense<0xFF800000> : vector<8xf32>
    %44 = vector.multi_reduction <maximumf>, %43, %cst_26 [1] : vector<8x8xf32> to vector<8xf32>
    %45 = vector.shape_cast %44 : vector<8xf32> to vector<8x1xf32>
    %46 = vector.broadcast %45 : vector<8x1xf32> to vector<8x8xf32>
    %47 = arith.subf %43, %46 : vector<8x8xf32>
    %48 = math.exp %47 : vector<8x8xf32>
    %cst_27 = arith.constant dense<0.000000e+00> : vector<8xf32>
    %49 = vector.multi_reduction <add>, %48, %cst_27 [1] : vector<8x8xf32> to vector<8xf32>
    %50 = vector.shape_cast %49 : vector<8xf32> to vector<8x1xf32>
    %cst_28 = arith.constant 1.000000e+00 : f32
    %51 = vector.broadcast %cst_28 : f32 to vector<8x1xf32>
    %52 = arith.divf %51, %50 : vector<8x1xf32>
    %53 = vector.broadcast %52 : vector<8x1xf32> to vector<8x8xf32>
    %54 = arith.mulf %48, %53 : vector<8x8xf32>
    %55 = arith.truncf %54 : vector<8x8xf32> to vector<8x8xbf16>
    %56 = vector.extract_strided_slice %39 {offsets = [0, 0], sizes = [8, 16], strides = [1, 1]} : vector<8x32xbf16> to vector<8x16xbf16>
    %cst_29 = arith.constant dense<0.000000e+00> : vector<8x16xf32>
    %57 = tpu.matmul %55, %56, %cst_29 {dimension_numbers = #tpu.dot_dimension_numbers<[1], [0], [0], [1], [0, 0, 1, 1], [], []>} : vector<8x8xbf16>, vector<8x16xbf16>, vector<8x16xf32> -> vector<8x16xf32>
    %58 = vector.extract_strided_slice %30 {offsets = [0, 16], sizes = [8, 16], strides = [1, 1]} : vector<8x32xbf16> to vector<8x16xbf16>
    %59 = vector.extract_strided_slice %38 {offsets = [0, 16], sizes = [8, 16], strides = [1, 1]} : vector<8x32xbf16> to vector<8x16xbf16>
    %cst_30 = arith.constant dense<0.000000e+00> : vector<8x8xf32>
    %60 = tpu.matmul %58, %59, %cst_30 {dimension_numbers = #tpu.dot_dimension_numbers<[1], [1], [0], [0], [0, 0, 1, 0], [], []>} : vector<8x16xbf16>, vector<8x16xbf16>, vector<8x8xf32> -> vector<8x8xf32>
    %61 = arith.addf %60, %19 : vector<8x8xf32>
    %cst_31 = arith.constant dense<0xFF800000> : vector<8xf32>
    %62 = vector.multi_reduction <maximumf>, %61, %cst_31 [1] : vector<8x8xf32> to vector<8xf32>
    %63 = vector.shape_cast %62 : vector<8xf32> to vector<8x1xf32>
    %64 = vector.broadcast %63 : vector<8x1xf32> to vector<8x8xf32>
    %65 = arith.subf %61, %64 : vector<8x8xf32>
    %66 = math.exp %65 : vector<8x8xf32>
    %cst_32 = arith.constant dense<0.000000e+00> : vector<8xf32>
    %67 = vector.multi_reduction <add>, %66, %cst_32 [1] : vector<8x8xf32> to vector<8xf32>
    %68 = vector.shape_cast %67 : vector<8xf32> to vector<8x1xf32>
    %cst_33 = arith.constant 1.000000e+00 : f32
    %69 = vector.broadcast %cst_33 : f32 to vector<8x1xf32>
    %70 = arith.divf %69, %68 : vector<8x1xf32>
    %71 = vector.broadcast %70 : vector<8x1xf32> to vector<8x8xf32>
    %72 = arith.mulf %66, %71 : vector<8x8xf32>
    %73 = arith.truncf %72 : vector<8x8xf32> to vector<8x8xbf16>
    %74 = vector.extract_strided_slice %39 {offsets = [0, 16], sizes = [8, 16], strides = [1, 1]} : vector<8x32xbf16> to vector<8x16xbf16>
    %cst_34 = arith.constant dense<0.000000e+00> : vector<8x16xf32>
    %75 = tpu.matmul %73, %74, %cst_34 {dimension_numbers = #tpu.dot_dimension_numbers<[1], [0], [0], [1], [0, 0, 1, 1], [], []>} : vector<8x8xbf16>, vector<8x16xbf16>, vector<8x16xf32> -> vector<8x16xf32>
    %76 = tpu.concatenate %57, %75 in 1 : vector<8x16xf32>, vector<8x16xf32> -> vector<8x32xf32>
    %77 = arith.truncf %76 : vector<8x32xf32> to vector<8x32xbf16>
    %c0_35 = arith.constant 0 : index
    %c0_36 = arith.constant 0 : index
    %78 = vector.load %arg11[%c0_35, %c0_36] : memref<32x32xbf16, #tpu.memory_space<vmem>>, vector<32x32xbf16>
    %cst_37 = arith.constant dense<0.000000e+00> : vector<8x32xf32>
    %79 = tpu.matmul %77, %78, %cst_37 {dimension_numbers = #tpu.dot_dimension_numbers<[1], [0], [0], [1], [0, 0, 1, 1], [], []>} : vector<8x32xbf16>, vector<32x32xbf16>, vector<8x32xf32> -> vector<8x32xf32>
    %c0_38 = arith.constant 0 : index
    %c0_39 = arith.constant 0 : index
    %80 = vector.load %arg12[%c0_38, %c0_39] : memref<1x32xf32, #tpu.memory_space<vmem>>, vector<1x32xf32>
    %81 = vector.broadcast %80 : vector<1x32xf32> to vector<8x32xf32>
    %82 = arith.addf %79, %81 : vector<8x32xf32>
    %83 = arith.addf %82, %1 : vector<8x32xf32>
    %cst_40 = arith.constant dense<0.000000e+00> : vector<8xf32>
    %84 = vector.multi_reduction <add>, %83, %cst_40 [1] : vector<8x32xf32> to vector<8xf32>
    %85 = vector.shape_cast %84 : vector<8xf32> to vector<8x1xf32>
    %cst_41 = arith.constant 3.200000e+01 : f32
    %86 = vector.broadcast %cst_41 : f32 to vector<8x1xf32>
    %87 = arith.divf %85, %86 : vector<8x1xf32>
    %88 = vector.broadcast %87 : vector<8x1xf32> to vector<8x32xf32>
    %89 = arith.subf %83, %88 : vector<8x32xf32>
    %90 = arith.mulf %89, %89 : vector<8x32xf32>
    %cst_42 = arith.constant dense<0.000000e+00> : vector<8xf32>
    %91 = vector.multi_reduction <add>, %90, %cst_42 [1] : vector<8x32xf32> to vector<8xf32>
    %92 = vector.shape_cast %91 : vector<8xf32> to vector<8x1xf32>
    %cst_43 = arith.constant 3.200000e+01 : f32
    %93 = vector.broadcast %cst_43 : f32 to vector<8x1xf32>
    %94 = arith.divf %92, %93 : vector<8x1xf32>
    %95 = vector.broadcast %87 : vector<8x1xf32> to vector<8x32xf32>
    %96 = arith.subf %83, %95 : vector<8x32xf32>
    %cst_44 = arith.constant 9.99999974E-6 : f32
    %97 = vector.broadcast %cst_44 : f32 to vector<8x1xf32>
    %98 = arith.addf %94, %97 : vector<8x1xf32>
    %99 = math.rsqrt %98 : vector<8x1xf32>
    %100 = vector.broadcast %99 : vector<8x1xf32> to vector<8x32xf32>
    %101 = arith.mulf %96, %100 : vector<8x32xf32>
    %c0_45 = arith.constant 0 : index
    %c0_46 = arith.constant 0 : index
    %102 = vector.load %arg13[%c0_45, %c0_46] : memref<1x32xf32, #tpu.memory_space<vmem>>, vector<1x32xf32>
    %103 = vector.broadcast %102 : vector<1x32xf32> to vector<8x32xf32>
    %104 = arith.mulf %101, %103 : vector<8x32xf32>
    %c0_47 = arith.constant 0 : index
    %c0_48 = arith.constant 0 : index
    %105 = vector.load %arg14[%c0_47, %c0_48] : memref<1x32xf32, #tpu.memory_space<vmem>>, vector<1x32xf32>
    %106 = vector.broadcast %105 : vector<1x32xf32> to vector<8x32xf32>
    %107 = arith.addf %104, %106 : vector<8x32xf32>
    %108 = arith.truncf %107 : vector<8x32xf32> to vector<8x32xbf16>
    %c0_49 = arith.constant 0 : index
    %c0_50 = arith.constant 0 : index
    %109 = vector.load %arg15[%c0_49, %c0_50] : memref<32x32xbf16, #tpu.memory_space<vmem>>, vector<32x32xbf16>
    %cst_51 = arith.constant dense<0.000000e+00> : vector<8x32xf32>
    %110 = tpu.matmul %108, %109, %cst_51 {dimension_numbers = #tpu.dot_dimension_numbers<[1], [0], [0], [1], [0, 0, 1, 1], [], []>} : vector<8x32xbf16>, vector<32x32xbf16>, vector<8x32xf32> -> vector<8x32xf32>
    %c0_52 = arith.constant 0 : index
    %c0_53 = arith.constant 0 : index
    %111 = vector.load %arg16[%c0_52, %c0_53] : memref<1x32xf32, #tpu.memory_space<vmem>>, vector<1x32xf32>
    %112 = vector.broadcast %111 : vector<1x32xf32> to vector<8x32xf32>
    %113 = arith.addf %110, %112 : vector<8x32xf32>
    %cst_54 = arith.constant 2.500000e-01 : f32
    %114 = vector.broadcast %cst_54 : f32 to vector<8x32xf32>
    %115 = arith.mulf %113, %114 : vector<8x32xf32>
    %116 = arith.truncf %115 : vector<8x32xf32> to vector<8x32xbf16>
    %117 = arith.truncf %5 : vector<10x32xf32> to vector<10x32xbf16>
    %c0_55 = arith.constant 0 : index
    %c0_56 = arith.constant 0 : index
    %118 = vector.load %arg17[%c0_55, %c0_56] : memref<32x64xbf16, #tpu.memory_space<vmem>>, vector<32x64xbf16>
    %cst_57 = arith.constant dense<0.000000e+00> : vector<10x64xf32>
    %119 = tpu.matmul %117, %118, %cst_57 {dimension_numbers = #tpu.dot_dimension_numbers<[1], [0], [0], [1], [0, 0, 1, 1], [], []>} : vector<10x32xbf16>, vector<32x64xbf16>, vector<10x64xf32> -> vector<10x64xf32>
    %c0_58 = arith.constant 0 : index
    %c0_59 = arith.constant 0 : index
    %120 = vector.load %arg18[%c0_58, %c0_59] : memref<1x64xf32, #tpu.memory_space<vmem>>, vector<1x64xf32>
    %121 = vector.broadcast %120 : vector<1x64xf32> to vector<10x64xf32>
    %122 = arith.addf %119, %121 : vector<10x64xf32>
    %123 = arith.truncf %122 : vector<10x64xf32> to vector<10x64xbf16>
    %124 = vector.extract_strided_slice %123 {offsets = [0, 0], sizes = [10, 32], strides = [1, 1]} : vector<10x64xbf16> to vector<10x32xbf16>
    %125 = vector.extract_strided_slice %123 {offsets = [0, 32], sizes = [10, 32], strides = [1, 1]} : vector<10x64xbf16> to vector<10x32xbf16>
    %126 = vector.extract_strided_slice %116 {offsets = [0, 0], sizes = [8, 16], strides = [1, 1]} : vector<8x32xbf16> to vector<8x16xbf16>
    %127 = vector.extract_strided_slice %124 {offsets = [0, 0], sizes = [10, 16], strides = [1, 1]} : vector<10x32xbf16> to vector<10x16xbf16>
    %cst_60 = arith.constant dense<0.000000e+00> : vector<8x10xf32>
    %128 = tpu.matmul %126, %127, %cst_60 {dimension_numbers = #tpu.dot_dimension_numbers<[1], [1], [0], [0], [0, 0, 1, 0], [], []>} : vector<8x16xbf16>, vector<10x16xbf16>, vector<8x10xf32> -> vector<8x10xf32>
    %129 = vector.broadcast %21 : vector<1x10xf32> to vector<8x10xf32>
    %130 = arith.addf %128, %129 : vector<8x10xf32>
    %cst_61 = arith.constant dense<0xFF800000> : vector<8xf32>
    %131 = vector.multi_reduction <maximumf>, %130, %cst_61 [1] : vector<8x10xf32> to vector<8xf32>
    %132 = vector.shape_cast %131 : vector<8xf32> to vector<8x1xf32>
    %133 = vector.broadcast %132 : vector<8x1xf32> to vector<8x10xf32>
    %134 = arith.subf %130, %133 : vector<8x10xf32>
    %135 = math.exp %134 : vector<8x10xf32>
    %cst_62 = arith.constant dense<0.000000e+00> : vector<8xf32>
    %136 = vector.multi_reduction <add>, %135, %cst_62 [1] : vector<8x10xf32> to vector<8xf32>
    %137 = vector.shape_cast %136 : vector<8xf32> to vector<8x1xf32>
    %cst_63 = arith.constant 1.000000e+00 : f32
    %138 = vector.broadcast %cst_63 : f32 to vector<8x1xf32>
    %139 = arith.divf %138, %137 : vector<8x1xf32>
    %140 = vector.broadcast %139 : vector<8x1xf32> to vector<8x10xf32>
    %141 = arith.mulf %135, %140 : vector<8x10xf32>
    %142 = arith.truncf %141 : vector<8x10xf32> to vector<8x10xbf16>
    %143 = vector.extract_strided_slice %125 {offsets = [0, 0], sizes = [10, 16], strides = [1, 1]} : vector<10x32xbf16> to vector<10x16xbf16>
    %cst_64 = arith.constant dense<0.000000e+00> : vector<8x16xf32>
    %144 = tpu.matmul %142, %143, %cst_64 {dimension_numbers = #tpu.dot_dimension_numbers<[1], [0], [0], [1], [0, 0, 1, 1], [], []>} : vector<8x10xbf16>, vector<10x16xbf16>, vector<8x16xf32> -> vector<8x16xf32>
    %145 = vector.extract_strided_slice %116 {offsets = [0, 16], sizes = [8, 16], strides = [1, 1]} : vector<8x32xbf16> to vector<8x16xbf16>
    %146 = vector.extract_strided_slice %124 {offsets = [0, 16], sizes = [10, 16], strides = [1, 1]} : vector<10x32xbf16> to vector<10x16xbf16>
    %cst_65 = arith.constant dense<0.000000e+00> : vector<8x10xf32>
    %147 = tpu.matmul %145, %146, %cst_65 {dimension_numbers = #tpu.dot_dimension_numbers<[1], [1], [0], [0], [0, 0, 1, 0], [], []>} : vector<8x16xbf16>, vector<10x16xbf16>, vector<8x10xf32> -> vector<8x10xf32>
    %148 = vector.broadcast %21 : vector<1x10xf32> to vector<8x10xf32>
    %149 = arith.addf %147, %148 : vector<8x10xf32>
    %cst_66 = arith.constant dense<0xFF800000> : vector<8xf32>
    %150 = vector.multi_reduction <maximumf>, %149, %cst_66 [1] : vector<8x10xf32> to vector<8xf32>
    %151 = vector.shape_cast %150 : vector<8xf32> to vector<8x1xf32>
    %152 = vector.broadcast %151 : vector<8x1xf32> to vector<8x10xf32>
    %153 = arith.subf %149, %152 : vector<8x10xf32>
    %154 = math.exp %153 : vector<8x10xf32>
    %cst_67 = arith.constant dense<0.000000e+00> : vector<8xf32>
    %155 = vector.multi_reduction <add>, %154, %cst_67 [1] : vector<8x10xf32> to vector<8xf32>
    %156 = vector.shape_cast %155 : vector<8xf32> to vector<8x1xf32>
    %cst_68 = arith.constant 1.000000e+00 : f32
    %157 = vector.broadcast %cst_68 : f32 to vector<8x1xf32>
    %158 = arith.divf %157, %156 : vector<8x1xf32>
    %159 = vector.broadcast %158 : vector<8x1xf32> to vector<8x10xf32>
    %160 = arith.mulf %154, %159 : vector<8x10xf32>
    %161 = arith.truncf %160 : vector<8x10xf32> to vector<8x10xbf16>
    %162 = vector.extract_strided_slice %125 {offsets = [0, 16], sizes = [10, 16], strides = [1, 1]} : vector<10x32xbf16> to vector<10x16xbf16>
    %cst_69 = arith.constant dense<0.000000e+00> : vector<8x16xf32>
    %163 = tpu.matmul %161, %162, %cst_69 {dimension_numbers = #tpu.dot_dimension_numbers<[1], [0], [0], [1], [0, 0, 1, 1], [], []>} : vector<8x10xbf16>, vector<10x16xbf16>, vector<8x16xf32> -> vector<8x16xf32>
    %164 = tpu.concatenate %144, %163 in 1 : vector<8x16xf32>, vector<8x16xf32> -> vector<8x32xf32>
    %165 = arith.truncf %164 : vector<8x32xf32> to vector<8x32xbf16>
    %c0_70 = arith.constant 0 : index
    %c0_71 = arith.constant 0 : index
    %166 = vector.load %arg19[%c0_70, %c0_71] : memref<32x32xbf16, #tpu.memory_space<vmem>>, vector<32x32xbf16>
    %cst_72 = arith.constant dense<0.000000e+00> : vector<8x32xf32>
    %167 = tpu.matmul %165, %166, %cst_72 {dimension_numbers = #tpu.dot_dimension_numbers<[1], [0], [0], [1], [0, 0, 1, 1], [], []>} : vector<8x32xbf16>, vector<32x32xbf16>, vector<8x32xf32> -> vector<8x32xf32>
    %c0_73 = arith.constant 0 : index
    %c0_74 = arith.constant 0 : index
    %168 = vector.load %arg20[%c0_73, %c0_74] : memref<1x32xf32, #tpu.memory_space<vmem>>, vector<1x32xf32>
    %169 = vector.broadcast %168 : vector<1x32xf32> to vector<8x32xf32>
    %170 = arith.addf %167, %169 : vector<8x32xf32>
    %171 = arith.addf %170, %107 : vector<8x32xf32>
    %cst_75 = arith.constant dense<0.000000e+00> : vector<8xf32>
    %172 = vector.multi_reduction <add>, %171, %cst_75 [1] : vector<8x32xf32> to vector<8xf32>
    %173 = vector.shape_cast %172 : vector<8xf32> to vector<8x1xf32>
    %cst_76 = arith.constant 3.200000e+01 : f32
    %174 = vector.broadcast %cst_76 : f32 to vector<8x1xf32>
    %175 = arith.divf %173, %174 : vector<8x1xf32>
    %176 = vector.broadcast %175 : vector<8x1xf32> to vector<8x32xf32>
    %177 = arith.subf %171, %176 : vector<8x32xf32>
    %178 = arith.mulf %177, %177 : vector<8x32xf32>
    %cst_77 = arith.constant dense<0.000000e+00> : vector<8xf32>
    %179 = vector.multi_reduction <add>, %178, %cst_77 [1] : vector<8x32xf32> to vector<8xf32>
    %180 = vector.shape_cast %179 : vector<8xf32> to vector<8x1xf32>
    %cst_78 = arith.constant 3.200000e+01 : f32
    %181 = vector.broadcast %cst_78 : f32 to vector<8x1xf32>
    %182 = arith.divf %180, %181 : vector<8x1xf32>
    %183 = vector.broadcast %175 : vector<8x1xf32> to vector<8x32xf32>
    %184 = arith.subf %171, %183 : vector<8x32xf32>
    %cst_79 = arith.constant 9.99999974E-6 : f32
    %185 = vector.broadcast %cst_79 : f32 to vector<8x1xf32>
    %186 = arith.addf %182, %185 : vector<8x1xf32>
    %187 = math.rsqrt %186 : vector<8x1xf32>
    %188 = vector.broadcast %187 : vector<8x1xf32> to vector<8x32xf32>
    %189 = arith.mulf %184, %188 : vector<8x32xf32>
    %c0_80 = arith.constant 0 : index
    %c0_81 = arith.constant 0 : index
    %190 = vector.load %arg21[%c0_80, %c0_81] : memref<1x32xf32, #tpu.memory_space<vmem>>, vector<1x32xf32>
    %191 = vector.broadcast %190 : vector<1x32xf32> to vector<8x32xf32>
    %192 = arith.mulf %189, %191 : vector<8x32xf32>
    %c0_82 = arith.constant 0 : index
    %c0_83 = arith.constant 0 : index
    %193 = vector.load %arg22[%c0_82, %c0_83] : memref<1x32xf32, #tpu.memory_space<vmem>>, vector<1x32xf32>
    %194 = vector.broadcast %193 : vector<1x32xf32> to vector<8x32xf32>
    %195 = arith.addf %192, %194 : vector<8x32xf32>
    %196 = arith.truncf %195 : vector<8x32xf32> to vector<8x32xbf16>
    %c0_84 = arith.constant 0 : index
    %c0_85 = arith.constant 0 : index
    %197 = vector.load %arg23[%c0_84, %c0_85] : memref<32x64xbf16, #tpu.memory_space<vmem>>, vector<32x64xbf16>
    %cst_86 = arith.constant dense<0.000000e+00> : vector<8x64xf32>
    %198 = tpu.matmul %196, %197, %cst_86 {dimension_numbers = #tpu.dot_dimension_numbers<[1], [0], [0], [1], [0, 0, 1, 1], [], []>} : vector<8x32xbf16>, vector<32x64xbf16>, vector<8x64xf32> -> vector<8x64xf32>
    %c0_87 = arith.constant 0 : index
    %c0_88 = arith.constant 0 : index
    %199 = vector.load %arg24[%c0_87, %c0_88] : memref<1x64xf32, #tpu.memory_space<vmem>>, vector<1x64xf32>
    %200 = vector.broadcast %199 : vector<1x64xf32> to vector<8x64xf32>
    %201 = arith.addf %198, %200 : vector<8x64xf32>
    %cst_89 = arith.constant 0.000000e+00 : f32
    %202 = vector.broadcast %cst_89 : f32 to vector<8x64xf32>
    %203 = arith.maximumf %201, %202 : vector<8x64xf32>
    %204 = arith.truncf %203 : vector<8x64xf32> to vector<8x64xbf16>
    %c0_90 = arith.constant 0 : index
    %c0_91 = arith.constant 0 : index
    %205 = vector.load %arg25[%c0_90, %c0_91] : memref<64x32xbf16, #tpu.memory_space<vmem>>, vector<64x32xbf16>
    %cst_92 = arith.constant dense<0.000000e+00> : vector<8x32xf32>
    %206 = tpu.matmul %204, %205, %cst_92 {dimension_numbers = #tpu.dot_dimension_numbers<[1], [0], [0], [1], [0, 0, 1, 1], [], []>} : vector<8x64xbf16>, vector<64x32xbf16>, vector<8x32xf32> -> vector<8x32xf32>
    %c0_93 = arith.constant 0 : index
    %c0_94 = arith.constant 0 : index
    %207 = vector.load %arg26[%c0_93, %c0_94] : memref<1x32xf32, #tpu.memory_space<vmem>>, vector<1x32xf32>
    %208 = vector.broadcast %207 : vector<1x32xf32> to vector<8x32xf32>
    %209 = arith.addf %206, %208 : vector<8x32xf32>
    %210 = arith.addf %209, %195 : vector<8x32xf32>
    %cst_95 = arith.constant dense<0.000000e+00> : vector<8xf32>
    %211 = vector.multi_reduction <add>, %210, %cst_95 [1] : vector<8x32xf32> to vector<8xf32>
    %212 = vector.shape_cast %211 : vector<8xf32> to vector<8x1xf32>
    %cst_96 = arith.constant 3.200000e+01 : f32
    %213 = vector.broadcast %cst_96 : f32 to vector<8x1xf32>
    %214 = arith.divf %212, %213 : vector<8x1xf32>
    %215 = vector.broadcast %214 : vector<8x1xf32> to vector<8x32xf32>
    %216 = arith.subf %210, %215 : vector<8x32xf32>
    %217 = arith.mulf %216, %216 : vector<8x32xf32>
    %cst_97 = arith.constant dense<0.000000e+00> : vector<8xf32>
    %218 = vector.multi_reduction <add>, %217, %cst_97 [1] : vector<8x32xf32> to vector<8xf32>
    %219 = vector.shape_cast %218 : vector<8xf32> to vector<8x1xf32>
    %cst_98 = arith.constant 3.200000e+01 : f32
    %220 = vector.broadcast %cst_98 : f32 to vector<8x1xf32>
    %221 = arith.divf %219, %220 : vector<8x1xf32>
    %222 = vector.broadcast %214 : vector<8x1xf32> to vector<8x32xf32>
    %223 = arith.subf %210, %222 : vector<8x32xf32>
    %cst_99 = arith.constant 9.99999974E-6 : f32
    %224 = vector.broadcast %cst_99 : f32 to vector<8x1xf32>
    %225 = arith.addf %221, %224 : vector<8x1xf32>
    %226 = math.rsqrt %225 : vector<8x1xf32>
    %227 = vector.broadcast %226 : vector<8x1xf32> to vector<8x32xf32>
    %228 = arith.mulf %223, %227 : vector<8x32xf32>
    %c0_100 = arith.constant 0 : index
    %c0_101 = arith.constant 0 : index
    %229 = vector.load %arg27[%c0_100, %c0_101] : memref<1x32xf32, #tpu.memory_space<vmem>>, vector<1x32xf32>
    %230 = vector.broadcast %229 : vector<1x32xf32> to vector<8x32xf32>
    %231 = arith.mulf %228, %230 : vector<8x32xf32>
    %c0_102 = arith.constant 0 : index
    %c0_103 = arith.constant 0 : index
    %232 = vector.load %arg28[%c0_102, %c0_103] : memref<1x32xf32, #tpu.memory_space<vmem>>, vector<1x32xf32>
    %233 = vector.broadcast %232 : vector<1x32xf32> to vector<8x32xf32>
    %234 = arith.addf %231, %233 : vector<8x32xf32>
    %c0_104 = arith.constant 0 : index
    %c0_105 = arith.constant 0 : index
    %c0_106 = arith.constant 0 : index
    %235 = vector.load %arg29[%c0_104, %c0_105, %c0_106] : memref<1x8x32xf32, #tpu.memory_space<vmem>>, vector<1x8x32xf32>
    %236 = vector.shape_cast %235 : vector<1x8x32xf32> to vector<8x32xf32>
    %237 = vector.shape_cast %234 : vector<8x32xf32> to vector<1x8x32xf32>
    tpu.vector_store %arg29[%c0_104, %c0_105, %c0_106], %237 {strides = array<i32>} : memref<1x8x32xf32, #tpu.memory_space<vmem>>, vector<1x8x32xf32>,
    return
  }
  func.func @transform_0(%arg0: i32, %arg1: i32) -> (i32, i32, i32) {
    %c0_i32 = arith.constant 0 : i32
    %c0_i32_0 = arith.constant 0 : i32
    return %arg0, %arg1, %c0_i32 : i32, i32, i32
  }
  func.func @transform_1(%arg0: i32, %arg1: i32) -> (i32, i32, i32) {
    %c0_i32 = arith.constant 0 : i32
    %c0_i32_0 = arith.constant 0 : i32
    %c0_i32_1 = arith.constant 0 : i32
    return %arg0, %c0_i32, %c0_i32_0 : i32, i32, i32
  }
  func.func @transform_2(%arg0: i32, %arg1: i32) -> (i32, i32, i32) {
    %c0_i32 = arith.constant 0 : i32
    %c0_i32_0 = arith.constant 0 : i32
    %c0_i32_1 = arith.constant 0 : i32
    return %arg0, %c0_i32, %c0_i32_0 : i32, i32, i32
  }
  func.func @transform_3(%arg0: i32, %arg1: i32) -> (i32, i32, i32) {
    %c0_i32 = arith.constant 0 : i32
    %c0_i32_0 = arith.constant 0 : i32
    %c0_i32_1 = arith.constant 0 : i32
    return %arg0, %c0_i32, %c0_i32_0 : i32, i32, i32
  }
  func.func @transform_4(%arg0: i32, %arg1: i32) -> (i32, i32, i32) {
    %c0_i32 = arith.constant 0 : i32
    %c0_i32_0 = arith.constant 0 : i32
    %c0_i32_1 = arith.constant 0 : i32
    return %arg0, %c0_i32, %c0_i32_0 : i32, i32, i32
  }
  func.func @transform_5(%arg0: i32, %arg1: i32) -> (i32, i32) {
    %c0_i32 = arith.constant 0 : i32
    %c0_i32_0 = arith.constant 0 : i32
    %c0_i32_1 = arith.constant 0 : i32
    return %c0_i32, %c0_i32_0 : i32, i32
  }
  func.func @transform_6(%arg0: i32, %arg1: i32) -> (i32, i32) {
    %c0_i32 = arith.constant 0 : i32
    %c0_i32_0 = arith.constant 0 : i32
    %c0_i32_1 = arith.constant 0 : i32
    return %c0_i32, %c0_i32_0 : i32, i32
  }
  func.func @transform_7(%arg0: i32, %arg1: i32) -> (i32, i32) {
    %c0_i32 = arith.constant 0 : i32
    %c0_i32_0 = arith.constant 0 : i32
    %c0_i32_1 = arith.constant 0 : i32
    return %c0_i32, %c0_i32_0 : i32, i32
  }
  func.func @transform_8(%arg0: i32, %arg1: i32) -> (i32, i32) {
    %c0_i32 = arith.constant 0 : i32
    %c0_i32_0 = arith.constant 0 : i32
    %c0_i32_1 = arith.constant 0 : i32
    return %c0_i32, %c0_i32_0 : i32, i32
  }
  func.func @transform_9(%arg0: i32, %arg1: i32) -> (i32, i32) {
    %c0_i32 = arith.constant 0 : i32
    %c0_i32_0 = arith.constant 0 : i32
    %c0_i32_1 = arith.constant 0 : i32
    return %c0_i32, %c0_i32_0 : i32, i32
  }
  func.func @transform_10(%arg0: i32, %arg1: i32) -> (i32, i32) {
    %c0_i32 = arith.constant 0 : i32
    %c0_i32_0 = arith.constant 0 : i32
    %c0_i32_1 = arith.constant 0 : i32
    return %c0_i32, %c0_i32_0 : i32, i32
  }
  func.func @transform_11(%arg0: i32, %arg1: i32) -> (i32, i32) {
    %c0_i32 = arith.constant 0 : i32
    %c0_i32_0 = arith.constant 0 : i32
    %c0_i32_1 = arith.constant 0 : i32
    return %c0_i32, %c0_i32_0 : i32, i32
  }
  func.func @transform_12(%arg0: i32, %arg1: i32) -> (i32, i32) {
    %c0_i32 = arith.constant 0 : i32
    %c0_i32_0 = arith.constant 0 : i32
    %c0_i32_1 = arith.constant 0 : i32
    return %c0_i32, %c0_i32_0 : i32, i32
  }
  func.func @transform_13(%arg0: i32, %arg1: i32) -> (i32, i32) {
    %c0_i32 = arith.constant 0 : i32
    %c0_i32_0 = arith.constant 0 : i32
    %c0_i32_1 = arith.constant 0 : i32
    return %c0_i32, %c0_i32_0 : i32, i32
  }
  func.func @transform_14(%arg0: i32, %arg1: i32) -> (i32, i32) {
    %c0_i32 = arith.constant 0 : i32
    %c0_i32_0 = arith.constant 0 : i32
    %c0_i32_1 = arith.constant 0 : i32
    return %c0_i32, %c0_i32_0 : i32, i32
  }
  func.func @transform_15(%arg0: i32, %arg1: i32) -> (i32, i32) {
    %c0_i32 = arith.constant 0 : i32
    %c0_i32_0 = arith.constant 0 : i32
    %c0_i32_1 = arith.constant 0 : i32
    return %c0_i32, %c0_i32_0 : i32, i32
  }
  func.func @transform_16(%arg0: i32, %arg1: i32) -> (i32, i32) {
    %c0_i32 = arith.constant 0 : i32
    %c0_i32_0 = arith.constant 0 : i32
    %c0_i32_1 = arith.constant 0 : i32
    return %c0_i32, %c0_i32_0 : i32, i32
  }
  func.func @transform_17(%arg0: i32, %arg1: i32) -> (i32, i32) {
    %c0_i32 = arith.constant 0 : i32
    %c0_i32_0 = arith.constant 0 : i32
    %c0_i32_1 = arith.constant 0 : i32
    return %c0_i32, %c0_i32_0 : i32, i32
  }
  func.func @transform_18(%arg0: i32, %arg1: i32) -> (i32, i32) {
    %c0_i32 = arith.constant 0 : i32
    %c0_i32_0 = arith.constant 0 : i32
    %c0_i32_1 = arith.constant 0 : i32
    return %c0_i32, %c0_i32_0 : i32, i32
  }
  func.func @transform_19(%arg0: i32, %arg1: i32) -> (i32, i32) {
    %c0_i32 = arith.constant 0 : i32
    %c0_i32_0 = arith.constant 0 : i32
    %c0_i32_1 = arith.constant 0 : i32
    return %c0_i32, %c0_i32_0 : i32, i32
  }
  func.func @transform_20(%arg0: i32, %arg1: i32) -> (i32, i32) {
    %c0_i32 = arith.constant 0 : i32
    %c0_i32_0 = arith.constant 0 : i32
    %c0_i32_1 = arith.constant 0 : i32
    return %c0_i32, %c0_i32_0 : i32, i32
  }
  func.func @transform_21(%arg0: i32, %arg1: i32) -> (i32, i32) {
    %c0_i32 = arith.constant 0 : i32
    %c0_i32_0 = arith.constant 0 : i32
    %c0_i32_1 = arith.constant 0 : i32
    return %c0_i32, %c0_i32_0 : i32, i32
  }
  func.func @transform_22(%arg0: i32, %arg1: i32) -> (i32, i32) {
    %c0_i32 = arith.constant 0 : i32
    %c0_i32_0 = arith.constant 0 : i32
    %c0_i32_1 = arith.constant 0 : i32
    return %c0_i32, %c0_i32_0 : i32, i32
  }
  func.func @transform_23(%arg0: i32, %arg1: i32) -> (i32, i32) {
    %c0_i32 = arith.constant 0 : i32
    %c0_i32_0 = arith.constant 0 : i32
    %c0_i32_1 = arith.constant 0 : i32
    return %c0_i32, %c0_i32_0 : i32, i32
  }
  func.func @transform_24(%arg0: i32, %arg1: i32) -> (i32, i32) {
    %c0_i32 = arith.constant 0 : i32
    %c0_i32_0 = arith.constant 0 : i32
    %c0_i32_1 = arith.constant 0 : i32
    return %c0_i32, %c0_i32_0 : i32, i32
  }
  func.func @transform_25(%arg0: i32, %arg1: i32) -> (i32, i32) {
    %c0_i32 = arith.constant 0 : i32
    %c0_i32_0 = arith.constant 0 : i32
    %c0_i32_1 = arith.constant 0 : i32
    return %c0_i32, %c0_i32_0 : i32, i32
  }
  func.func @transform_26(%arg0: i32, %arg1: i32) -> (i32, i32) {
    %c0_i32 = arith.constant 0 : i32
    %c0_i32_0 = arith.constant 0 : i32
    %c0_i32_1 = arith.constant 0 : i32
    return %c0_i32, %c0_i32_0 : i32, i32
  }
  func.func @transform_27(%arg0: i32, %arg1: i32) -> (i32, i32, i32) {
    %c0_i32 = arith.constant 0 : i32
    %c0_i32_0 = arith.constant 0 : i32
    return %arg0, %arg1, %c0_i32 : i32, i32, i32
  }
}

module attributes {stable_mosaic.version = 11 : i64} {
  func.func @_decoder_block_kernel(%arg0: i32, %arg1: i32, %arg2: memref<1x8x32xf32, #tpu.memory_space<vmem>>, %arg3: memref<1x8x32xf32, #tpu.memory_space<vmem>>, %arg4: memref<1x10x32xf32, #tpu.memory_space<vmem>>, %arg5: memref<1x1x8xf32, #tpu.memory_space<vmem>>, %arg6: memref<1x1x10xf32, #tpu.memory_space<vmem>>, %arg7: memref<32x32xbf16, #tpu.memory_space<vmem>>, %arg8: memref<1x32xf32, #tpu.memory_space<vmem>>, %arg9: memref<32x64xbf16, #tpu.memory_space<vmem>>, %arg10: memref<1x64xf32, #tpu.memory_space<vmem>>, %arg11: memref<32x32xbf16, #tpu.memory_space<vmem>>, %arg12: memref<1x32xf32, #tpu.memory_space<vmem>>, %arg13: memref<1x32xf32, #tpu.memory_space<vmem>>, %arg14: memref<1x32xf32, #tpu.memory_space<vmem>>, %arg15: memref<32x32xbf16, #tpu.memory_space<vmem>>, %arg16: memref<1x32xf32, #tpu.memory_space<vmem>>, %arg17: memref<32x64xbf16, #tpu.memory_space<vmem>>, %arg18: memref<1x64xf32, #tpu.memory_space<vmem>>, %arg19: memref<32x32xbf16, #tpu.memory_space<vmem>>, %arg20: memref<1x32xf32, #tpu.memory_space<vmem>>, %arg21: memref<1x32xf32, #tpu.memory_space<vmem>>, %arg22: memref<1x32xf32, #tpu.memory_space<vmem>>, %arg23: memref<32x64xbf16, #tpu.memory_space<vmem>>, %arg24: memref<1x64xf32, #tpu.memory_space<vmem>>, %arg25: memref<64x32xbf16, #tpu.memory_space<vmem>>, %arg26: memref<1x32xf32, #tpu.memory_space<vmem>>, %arg27: memref<1x32xf32, #tpu.memory_space<vmem>>, %arg28: memref<1x32xf32, #tpu.memory_space<vmem>>, %arg29: memref<1x8x32xf32, #tpu.memory_space<vmem>>) attributes {dimension_semantics = [#tpu.dimension_semantics<parallel>, #tpu.dimension_semantics<parallel>], iteration_bounds = array<i64: 2, 1>, scalar_prefetch = 0 : i64, scratch_operands = 0 : i64, tpu.core_type = #tpu.core_type<tc>, window_params = [{transform_indices = @transform_0, window_bounds = array<i64: 1, 8, 32>}, {transform_indices = @transform_1, window_bounds = array<i64: 1, 8, 32>}, {transform_indices = @transform_2, window_bounds = array<i64: 1, 10, 32>}, {transform_indices = @transform_3, window_bounds = array<i64: 1, 1, 8>}, {transform_indices = @transform_4, window_bounds = array<i64: 1, 1, 10>}, {pipeline_mode = #tpu.pipeline_mode<synchronous>, transform_indices = @transform_5, window_bounds = array<i64: 32, 32>}, {pipeline_mode = #tpu.pipeline_mode<synchronous>, transform_indices = @transform_6, window_bounds = array<i64: 1, 32>}, {pipeline_mode = #tpu.pipeline_mode<synchronous>, transform_indices = @transform_7, window_bounds = array<i64: 32, 64>}, {pipeline_mode = #tpu.pipeline_mode<synchronous>, transform_indices = @transform_8, window_bounds = array<i64: 1, 64>}, {pipeline_mode = #tpu.pipeline_mode<synchronous>, transform_indices = @transform_9, window_bounds = array<i64: 32, 32>}, {pipeline_mode = #tpu.pipeline_mode<synchronous>, transform_indices = @transform_10, window_bounds = array<i64: 1, 32>}, {pipeline_mode = #tpu.pipeline_mode<synchronous>, transform_indices = @transform_11, window_bounds = array<i64: 1, 32>}, {pipeline_mode = #tpu.pipeline_mode<synchronous>, transform_indices = @transform_12, window_bounds = array<i64: 1, 32>}, {pipeline_mode = #tpu.pipeline_mode<synchronous>, transform_indices = @transform_13, window_bounds = array<i64: 32, 32>}, {pipeline_mode = #tpu.pipeline_mode<synchronous>, transform_indices = @transform_14, window_bounds = array<i64: 1, 32>}, {pipeline_mode = #tpu.pipeline_mode<synchronous>, transform_indices = @transform_15, window_bounds = array<i64: 32, 64>}, {pipeline_mode = #tpu.pipeline_mode<synchronous>, transform_indices = @transform_16, window_bounds = array<i64: 1, 64>}, {pipeline_mode = #tpu.pipeline_mode<synchronous>, transform_indices = @transform_17, window_bounds = array<i64: 32, 32>}, {pipeline_mode = #tpu.pipeline_mode<synchronous>, transform_indices = @transform_18, window_bounds = array<i64: 1, 32>}, {pipeline_mode = #tpu.pipeline_mode<synchronous>, transform_indices = @transform_19, window_bounds = array<i64: 1, 32>}, {pipeline_mode = #tpu.pipeline_mode<synchronous>, transform_indices = @transform_20, window_bounds = array<i64: 1, 32>}, {pipeline_mode = #tpu.pipeline_mode<synchronous>, transform_indices = @transform_21, window_bounds = array<i64: 32, 64>}, {pipeline_mode = #tpu.pipeline_mode<synchronous>, transform_indices = @transform_22, window_bounds = array<i64: 1, 64>}, {pipeline_mode = #tpu.pipeline_mode<synchronous>, transform_indices = @transform_23, window_bounds = array<i64: 64, 32>}, {pipeline_mode = #tpu.pipeline_mode<synchronous>, transform_indices = @transform_24, window_bounds = array<i64: 1, 32>}, {pipeline_mode = #tpu.pipeline_mode<synchronous>, transform_indices = @transform_25, window_bounds = array<i64: 1, 32>}, {pipeline_mode = #tpu.pipeline_mode<synchronous>, transform_indices = @transform_26, window_bounds = array<i64: 1, 32>}, {transform_indices = @transform_27, window_bounds = array<i64: 1, 8, 32>}]} {
    %c0 = arith.constant 0 : index
    %c0_0 = arith.constant 0 : index
    %c0_1 = arith.constant 0 : index
    %0 = vector.load %arg2[%c0, %c0_0, %c0_1] : memref<1x8x32xf32, #tpu.memory_space<vmem>>, vector<1x8x32xf32>
    %1 = vector.shape_cast %0 : vector<1x8x32xf32> to vector<8x32xf32>
    %c0_2 = arith.constant 0 : index
    %c0_3 = arith.constant 0 : index
    %c0_4 = arith.constant 0 : index
    %2 = vector.load %arg3[%c0_2, %c0_3, %c0_4] : memref<1x8x32xf32, #tpu.memory_space<vmem>>, vector<1x8x32xf32>
    %3 = vector.shape_cast %2 : vector<1x8x32xf32> to vector<8x32xf32>
    %c0_5 = arith.constant 0 : index
    %c0_6 = arith.constant 0 : index
    %c0_7 = arith.constant 0 : index
    %4 = vector.load %arg4[%c0_5, %c0_6, %c0_7] : memref<1x10x32xf32, #tpu.memory_space<vmem>>, vector<1x10x32xf32>
    %5 = vector.shape_cast %4 : vector<1x10x32xf32> to vector<10x32xf32>
    %6 = tpu.iota {dimensions = array<i32: 0>} : vector<8x8xi32>
    %c8_i32 = arith.constant 8 : i32
    %7 = arith.muli %arg1, %c8_i32 : i32
    %8 = vector.broadcast %7 : i32 to vector<8x8xi32>
    %9 = arith.addi %6, %8 : vector<8x8xi32>
    %10 = tpu.iota {dimensions = array<i32: 1>} : vector<8x8xi32>
    %c1_i32 = arith.constant 1 : i32
    %11 = vector.broadcast %c1_i32 : i32 to vector<8x8xi32>
    %12 = arith.addi %9, %11 : vector<8x8xi32>
    %13 = arith.cmpi sle, %10, %12 : vector<8x8xi32>
    %c0_8 = arith.constant 0 : index
    %c0_9 = arith.constant 0 : index
    %c0_10 = arith.constant 0 : index
    %14 = vector.load %arg5[%c0_8, %c0_9, %c0_10] : memref<1x1x8xf32, #tpu.memory_space<vmem>>, vector<1x1x8xf32>
    %15 = vector.shape_cast %14 : vector<1x1x8xf32> to vector<1x8xf32>
    %cst = arith.constant -1.000000e+09 : f32
    %16 = vector.broadcast %cst : f32 to vector<8x8xf32>
    %17 = vector.shape_cast %15 : vector<1x8xf32> to vector<1x8xf32>
    %18 = vector.broadcast %17 : vector<1x8xf32> to vector<8x8xf32>
    %19 = arith.select %13, %16, %18 : vector<8x8xi1>, vector<8x8xf32>
    %c0_11 = arith.constant 0 : index
    %c0_12 = arith.constant 0 : index
    %c0_13 = arith.constant 0 : index
    %20 = vector.load %arg6[%c0_11, %c0_12, %c0_13] : memref<1x1x10xf32, #tpu.memory_space<vmem>>, vector<1x1x10xf32>
    %21 = vector.shape_cast %20 : vector<1x1x10xf32> to vector<1x10xf32>
    %22 = arith.truncf %1 : vector<8x32xf32> to vector<8x32xbf16>
    %c0_14 = arith.constant 0 : index
    %c0_15 = arith.constant 0 : index
    %23 = vector.load %arg7[%c0_14, %c0_15] : memref<32x32xbf16, #tpu.memory_space<vmem>>, vector<32x32xbf16>
    %cst_16 = arith.constant dense<0.000000e+00> : vector<8x32xf32>
    %24 = tpu.matmul %22, %23, %cst_16 {dimension_numbers = #tpu.dot_dimension_numbers<[1], [0], [0], [1], [0, 0, 1, 1], [], []>} : vector<8x32xbf16>, vector<32x32xbf16>, vector<8x32xf32> -> vector<8x32xf32>
    %c0_17 = arith.constant 0 : index
    %c0_18 = arith.constant 0 : index
    %25 = vector.load %arg8[%c0_17, %c0_18] : memref<1x32xf32, #tpu.memory_space<vmem>>, vector<1x32xf32>
    %26 = vector.broadcast %25 : vector<1x32xf32> to vector<8x32xf32>
    %27 = arith.addf %24, %26 : vector<8x32xf32>
    %cst_19 = arith.constant 2.500000e-01 : f32
    %28 = vector.broadcast %cst_19 : f32 to vector<8x32xf32>
    %29 = arith.mulf %27, %28 : vector<8x32xf32>
    %30 = arith.truncf %29 : vector<8x32xf32> to vector<8x32xbf16>
    %31 = arith.truncf %3 : vector<8x32xf32> to vector<8x32xbf16>
    %c0_20 = arith.constant 0 : index
    %c0_21 = arith.constant 0 : index
    %32 = vector.load %arg9[%c0_20, %c0_21] : memref<32x64xbf16, #tpu.memory_space<vmem>>, vector<32x64xbf16>
    %cst_22 = arith.constant dense<0.000000e+00> : vector<8x64xf32>
    %33 = tpu.matmul %31, %32, %cst_22 {dimension_numbers = #tpu.dot_dimension_numbers<[1], [0], [0], [1], [0, 0, 1, 1], [], []>} : vector<8x32xbf16>, vector<32x64xbf16>, vector<8x64xf32> -> vector<8x64xf32>
    %c0_23 = arith.constant 0 : index
    %c0_24 = arith.constant 0 : index
    %34 = vector.load %arg10[%c0_23, %c0_24] : memref<1x64xf32, #tpu.memory_space<vmem>>, vector<1x64xf32>
    %35 = vector.broadcast %34 : vector<1x64xf32> to vector<8x64xf32>
    %36 = arith.addf %33, %35 : vector<8x64xf32>
    %37 = arith.truncf %36 : vector<8x64xf32> to vector<8x64xbf16>
    %38 = vector.extract_strided_slice %37 {offsets = [0, 0], sizes = [8, 32], strides = [1, 1]} : vector<8x64xbf16> to vector<8x32xbf16>
    %39 = vector.extract_strided_slice %37 {offsets = [0, 32], sizes = [8, 32], strides = [1, 1]} : vector<8x64xbf16> to vector<8x32xbf16>
    %40 = vector.extract_strided_slice %30 {offsets = [0, 0], sizes = [8, 16], strides = [1, 1]} : vector<8x32xbf16> to vector<8x16xbf16>
    %41 = vector.extract_strided_slice %38 {offsets = [0, 0], sizes = [8, 16], strides = [1, 1]} : vector<8x32xbf16> to vector<8x16xbf16>
    %cst_25 = arith.constant dense<0.000000e+00> : vector<8x8xf32>
    %42 = tpu.matmul %40, %41, %cst_25 {dimension_numbers = #tpu.dot_dimension_numbers<[1], [1], [0], [0], [0, 0, 1, 0], [], []>} : vector<8x16xbf16>, vector<8x16xbf16>, vector<8x8xf32> -> vector<8x8xf32>
    %43 = arith.addf %42, %19 : vector<8x8xf32>
    %cst_26 = arith.constant dense<0xFF800000> : vector<8xf32>
    %44 = vector.multi_reduction <maximumf>, %43, %cst_26 [1] : vector<8x8xf32> to vector<8xf32>
    %45 = vector.shape_cast %44 : vector<8xf32> to vector<8x1xf32>
    %46 = vector.broadcast %45 : vector<8x1xf32> to vector<8x8xf32>
    %47 = arith.subf %43, %46 : vector<8x8xf32>
    %48 = math.exp %47 : vector<8x8xf32>
    %cst_27 = arith.constant dense<0.000000e+00> : vector<8xf32>
    %49 = vector.multi_reduction <add>, %48, %cst_27 [1] : vector<8x8xf32> to vector<8xf32>
    %50 = vector.shape_cast %49 : vector<8xf32> to vector<8x1xf32>
    %cst_28 = arith.constant 1.000000e+00 : f32
    %51 = vector.broadcast %cst_28 : f32 to vector<8x1xf32>
    %52 = arith.divf %51, %50 : vector<8x1xf32>
    %53 = vector.broadcast %52 : vector<8x1xf32> to vector<8x8xf32>
    %54 = arith.mulf %48, %53 : vector<8x8xf32>
    %55 = arith.truncf %54 : vector<8x8xf32> to vector<8x8xbf16>
    %56 = vector.extract_strided_slice %39 {offsets = [0, 0], sizes = [8, 16], strides = [1, 1]} : vector<8x32xbf16> to vector<8x16xbf16>
    %cst_29 = arith.constant dense<0.000000e+00> : vector<8x16xf32>
    %57 = tpu.matmul %55, %56, %cst_29 {dimension_numbers = #tpu.dot_dimension_numbers<[1], [0], [0], [1], [0, 0, 1, 1], [], []>} : vector<8x8xbf16>, vector<8x16xbf16>, vector<8x16xf32> -> vector<8x16xf32>
    %58 = vector.extract_strided_slice %30 {offsets = [0, 16], sizes = [8, 16], strides = [1, 1]} : vector<8x32xbf16> to vector<8x16xbf16>
    %59 = vector.extract_strided_slice %38 {offsets = [0, 16], sizes = [8, 16], strides = [1, 1]} : vector<8x32xbf16> to vector<8x16xbf16>
    %cst_30 = arith.constant dense<0.000000e+00> : vector<8x8xf32>
    %60 = tpu.matmul %58, %59, %cst_30 {dimension_numbers = #tpu.dot_dimension_numbers<[1], [1], [0], [0], [0, 0, 1, 0], [], []>} : vector<8x16xbf16>, vector<8x16xbf16>, vector<8x8xf32> -> vector<8x8xf32>
    %61 = arith.addf %60, %19 : vector<8x8xf32>
    %cst_31 = arith.constant dense<0xFF800000> : vector<8xf32>
    %62 = vector.multi_reduction <maximumf>, %61, %cst_31 [1] : vector<8x8xf32> to vector<8xf32>
    %63 = vector.shape_cast %62 : vector<8xf32> to vector<8x1xf32>
    %64 = vector.broadcast %63 : vector<8x1xf32> to vector<8x8xf32>
    %65 = arith.subf %61, %64 : vector<8x8xf32>
    %66 = math.exp %65 : vector<8x8xf32>
    %cst_32 = arith.constant dense<0.000000e+00> : vector<8xf32>
    %67 = vector.multi_reduction <add>, %66, %cst_32 [1] : vector<8x8xf32> to vector<8xf32>
    %68 = vector.shape_cast %67 : vector<8xf32> to vector<8x1xf32>
    %cst_33 = arith.constant 1.000000e+00 : f32
    %69 = vector.broadcast %cst_33 : f32 to vector<8x1xf32>
    %70 = arith.divf %69, %68 : vector<8x1xf32>
    %71 = vector.broadcast %70 : vector<8x1xf32> to vector<8x8xf32>
    %72 = arith.mulf %66, %71 : vector<8x8xf32>
    %73 = arith.truncf %72 : vector<8x8xf32> to vector<8x8xbf16>
    %74 = vector.extract_strided_slice %39 {offsets = [0, 16], sizes = [8, 16], strides = [1, 1]} : vector<8x32xbf16> to vector<8x16xbf16>
    %cst_34 = arith.constant dense<0.000000e+00> : vector<8x16xf32>
    %75 = tpu.matmul %73, %74, %cst_34 {dimension_numbers = #tpu.dot_dimension_numbers<[1], [0], [0], [1], [0, 0, 1, 1], [], []>} : vector<8x8xbf16>, vector<8x16xbf16>, vector<8x16xf32> -> vector<8x16xf32>
    %76 = tpu.concatenate %57, %75 in 1 : vector<8x16xf32>, vector<8x16xf32> -> vector<8x32xf32>
    %77 = arith.truncf %76 : vector<8x32xf32> to vector<8x32xbf16>
    %c0_35 = arith.constant 0 : index
    %c0_36 = arith.constant 0 : index
    %78 = vector.load %arg11[%c0_35, %c0_36] : memref<32x32xbf16, #tpu.memory_space<vmem>>, vector<32x32xbf16>
    %cst_37 = arith.constant dense<0.000000e+00> : vector<8x32xf32>
    %79 = tpu.matmul %77, %78, %cst_37 {dimension_numbers = #tpu.dot_dimension_numbers<[1], [0], [0], [1], [0, 0, 1, 1], [], []>} : vector<8x32xbf16>, vector<32x32xbf16>, vector<8x32xf32> -> vector<8x32xf32>
    %c0_38 = arith.constant 0 : index
    %c0_39 = arith.constant 0 : index
    %80 = vector.load %arg12[%c0_38, %c0_39] : memref<1x32xf32, #tpu.memory_space<vmem>>, vector<1x32xf32>
    %81 = vector.broadcast %80 : vector<1x32xf32> to vector<8x32xf32>
    %82 = arith.addf %79, %81 : vector<8x32xf32>
    %83 = arith.addf %82, %1 : vector<8x32xf32>
    %cst_40 = arith.constant dense<0.000000e+00> : vector<8xf32>
    %84 = vector.multi_reduction <add>, %83, %cst_40 [1] : vector<8x32xf32> to vector<8xf32>
    %85 = vector.shape_cast %84 : vector<8xf32> to vector<8x1xf32>
    %cst_41 = arith.constant 3.200000e+01 : f32
    %86 = vector.broadcast %cst_41 : f32 to vector<8x1xf32>
    %87 = arith.divf %85, %86 : vector<8x1xf32>
    %88 = vector.broadcast %87 : vector<8x1xf32> to vector<8x32xf32>
    %89 = arith.subf %83, %88 : vector<8x32xf32>
    %90 = arith.mulf %89, %89 : vector<8x32xf32>
    %cst_42 = arith.constant dense<0.000000e+00> : vector<8xf32>
    %91 = vector.multi_reduction <add>, %90, %cst_42 [1] : vector<8x32xf32> to vector<8xf32>
    %92 = vector.shape_cast %91 : vector<8xf32> to vector<8x1xf32>
    %cst_43 = arith.constant 3.200000e+01 : f32
    %93 = vector.broadcast %cst_43 : f32 to vector<8x1xf32>
    %94 = arith.divf %92, %93 : vector<8x1xf32>
    %95 = vector.broadcast %87 : vector<8x1xf32> to vector<8x32xf32>
    %96 = arith.subf %83, %95 : vector<8x32xf32>
    %cst_44 = arith.constant 9.99999974E-6 : f32
    %97 = vector.broadcast %cst_44 : f32 to vector<8x1xf32>
    %98 = arith.addf %94, %97 : vector<8x1xf32>
    %99 = math.rsqrt %98 : vector<8x1xf32>
    %100 = vector.broadcast %99 : vector<8x1xf32> to vector<8x32xf32>
    %101 = arith.mulf %96, %100 : vector<8x32xf32>
    %c0_45 = arith.constant 0 : index
    %c0_46 = arith.constant 0 : index
    %102 = vector.load %arg13[%c0_45, %c0_46] : memref<1x32xf32, #tpu.memory_space<vmem>>, vector<1x32xf32>
    %103 = vector.broadcast %102 : vector<1x32xf32> to vector<8x32xf32>
    %104 = arith.mulf %101, %103 : vector<8x32xf32>
    %c0_47 = arith.constant 0 : index
    %c0_48 = arith.constant 0 : index
    %105 = vector.load %arg14[%c0_47, %c0_48] : memref<1x32xf32, #tpu.memory_space<vmem>>, vector<1x32xf32>
    %106 = vector.broadcast %105 : vector<1x32xf32> to vector<8x32xf32>
    %107 = arith.addf %104, %106 : vector<8x32xf32>
    %108 = arith.truncf %107 : vector<8x32xf32> to vector<8x32xbf16>
    %c0_49 = arith.constant 0 : index
    %c0_50 = arith.constant 0 : index
    %109 = vector.load %arg15[%c0_49, %c0_50] : memref<32x32xbf16, #tpu.memory_space<vmem>>, vector<32x32xbf16>
    %cst_51 = arith.constant dense<0.000000e+00> : vector<8x32xf32>
    %110 = tpu.matmul %108, %109, %cst_51 {dimension_numbers = #tpu.dot_dimension_numbers<[1], [0], [0], [1], [0, 0, 1, 1], [], []>} : vector<8x32xbf16>, vector<32x32xbf16>, vector<8x32xf32> -> vector<8x32xf32>
    %c0_52 = arith.constant 0 : index
    %c0_53 = arith.constant 0 : index
    %111 = vector.load %arg16[%c0_52, %c0_53] : memref<1x32xf32, #tpu.memory_space<vmem>>, vector<1x32xf32>
    %112 = vector.broadcast %111 : vector<1x32xf32> to vector<8x32xf32>
    %113 = arith.addf %110, %112 : vector<8x32xf32>
    %cst_54 = arith.constant 2.500000e-01 : f32
    %114 = vector.broadcast %cst_54 : f32 to vector<8x32xf32>
    %115 = arith.mulf %113, %114 : vector<8x32xf32>
    %116 = arith.truncf %115 : vector<8x32xf32> to vector<8x32xbf16>
    %117 = arith.truncf %5 : vector<10x32xf32> to vector<10x32xbf16>
    %c0_55 = arith.constant 0 : index
    %c0_56 = arith.constant 0 : index
    %118 = vector.load %arg17[%c0_55, %c0_56] : memref<32x64xbf16, #tpu.memory_space<vmem>>, vector<32x64xbf16>
    %cst_57 = arith.constant dense<0.000000e+00> : vector<10x64xf32>
    %119 = tpu.matmul %117, %118, %cst_57 {dimension_numbers = #tpu.dot_dimension_numbers<[1], [0], [0], [1], [0, 0, 1, 1], [], []>} : vector<10x32xbf16>, vector<32x64xbf16>, vector<10x64xf32> -> vector<10x64xf32>
    %c0_58 = arith.constant 0 : index
    %c0_59 = arith.constant 0 : index
    %120 = vector.load %arg18[%c0_58, %c0_59] : memref<1x64xf32, #tpu.memory_space<vmem>>, vector<1x64xf32>
    %121 = vector.broadcast %120 : vector<1x64xf32> to vector<10x64xf32>
    %122 = arith.addf %119, %121 : vector<10x64xf32>
    %123 = arith.truncf %122 : vector<10x64xf32> to vector<10x64xbf16>
    %124 = vector.extract_strided_slice %123 {offsets = [0, 0], sizes = [10, 32], strides = [1, 1]} : vector<10x64xbf16> to vector<10x32xbf16>
    %125 = vector.extract_strided_slice %123 {offsets = [0, 32], sizes = [10, 32], strides = [1, 1]} : vector<10x64xbf16> to vector<10x32xbf16>
    %126 = vector.extract_strided_slice %116 {offsets = [0, 0], sizes = [8, 16], strides = [1, 1]} : vector<8x32xbf16> to vector<8x16xbf16>
    %127 = vector.extract_strided_slice %124 {offsets = [0, 0], sizes = [10, 16], strides = [1, 1]} : vector<10x32xbf16> to vector<10x16xbf16>
    %cst_60 = arith.constant dense<0.000000e+00> : vector<8x10xf32>
    %128 = tpu.matmul %126, %127, %cst_60 {dimension_numbers = #tpu.dot_dimension_numbers<[1], [1], [0], [0], [0, 0, 1, 0], [], []>} : vector<8x16xbf16>, vector<10x16xbf16>, vector<8x10xf32> -> vector<8x10xf32>
    %129 = vector.broadcast %21 : vector<1x10xf32> to vector<8x10xf32>
    %130 = arith.addf %128, %129 : vector<8x10xf32>
    %cst_61 = arith.constant dense<0xFF800000> : vector<8xf32>
    %131 = vector.multi_reduction <maximumf>, %130, %cst_61 [1] : vector<8x10xf32> to vector<8xf32>
    %132 = vector.shape_cast %131 : vector<8xf32> to vector<8x1xf32>
    %133 = vector.broadcast %132 : vector<8x1xf32> to vector<8x10xf32>
    %134 = arith.subf %130, %133 : vector<8x10xf32>
    %135 = math.exp %134 : vector<8x10xf32>
    %cst_62 = arith.constant dense<0.000000e+00> : vector<8xf32>
    %136 = vector.multi_reduction <add>, %135, %cst_62 [1] : vector<8x10xf32> to vector<8xf32>
    %137 = vector.shape_cast %136 : vector<8xf32> to vector<8x1xf32>
    %cst_63 = arith.constant 1.000000e+00 : f32
    %138 = vector.broadcast %cst_63 : f32 to vector<8x1xf32>
    %139 = arith.divf %138, %137 : vector<8x1xf32>
    %140 = vector.broadcast %139 : vector<8x1xf32> to vector<8x10xf32>
    %141 = arith.mulf %135, %140 : vector<8x10xf32>
    %142 = arith.truncf %141 : vector<8x10xf32> to vector<8x10xbf16>
    %143 = vector.extract_strided_slice %125 {offsets = [0, 0], sizes = [10, 16], strides = [1, 1]} : vector<10x32xbf16> to vector<10x16xbf16>
    %cst_64 = arith.constant dense<0.000000e+00> : vector<8x16xf32>
    %144 = tpu.matmul %142, %143, %cst_64 {dimension_numbers = #tpu.dot_dimension_numbers<[1], [0], [0], [1], [0, 0, 1, 1], [], []>} : vector<8x10xbf16>, vector<10x16xbf16>, vector<8x16xf32> -> vector<8x16xf32>
    %145 = vector.extract_strided_slice %116 {offsets = [0, 16], sizes = [8, 16], strides = [1, 1]} : vector<8x32xbf16> to vector<8x16xbf16>
    %146 = vector.extract_strided_slice %124 {offsets = [0, 16], sizes = [10, 16], strides = [1, 1]} : vector<10x32xbf16> to vector<10x16xbf16>
    %cst_65 = arith.constant dense<0.000000e+00> : vector<8x10xf32>
    %147 = tpu.matmul %145, %146, %cst_65 {dimension_numbers = #tpu.dot_dimension_numbers<[1], [1], [0], [0], [0, 0, 1, 0], [], []>} : vector<8x16xbf16>, vector<10x16xbf16>, vector<8x10xf32> -> vector<8x10xf32>
    %148 = vector.broadcast %21 : vector<1x10xf32> to vector<8x10xf32>
    %149 = arith.addf %147, %148 : vector<8x10xf32>
    %cst_66 = arith.constant dense<0xFF800000> : vector<8xf32>
    %150 = vector.multi_reduction <maximumf>, %149, %cst_66 [1] : vector<8x10xf32> to vector<8xf32>
    %151 = vector.shape_cast %150 : vector<8xf32> to vector<8x1xf32>
    %152 = vector.broadcast %151 : vector<8x1xf32> to vector<8x10xf32>
    %153 = arith.subf %149, %152 : vector<8x10xf32>
    %154 = math.exp %153 : vector<8x10xf32>
    %cst_67 = arith.constant dense<0.000000e+00> : vector<8xf32>
    %155 = vector.multi_reduction <add>, %154, %cst_67 [1] : vector<8x10xf32> to vector<8xf32>
    %156 = vector.shape_cast %155 : vector<8xf32> to vector<8x1xf32>
    %cst_68 = arith.constant 1.000000e+00 : f32
    %157 = vector.broadcast %cst_68 : f32 to vector<8x1xf32>
    %158 = arith.divf %157, %156 : vector<8x1xf32>
    %159 = vector.broadcast %158 : vector<8x1xf32> to vector<8x10xf32>
    %160 = arith.mulf %154, %159 : vector<8x10xf32>
    %161 = arith.truncf %160 : vector<8x10xf32> to vector<8x10xbf16>
    %162 = vector.extract_strided_slice %125 {offsets = [0, 16], sizes = [10, 16], strides = [1, 1]} : vector<10x32xbf16> to vector<10x16xbf16>
    %cst_69 = arith.constant dense<0.000000e+00> : vector<8x16xf32>
    %163 = tpu.matmul %161, %162, %cst_69 {dimension_numbers = #tpu.dot_dimension_numbers<[1], [0], [0], [1], [0, 0, 1, 1], [], []>} : vector<8x10xbf16>, vector<10x16xbf16>, vector<8x16xf32> -> vector<8x16xf32>
    %164 = tpu.concatenate %144, %163 in 1 : vector<8x16xf32>, vector<8x16xf32> -> vector<8x32xf32>
    %165 = arith.truncf %164 : vector<8x32xf32> to vector<8x32xbf16>
    %c0_70 = arith.constant 0 : index
    %c0_71 = arith.constant 0 : index
    %166 = vector.load %arg19[%c0_70, %c0_71] : memref<32x32xbf16, #tpu.memory_space<vmem>>, vector<32x32xbf16>
    %cst_72 = arith.constant dense<0.000000e+00> : vector<8x32xf32>
    %167 = tpu.matmul %165, %166, %cst_72 {dimension_numbers = #tpu.dot_dimension_numbers<[1], [0], [0], [1], [0, 0, 1, 1], [], []>} : vector<8x32xbf16>, vector<32x32xbf16>, vector<8x32xf32> -> vector<8x32xf32>
    %c0_73 = arith.constant 0 : index
    %c0_74 = arith.constant 0 : index
    %168 = vector.load %arg20[%c0_73, %c0_74] : memref<1x32xf32, #tpu.memory_space<vmem>>, vector<1x32xf32>
    %169 = vector.broadcast %168 : vector<1x32xf32> to vector<8x32xf32>
    %170 = arith.addf %167, %169 : vector<8x32xf32>
    %171 = arith.addf %170, %107 : vector<8x32xf32>
    %cst_75 = arith.constant dense<0.000000e+00> : vector<8xf32>
    %172 = vector.multi_reduction <add>, %171, %cst_75 [1] : vector<8x32xf32> to vector<8xf32>
    %173 = vector.shape_cast %172 : vector<8xf32> to vector<8x1xf32>
    %cst_76 = arith.constant 3.200000e+01 : f32
    %174 = vector.broadcast %cst_76 : f32 to vector<8x1xf32>
    %175 = arith.divf %173, %174 : vector<8x1xf32>
    %176 = vector.broadcast %175 : vector<8x1xf32> to vector<8x32xf32>
    %177 = arith.subf %171, %176 : vector<8x32xf32>
    %178 = arith.mulf %177, %177 : vector<8x32xf32>
    %cst_77 = arith.constant dense<0.000000e+00> : vector<8xf32>
    %179 = vector.multi_reduction <add>, %178, %cst_77 [1] : vector<8x32xf32> to vector<8xf32>
    %180 = vector.shape_cast %179 : vector<8xf32> to vector<8x1xf32>
    %cst_78 = arith.constant 3.200000e+01 : f32
    %181 = vector.broadcast %cst_78 : f32 to vector<8x1xf32>
    %182 = arith.divf %180, %181 : vector<8x1xf32>
    %183 = vector.broadcast %175 : vector<8x1xf32> to vector<8x32xf32>
    %184 = arith.subf %171, %183 : vector<8x32xf32>
    %cst_79 = arith.constant 9.99999974E-6 : f32
    %185 = vector.broadcast %cst_79 : f32 to vector<8x1xf32>
    %186 = arith.addf %182, %185 : vector<8x1xf32>
    %187 = math.rsqrt %186 : vector<8x1xf32>
    %188 = vector.broadcast %187 : vector<8x1xf32> to vector<8x32xf32>
    %189 = arith.mulf %184, %188 : vector<8x32xf32>
    %c0_80 = arith.constant 0 : index
    %c0_81 = arith.constant 0 : index
    %190 = vector.load %arg21[%c0_80, %c0_81] : memref<1x32xf32, #tpu.memory_space<vmem>>, vector<1x32xf32>
    %191 = vector.broadcast %190 : vector<1x32xf32> to vector<8x32xf32>
    %192 = arith.mulf %189, %191 : vector<8x32xf32>
    %c0_82 = arith.constant 0 : index
    %c0_83 = arith.constant 0 : index
    %193 = vector.load %arg22[%c0_82, %c0_83] : memref<1x32xf32, #tpu.memory_space<vmem>>, vector<1x32xf32>
    %194 = vector.broadcast %193 : vector<1x32xf32> to vector<8x32xf32>
    %195 = arith.addf %192, %194 : vector<8x32xf32>
    %196 = arith.truncf %195 : vector<8x32xf32> to vector<8x32xbf16>
    %c0_84 = arith.constant 0 : index
    %c0_85 = arith.constant 0 : index
    %197 = vector.load %arg23[%c0_84, %c0_85] : memref<32x64xbf16, #tpu.memory_space<vmem>>, vector<32x64xbf16>
    %cst_86 = arith.constant dense<0.000000e+00> : vector<8x64xf32>
    %198 = tpu.matmul %196, %197, %cst_86 {dimension_numbers = #tpu.dot_dimension_numbers<[1], [0], [0], [1], [0, 0, 1, 1], [], []>} : vector<8x32xbf16>, vector<32x64xbf16>, vector<8x64xf32> -> vector<8x64xf32>
    %c0_87 = arith.constant 0 : index
    %c0_88 = arith.constant 0 : index
    %199 = vector.load %arg24[%c0_87, %c0_88] : memref<1x64xf32, #tpu.memory_space<vmem>>, vector<1x64xf32>
    %200 = vector.broadcast %199 : vector<1x64xf32> to vector<8x64xf32>
    %201 = arith.addf %198, %200 : vector<8x64xf32>
    %cst_89 = arith.constant 0.000000e+00 : f32
    %202 = vector.broadcast %cst_89 : f32 to vector<8x64xf32>
    %203 = arith.maximumf %201, %202 : vector<8x64xf32>
    %204 = arith.truncf %203 : vector<8x64xf32> to vector<8x64xbf16>
    %c0_90 = arith.constant 0 : index
    %c0_91 = arith.constant 0 : index
    %205 = vector.load %arg25[%c0_90, %c0_91] : memref<64x32xbf16, #tpu.memory_space<vmem>>, vector<64x32xbf16>
    %cst_92 = arith.constant dense<0.000000e+00> : vector<8x32xf32>
    %206 = tpu.matmul %204, %205, %cst_92 {dimension_numbers = #tpu.dot_dimension_numbers<[1], [0], [0], [1], [0, 0, 1, 1], [], []>} : vector<8x64xbf16>, vector<64x32xbf16>, vector<8x32xf32> -> vector<8x32xf32>
    %c0_93 = arith.constant 0 : index
    %c0_94 = arith.constant 0 : index
    %207 = vector.load %arg26[%c0_93, %c0_94] : memref<1x32xf32, #tpu.memory_space<vmem>>, vector<1x32xf32>
    %208 = vector.broadcast %207 : vector<1x32xf32> to vector<8x32xf32>
    %209 = arith.addf %206, %208 : vector<8x32xf32>
    %210 = arith.addf %209, %195 : vector<8x32xf32>
    %cst_95 = arith.constant dense<0.000000e+00> : vector<8xf32>
    %211 = vector.multi_reduction <add>, %210, %cst_95 [1] : vector<8x32xf32> to vector<8xf32>
    %212 = vector.shape_cast %211 : vector<8xf32> to vector<8x1xf32>
    %cst_96 = arith.constant 3.200000e+01 : f32
    %213 = vector.broadcast %cst_96 : f32 to vector<8x1xf32>
    %214 = arith.divf %212, %213 : vector<8x1xf32>
    %215 = vector.broadcast %214 : vector<8x1xf32> to vector<8x32xf32>
    %216 = arith.subf %210, %215 : vector<8x32xf32>
    %217 = arith.mulf %216, %216 : vector<8x32xf32>
    %cst_97 = arith.constant dense<0.000000e+00> : vector<8xf32>
    %218 = vector.multi_reduction <add>, %217, %cst_97 [1] : vector<8x32xf32> to vector<8xf32>
    %219 = vector.shape_cast %218 : vector<8xf32> to vector<8x1xf32>
    %cst_98 = arith.constant 3.200000e+01 : f32
    %220 = vector.broadcast %cst_98 : f32 to vector<8x1xf32>
    %221 = arith.divf %219, %220 : vector<8x1xf32>
    %222 = vector.broadcast %214 : vector<8x1xf32> to vector<8x32xf32>
    %223 = arith.subf %210, %222 : vector<8x32xf32>
    %cst_99 = arith.constant 9.99999974E-6 : f32
    %224 = vector.broadcast %cst_99 : f32 to vector<8x1xf32>
    %225 = arith.addf %221, %224 : vector<8x1xf32>
    %226 = math.rsqrt %225 : vector<8x1xf32>
    %227 = vector.broadcast %226 : vector<8x1xf32> to vector<8x32xf32>
    %228 = arith.mulf %223, %227 : vector<8x32xf32>
    %c0_100 = arith.constant 0 : index
    %c0_101 = arith.constant 0 : index
    %229 = vector.load %arg27[%c0_100, %c0_101] : memref<1x32xf32, #tpu.memory_space<vmem>>, vector<1x32xf32>
    %230 = vector.broadcast %229 : vector<1x32xf32> to vector<8x32xf32>
    %231 = arith.mulf %228, %230 : vector<8x32xf32>
    %c0_102 = arith.constant 0 : index
    %c0_103 = arith.constant 0 : index
    %232 = vector.load %arg28[%c0_102, %c0_103] : memref<1x32xf32, #tpu.memory_space<vmem>>, vector<1x32xf32>
    %233 = vector.broadcast %232 : vector<1x32xf32> to vector<8x32xf32>
    %234 = arith.addf %231, %233 : vector<8x32xf32>
    %c0_104 = arith.constant 0 : index
    %c0_105 = arith.constant 0 : index
    %c0_106 = arith.constant 0 : index
    %235 = vector.load %arg29[%c0_104, %c0_105, %c0_106] : memref<1x8x32xf32, #tpu.memory_space<vmem>>, vector<1x8x32xf32>
    %236 = vector.shape_cast %235 : vector<1x8x32xf32> to vector<8x32xf32>
    %237 = vector.shape_cast %234 : vector<8x32xf32> to vector<1x8x32xf32>
    tpu.vector_store %arg29[%c0_104, %c0_105, %c0_106], %237 {strides = array<i32>} : memref<1x8x32xf32, #tpu.memory_space<vmem>>, vector<1x8x32xf32>,
    return
  }
  func.func @transform_0(%arg0: i32, %arg1: i32) -> (i32, i32, i32) {
    %c0_i32 = arith.constant 0 : i32
    %c0_i32_0 = arith.constant 0 : i32
    return %arg0, %arg1, %c0_i32 : i32, i32, i32
  }
  func.func @transform_1(%arg0: i32, %arg1: i32) -> (i32, i32, i32) {
    %c0_i32 = arith.constant 0 : i32
    %c0_i32_0 = arith.constant 0 : i32
    %c0_i32_1 = arith.constant 0 : i32
    return %arg0, %c0_i32, %c0_i32_0 : i32, i32, i32
  }
  func.func @transform_2(%arg0: i32, %arg1: i32) -> (i32, i32, i32) {
    %c0_i32 = arith.constant 0 : i32
    %c0_i32_0 = arith.constant 0 : i32
    %c0_i32_1 = arith.constant 0 : i32
    return %arg0, %c0_i32, %c0_i32_0 : i32, i32, i32
  }
  func.func @transform_3(%arg0: i32, %arg1: i32) -> (i32, i32, i32) {
    %c0_i32 = arith.constant 0 : i32
    %c0_i32_0 = arith.constant 0 : i32
    %c0_i32_1 = arith.constant 0 : i32
    return %arg0, %c0_i32, %c0_i32_0 : i32, i32, i32
  }
  func.func @transform_4(%arg0: i32, %arg1: i32) -> (i32, i32, i32) {
    %c0_i32 = arith.constant 0 : i32
    %c0_i32_0 = arith.constant 0 : i32
    %c0_i32_1 = arith.constant 0 : i32
    return %arg0, %c0_i32, %c0_i32_0 : i32, i32, i32
  }
  func.func @transform_5(%arg0: i32, %arg1: i32) -> (i32, i32) {
    %c0_i32 = arith.constant 0 : i32
    %c0_i32_0 = arith.constant 0 : i32
    %c0_i32_1 = arith.constant 0 : i32
    return %c0_i32, %c0_i32_0 : i32, i32
  }
  func.func @transform_6(%arg0: i32, %arg1: i32) -> (i32, i32) {
    %c0_i32 = arith.constant 0 : i32
    %c0_i32_0 = arith.constant 0 : i32
    %c0_i32_1 = arith.constant 0 : i32
    return %c0_i32, %c0_i32_0 : i32, i32
  }
  func.func @transform_7(%arg0: i32, %arg1: i32) -> (i32, i32) {
    %c0_i32 = arith.constant 0 : i32
    %c0_i32_0 = arith.constant 0 : i32
    %c0_i32_1 = arith.constant 0 : i32
    return %c0_i32, %c0_i32_0 : i32, i32
  }
  func.func @transform_8(%arg0: i32, %arg1: i32) -> (i32, i32) {
    %c0_i32 = arith.constant 0 : i32
    %c0_i32_0 = arith.constant 0 : i32
    %c0_i32_1 = arith.constant 0 : i32
    return %c0_i32, %c0_i32_0 : i32, i32
  }
  func.func @transform_9(%arg0: i32, %arg1: i32) -> (i32, i32) {
    %c0_i32 = arith.constant 0 : i32
    %c0_i32_0 = arith.constant 0 : i32
    %c0_i32_1 = arith.constant 0 : i32
    return %c0_i32, %c0_i32_0 : i32, i32
  }
  func.func @transform_10(%arg0: i32, %arg1: i32) -> (i32, i32) {
    %c0_i32 = arith.constant 0 : i32
    %c0_i32_0 = arith.constant 0 : i32
    %c0_i32_1 = arith.constant 0 : i32
    return %c0_i32, %c0_i32_0 : i32, i32
  }
  func.func @transform_11(%arg0: i32, %arg1: i32) -> (i32, i32) {
    %c0_i32 = arith.constant 0 : i32
    %c0_i32_0 = arith.constant 0 : i32
    %c0_i32_1 = arith.constant 0 : i32
    return %c0_i32, %c0_i32_0 : i32, i32
  }
  func.func @transform_12(%arg0: i32, %arg1: i32) -> (i32, i32) {
    %c0_i32 = arith.constant 0 : i32
    %c0_i32_0 = arith.constant 0 : i32
    %c0_i32_1 = arith.constant 0 : i32
    return %c0_i32, %c0_i32_0 : i32, i32
  }
  func.func @transform_13(%arg0: i32, %arg1: i32) -> (i32, i32) {
    %c0_i32 = arith.constant 0 : i32
    %c0_i32_0 = arith.constant 0 : i32
    %c0_i32_1 = arith.constant 0 : i32
    return %c0_i32, %c0_i32_0 : i32, i32
  }
  func.func @transform_14(%arg0: i32, %arg1: i32) -> (i32, i32) {
    %c0_i32 = arith.constant 0 : i32
    %c0_i32_0 = arith.constant 0 : i32
    %c0_i32_1 = arith.constant 0 : i32
    return %c0_i32, %c0_i32_0 : i32, i32
  }
  func.func @transform_15(%arg0: i32, %arg1: i32) -> (i32, i32) {
    %c0_i32 = arith.constant 0 : i32
    %c0_i32_0 = arith.constant 0 : i32
    %c0_i32_1 = arith.constant 0 : i32
    return %c0_i32, %c0_i32_0 : i32, i32
  }
  func.func @transform_16(%arg0: i32, %arg1: i32) -> (i32, i32) {
    %c0_i32 = arith.constant 0 : i32
    %c0_i32_0 = arith.constant 0 : i32
    %c0_i32_1 = arith.constant 0 : i32
    return %c0_i32, %c0_i32_0 : i32, i32
  }
  func.func @transform_17(%arg0: i32, %arg1: i32) -> (i32, i32) {
    %c0_i32 = arith.constant 0 : i32
    %c0_i32_0 = arith.constant 0 : i32
    %c0_i32_1 = arith.constant 0 : i32
    return %c0_i32, %c0_i32_0 : i32, i32
  }
  func.func @transform_18(%arg0: i32, %arg1: i32) -> (i32, i32) {
    %c0_i32 = arith.constant 0 : i32
    %c0_i32_0 = arith.constant 0 : i32
    %c0_i32_1 = arith.constant 0 : i32
    return %c0_i32, %c0_i32_0 : i32, i32
  }
  func.func @transform_19(%arg0: i32, %arg1: i32) -> (i32, i32) {
    %c0_i32 = arith.constant 0 : i32
    %c0_i32_0 = arith.constant 0 : i32
    %c0_i32_1 = arith.constant 0 : i32
    return %c0_i32, %c0_i32_0 : i32, i32
  }
  func.func @transform_20(%arg0: i32, %arg1: i32) -> (i32, i32) {
    %c0_i32 = arith.constant 0 : i32
    %c0_i32_0 = arith.constant 0 : i32
    %c0_i32_1 = arith.constant 0 : i32
    return %c0_i32, %c0_i32_0 : i32, i32
  }
  func.func @transform_21(%arg0: i32, %arg1: i32) -> (i32, i32) {
    %c0_i32 = arith.constant 0 : i32
    %c0_i32_0 = arith.constant 0 : i32
    %c0_i32_1 = arith.constant 0 : i32
    return %c0_i32, %c0_i32_0 : i32, i32
  }
  func.func @transform_22(%arg0: i32, %arg1: i32) -> (i32, i32) {
    %c0_i32 = arith.constant 0 : i32
    %c0_i32_0 = arith.constant 0 : i32
    %c0_i32_1 = arith.constant 0 : i32
    return %c0_i32, %c0_i32_0 : i32, i32
  }
  func.func @transform_23(%arg0: i32, %arg1: i32) -> (i32, i32) {
    %c0_i32 = arith.constant 0 : i32
    %c0_i32_0 = arith.constant 0 : i32
    %c0_i32_1 = arith.constant 0 : i32
    return %c0_i32, %c0_i32_0 : i32, i32
  }
  func.func @transform_24(%arg0: i32, %arg1: i32) -> (i32, i32) {
    %c0_i32 = arith.constant 0 : i32
    %c0_i32_0 = arith.constant 0 : i32
    %c0_i32_1 = arith.constant 0 : i32
    return %c0_i32, %c0_i32_0 : i32, i32
  }
  func.func @transform_25(%arg0: i32, %arg1: i32) -> (i32, i32) {
    %c0_i32 = arith.constant 0 : i32
    %c0_i32_0 = arith.constant 0 : i32
    %c0_i32_1 = arith.constant 0 : i32
    return %c0_i32, %c0_i32_0 : i32, i32
  }
  func.func @transform_26(%arg0: i32, %arg1: i32) -> (i32, i32) {
    %c0_i32 = arith.constant 0 : i32
    %c0_i32_0 = arith.constant 0 : i32
    %c0_i32_1 = arith.constant 0 : i32
    return %c0_i32, %c0_i32_0 : i32, i32
  }
  func.func @transform_27(%arg0: i32, %arg1: i32) -> (i32, i32, i32) {
    %c0_i32 = arith.constant 0 : i32
    %c0_i32_0 = arith.constant 0 : i32
    return %arg0, %arg1, %c0_i32 : i32, i32, i32
  }
}

</mosaic_0001>

<llo_original>
// kernel: decoder_forward.5
$region0: #{decoder_forward.5}
  #allocation0 [shape = 'u32[]', space=smem, size = 0x4, offset = 0x4, fixed_abs, tag = 'smem constant byte address 0x4 - core index']
  #allocation1 [shape = 'u32[144,128]{1,0:T(1,128)}', space=vmem, size = 0x12000, scoped, tag = 'internal scratch']
  %s0 = inlined_call_operand.vmem [shape: f32[16,32], index: 0, kind: input, shape index: {}]
  %s1 = inlined_call_operand.vmem [shape: bf16[32,128], index: 1, kind: input, shape index: {}]
  %s2 = inlined_call_operand.vmem [shape: f32[1,128], index: 2, kind: input, shape index: {}]
  %s3 = inlined_call_operand.vmem [shape: f32[16,128], index: 3, kind: output, shape index: {}]
  %s4 = sld [smem:[#allocation0]]
  $region22: #{decoder_forward.5} parent=0
    _
  %s6 = ssub.s32 1, %s4
  %s7 = scalar_select 0, %s6, %s4
  // Predicated region
  $region2: #{decoder_forward.5} parent=0 // pred_check
    _
  $region3: #{decoder_forward.5} parent=0 // pred_check_branch
    %9 = sbr.rel (0) target = $region5
  $region4: #{decoder_forward.5} parent=0 // pred_region
    _
  $region5: #{decoder_forward.5} parent=0 // pred_fallthru
    _
  // Predicated region
  $region6: #{decoder_forward.5} parent=0 // pred_check
    _
  $region7: #{decoder_forward.5} parent=0 // pred_check_branch
    %11 = sbr.rel (0) target = $region9
  $region8: #{decoder_forward.5} parent=0 // pred_region
    _
  $region9: #{decoder_forward.5} parent=0 // pred_fallthru
    _
  // Predicated region
  $region10: #{decoder_forward.5} parent=0 // pred_check
    _
  $region11: #{decoder_forward.5} parent=0 // pred_check_branch
    %13 = sbr.rel (0) target = $region13
  $region12: #{decoder_forward.5} parent=0 // pred_region
    _
  $region13: #{decoder_forward.5} parent=0 // pred_fallthru
    _
  %v15 = vld [vmem:[%s0] sm:$0xff]
  %v16 = vld [vmem:[%s0 + $0x8] sm:$0xff]
  %v17 = vpack.c.bf16 %v16, %v15
  %v18 = vld [vmem:[%s1] sm:$0xf]
  %v19 = vld [vmem:[%s1 + $0x4] sm:$0xf]
  %v20 = vld [vmem:[%s1 + $0x8] sm:$0xf]
  %v21 = vld [vmem:[%s1 + $0xc] sm:$0xf]
  %v22 = vld [vmem:[%s2] sm:$0x1]
  %v24 = vlaneseq
  %v25 = vshrl.u32 %v24, 7
  %v26 = vsub.s32 0, %v25
  %v27 = vrot.slane %v22, %v26
  %v33 = vunpack.c.l.b16 %v18
  %v34 = vunpack.c.l.b16 %v19
  %v35 = vunpack.c.l.b16 %v20
  %v36 = vunpack.c.l.b16 %v21
  %v37 = vpack.c.b16 %v34, %v33
  %v38 = vpack.c.b16 %v36, %v35
  %vm41 = vcmask 261120
  %v43 = vsel %vm41, %v17, 0
  %45 = vmatprep.subr.bf16.mxu0 0
  %46 = vmatpush1.bf16.msra.mxu0 %v37
  %47 = vmatprep.subr.bf16.mxu0 0
  %48 = vmatpush1.bf16.msra.mxu0 %v38
  %49 = vmatprep.subr.bf16.mxu0 0
  %50 = vmatpush1.bf16.msra.mxu0 0
  %51 = vmatprep.subr.bf16.mxu0 0
  %52 = vmatpush1.bf16.msra.mxu0 0
  %53 = vmatprep.subr.bf16.mxu0 0
  %54 = vmatpush1.bf16.msra.mxu0 0
  %55 = vmatprep.subr.bf16.mxu0 0
  %56 = vmatpush1.bf16.msra.mxu0 0
  %57 = vmatprep.subr.bf16.mxu0 0
  %58 = vmatpush1.bf16.msra.mxu0 0
  %59 = vmatprep.subr.bf16.mxu0 0
  %60 = vmatpush1.bf16.msra.mxu0 0
  %61 = vmatprep.subr.bf16.mxu0 0
  %62 = vmatpush1.bf16.msra.mxu0 0
  %63 = vmatprep.subr.bf16.mxu0 0
  %64 = vmatpush1.bf16.msra.mxu0 0
  %65 = vmatprep.subr.bf16.mxu0 0
  %66 = vmatpush1.bf16.msra.mxu0 0
  %67 = vmatprep.subr.bf16.mxu0 0
  %68 = vmatpush1.bf16.msra.mxu0 0
  %69 = vmatprep.subr.bf16.mxu0 0
  %70 = vmatpush1.bf16.msra.mxu0 0
  %71 = vmatprep.subr.bf16.mxu0 0
  %72 = vmatpush1.bf16.msra.mxu0 0
  %73 = vmatprep.subr.bf16.mxu0 0
  %74 = vmatpush1.bf16.msra.mxu0 0
  %75 = vmatprep.subr.bf16.mxu0 0
  %76 = vmatpush1.bf16.msra.mxu0 0
  %77 = vmatprep.mubr.bf16.mxu0 0
  %78 = vmatmul.mubr.bf16.gmra.mrb[0].mxu0 %v43
  %v79 = vpop.f32.mrb[0].mxu0
  %v80 = vadd.f32 %v27, %v79
  %v81 = vpop.f32.mrb[0].mxu0
  %v82 = vpop.f32.mrb[0].mxu0
  %v83 = vadd.f32 %v27, %v82
  %v84 = vpop.f32.mrb[0].mxu0
  %85 = vdwg.mxu0
  %86 = vst [vmem:[%s3] sm:$0xff] %v80
  %87 = vst [vmem:[%s3 + $0x8] sm:$0xff] %v83
  // Predicated region
  $region14: #{decoder_forward.5} parent=0 // pred_check
    _
  $region15: #{decoder_forward.5} parent=0 // pred_check_branch
    %89 = sbr.rel (0) target = $region17
  $region16: #{decoder_forward.5} parent=0 // pred_region
    _
  $region17: #{decoder_forward.5} parent=0 // pred_fallthru
    _
  // Predicated region
  $region18: #{decoder_forward.5} parent=0 // pred_check
    _
  $region19: #{decoder_forward.5} parent=0 // pred_check_branch
    %91 = sbr.rel (0) target = $region21
  $region20: #{decoder_forward.5} parent=0 // pred_region
    _
  $region21: #{decoder_forward.5} parent=0 // pred_fallthru
    _

// kernel: decoder_forward.3
$region0: #{decoder_forward.3}
  #allocation0 [shape = 'u32[]', space=smem, size = 0x4, offset = 0x4, fixed_abs, tag = 'smem constant byte address 0x4 - core index']
  #allocation1 [shape = 'u32[144,128]{1,0:T(1,128)}', space=vmem, size = 0x12000, scoped, tag = 'internal scratch']
  %s0 = inlined_call_operand.vmem [shape: f32[2,8,32], index: 0, kind: input, shape index: {}, may-alias: {0,1}]
  %s1 = inlined_call_operand.vmem [shape: f32[2,8,32], index: 1, kind: input, shape index: {}, may-alias: {0,1}]
  %s2 = inlined_call_operand.vmem [shape: f32[2,10,32], index: 2, kind: input, shape index: {}]
  %s3 = inlined_call_operand.vmem [shape: f32[2,1,8], index: 3, kind: input, shape index: {}]
  %s4 = inlined_call_operand.vmem [shape: f32[2,1,10], index: 4, kind: input, shape index: {}]
  %s5 = inlined_call_operand.vmem [shape: bf16[32,32], index: 5, kind: input, shape index: {}]
  %s6 = inlined_call_operand.vmem [shape: f32[1,32], index: 6, kind: input, shape index: {}]
  %s7 = inlined_call_operand.vmem [shape: bf16[32,64], index: 7, kind: input, shape index: {}]
  %s8 = inlined_call_operand.vmem [shape: f32[1,64], index: 8, kind: input, shape index: {}]
  %s9 = inlined_call_operand.vmem [shape: bf16[32,32], index: 9, kind: input, shape index: {}]
  %s10 = inlined_call_operand.vmem [shape: f32[1,32], index: 10, kind: input, shape index: {}]
  %s11 = inlined_call_operand.vmem [shape: f32[1,32], index: 11, kind: input, shape index: {}]
  %s12 = inlined_call_operand.vmem [shape: f32[1,32], index: 12, kind: input, shape index: {}]
  %s13 = inlined_call_operand.vmem [shape: bf16[32,32], index: 13, kind: input, shape index: {}]
  %s14 = inlined_call_operand.vmem [shape: f32[1,32], index: 14, kind: input, shape index: {}]
  %s15 = inlined_call_operand.vmem [shape: bf16[32,64], index: 15, kind: input, shape index: {}]
  %s16 = inlined_call_operand.vmem [shape: f32[1,64], index: 16, kind: input, shape index: {}]
  %s17 = inlined_call_operand.vmem [shape: bf16[32,32], index: 17, kind: input, shape index: {}]
  %s18 = inlined_call_operand.vmem [shape: f32[1,32], index: 18, kind: input, shape index: {}]
  %s19 = inlined_call_operand.vmem [shape: f32[1,32], index: 19, kind: input, shape index: {}]
  %s20 = inlined_call_operand.vmem [shape: f32[1,32], index: 20, kind: input, shape index: {}]
  %s21 = inlined_call_operand.vmem [shape: bf16[32,64], index: 21, kind: input, shape index: {}]
  %s22 = inlined_call_operand.vmem [shape: f32[1,64], index: 22, kind: input, shape index: {}]
  %s23 = inlined_call_operand.vmem [shape: bf16[64,32], index: 23, kind: input, shape index: {}]
  %s24 = inlined_call_operand.vmem [shape: f32[1,32], index: 24, kind: input, shape index: {}]
  %s25 = inlined_call_operand.vmem [shape: f32[1,32], index: 25, kind: input, shape index: {}]
  %s26 = inlined_call_operand.vmem [shape: f32[1,32], index: 26, kind: input, shape index: {}]
  %s27 = inlined_call_operand.vmem [shape: f32[2,8,32], index: 27, kind: output, shape index: {}]
  %s28 = sld [smem:[#allocation0]]
  $region141: #{decoder_forward.3} parent=0
    _
  %s30 = ssub.s32 1, %s28
  %s31 = scalar_select 0, %s30, %s28
  loop: start=0, step=1, limit=4
  $region2: #{decoder_forward.3} parent=0 // loop_pre_header
    _
  $region3: #{decoder_forward.3} parent=0 // loop_header
    %s33 = sphi 0, %s37
    %p34 = scmp.ge.s32.totalorder %s33, 4
    %s40 = sphi 0, %s52
    %s41 = sphi 0, %s48
    %s42 = sphi 0, %s40
    %s43 = sphi 0, %s41
    %s44 = sphi 0, %s42
    %s45 = sphi 0, %s43
    %s57 = sphi 0, %s59
    %s60 = sphi 0, %s57
    %s61 = sphi 0, %s60
    %s77 = sphi 0, %s61
    %s83 = sphi 0, %s85
    %s86 = sphi 0, %s83
    %s87 = sphi 0, %s86
    %s103 = sphi 0, %s87
    %s109 = sphi 0, %s111
    %s112 = sphi 0, %s109
    %s113 = sphi 0, %s112
    %s129 = sphi 0, %s113
    %s135 = sphi 0, %s137
    %s138 = sphi 0, %s135
    %s139 = sphi 0, %s138
    %s155 = sphi 0, %s139
    %s161 = sphi 0, %s163
    %s164 = sphi 0, %s161
    %s165 = sphi 0, %s164
    %s181 = sphi 0, %s165
    %s185 = sphi 0, %s185
    %s187 = sphi 0, %s185
    %s188 = sphi 0, %s187
    %s202 = sphi 0, %s188
    %s206 = sphi 0, %s206
    %s208 = sphi 0, %s206
    %s209 = sphi 0, %s208
    %s223 = sphi 0, %s209
    %s227 = sphi 0, %s227
    %s229 = sphi 0, %s227
    %s230 = sphi 0, %s229
    %s244 = sphi 0, %s230
    %s248 = sphi 0, %s248
    %s250 = sphi 0, %s248
    %s251 = sphi 0, %s250
    %s265 = sphi 0, %s251
    %s269 = sphi 0, %s269
    %s271 = sphi 0, %s269
    %s272 = sphi 0, %s271
    %s286 = sphi 0, %s272
    %s290 = sphi 0, %s290
    %s292 = sphi 0, %s290
    %s293 = sphi 0, %s292
    %s307 = sphi 0, %s293
    %s311 = sphi 0, %s311
    %s313 = sphi 0, %s311
    %s314 = sphi 0, %s313
    %s328 = sphi 0, %s314
    %s332 = sphi 0, %s332
    %s334 = sphi 0, %s332
    %s335 = sphi 0, %s334
    %s349 = sphi 0, %s335
    %s353 = sphi 0, %s353
    %s355 = sphi 0, %s353
    %s356 = sphi 0, %s355
    %s370 = sphi 0, %s356
    %s374 = sphi 0, %s374
    %s376 = sphi 0, %s374
    %s377 = sphi 0, %s376
    %s391 = sphi 0, %s377
    %s395 = sphi 0, %s395
    %s397 = sphi 0, %s395
    %s398 = sphi 0, %s397
    %s412 = sphi 0, %s398
    %s416 = sphi 0, %s416
    %s418 = sphi 0, %s416
    %s419 = sphi 0, %s418
    %s433 = sphi 0, %s419
    %s437 = sphi 0, %s437
    %s439 = sphi 0, %s437
    %s440 = sphi 0, %s439
    %s454 = sphi 0, %s440
    %s458 = sphi 0, %s458
    %s460 = sphi 0, %s458
    %s461 = sphi 0, %s460
    %s475 = sphi 0, %s461
    %s479 = sphi 0, %s479
    %s481 = sphi 0, %s479
    %s482 = sphi 0, %s481
    %s496 = sphi 0, %s482
    %s500 = sphi 0, %s500
    %s502 = sphi 0, %s500
    %s503 = sphi 0, %s502
    %s517 = sphi 0, %s503
    %s521 = sphi 0, %s521
    %s523 = sphi 0, %s521
    %s524 = sphi 0, %s523
    %s538 = sphi 0, %s524
    %s542 = sphi 0, %s542
    %s544 = sphi 0, %s542
    %s545 = sphi 0, %s544
    %s559 = sphi 0, %s545
    %s563 = sphi 0, %s563
    %s565 = sphi 0, %s563
    %s566 = sphi 0, %s565
    %s580 = sphi 0, %s566
    %s584 = sphi 0, %s584
    %s586 = sphi 0, %s584
    %s587 = sphi 0, %s586
    %s601 = sphi 0, %s587
    %s605 = sphi 0, %s605
    %s607 = sphi 0, %s605
    %s608 = sphi 0, %s607
    %s622 = sphi 0, %s608
    %s626 = sphi 0, %s626
    %s628 = sphi 0, %s626
    %s629 = sphi 0, %s628
    %s643 = sphi 0, %s629
    %s651 = sphi 0, %s653
    %s654 = sphi 0, %s651
    %s655 = sphi 0, %s654
    %s671 = sphi 0, %s655
  $region4: #{decoder_forward.3} parent=0 // loop_header_branch
    %36 = sbr.rel (%p34) target = $region8
  $region5: #{decoder_forward.3} parent=0 // loop_body
    %s38 = ssub.s32 %s33, 1
    %s39 = ssub.s32 %s33, 2
    %s46 = sadd.s32 1, %s41
    %p47 = scmp.ge.s32.totalorder %s46, 1
    %s48 = scalar_select %p47, 0, %s46
    %s49 = sadd.s32 1, %s40
    %s50 = scalar_select %p47, %s49, %s40
    %p51 = scmp.ge.s32.totalorder %s50, 2
    %s52 = scalar_select %p51, 0, %s50
    %s53 = ssub.s32 %s40, %s52
    %s54 = ssub.s32 %s41, %s48
    %s55 = sor.u32 %s53, %s54
    %p56 = scmp.eq.s32.totalorder %s55, 0
    %s58 = sadd.s32 %s57, 1
    %s59 = scalar_select %p56, %s57, %s58
    %p62 = pneg %p56
    %p63 = scmp.eq.s32.totalorder %s33, 1
    %p64 = por %p62, %p63
    %p65 = scmp.ne.s32.totalorder %s57, %s60
    %p66 = scmp.eq.s32.totalorder %s33, 0
    %p67 = por %p65, %p66
    %p68 = scmp.ne.s32.totalorder %s57, %s60
    %p69 = scmp.eq.s32.totalorder %s38, 1
    %p70 = por %p68, %p69
    %p71 = scmp.ne.s32.totalorder %s60, %s61
    %p72 = scmp.eq.s32.totalorder %s38, 0
    %p73 = por %p71, %p72
    %p74 = scmp.ne.s32.totalorder %s60, %s61
    %p75 = scmp.eq.s32.totalorder %s39, 1
    %p76 = por %p74, %p75
    %p78 = scmp.ne.s32.totalorder %s61, %s77
    %p79 = scmp.eq.s32.totalorder %s39, 0
    %p80 = por %p78, %p79
    %s81 = ssub.s32 %s40, %s52
    %p82 = scmp.eq.s32.totalorder %s81, 0
    %s84 = sadd.s32 %s83, 1
    %s85 = scalar_select %p82, %s83, %s84
    %p88 = pneg %p82
    %p89 = scmp.eq.s32.totalorder %s33, 1
    %p90 = por %p88, %p89
    %p91 = scmp.ne.s32.totalorder %s83, %s86
    %p92 = scmp.eq.s32.totalorder %s33, 0
    %p93 = por %p91, %p92
    %p94 = scmp.ne.s32.totalorder %s83, %s86
    %p95 = scmp.eq.s32.totalorder %s38, 1
    %p96 = por %p94, %p95
    %p97 = scmp.ne.s32.totalorder %s86, %s87
    %p98 = scmp.eq.s32.totalorder %s38, 0
    %p99 = por %p97, %p98
    %p100 = scmp.ne.s32.totalorder %s86, %s87
    %p101 = scmp.eq.s32.totalorder %s39, 1
    %p102 = por %p100, %p101
    %p104 = scmp.ne.s32.totalorder %s87, %s103
    %p105 = scmp.eq.s32.totalorder %s39, 0
    %p106 = por %p104, %p105
    %s107 = ssub.s32 %s40, %s52
    %p108 = scmp.eq.s32.totalorder %s107, 0
    %s110 = sadd.s32 %s109, 1
    %s111 = scalar_select %p108, %s109, %s110
    %p114 = pneg %p108
    %p115 = scmp.eq.s32.totalorder %s33, 1
    %p116 = por %p114, %p115
    %p117 = scmp.ne.s32.totalorder %s109, %s112
    %p118 = scmp.eq.s32.totalorder %s33, 0
    %p119 = por %p117, %p118
    %p120 = scmp.ne.s32.totalorder %s109, %s112
    %p121 = scmp.eq.s32.totalorder %s38, 1
    %p122 = por %p120, %p121
    %p123 = scmp.ne.s32.totalorder %s112, %s113
    %p124 = scmp.eq.s32.totalorder %s38, 0
    %p125 = por %p123, %p124
    %p126 = scmp.ne.s32.totalorder %s112, %s113
    %p127 = scmp.eq.s32.totalorder %s39, 1
    %p128 = por %p126, %p127
    %p130 = scmp.ne.s32.totalorder %s113, %s129
    %p131 = scmp.eq.s32.totalorder %s39, 0
    %p132 = por %p130, %p131
    %s133 = ssub.s32 %s40, %s52
    %p134 = scmp.eq.s32.totalorder %s133, 0
    %s136 = sadd.s32 %s135, 1
    %s137 = scalar_select %p134, %s135, %s136
    %p140 = pneg %p134
    %p141 = scmp.eq.s32.totalorder %s33, 1
    %p142 = por %p140, %p141
    %p143 = scmp.ne.s32.totalorder %s135, %s138
    %p144 = scmp.eq.s32.totalorder %s33, 0
    %p145 = por %p143, %p144
    %p146 = scmp.ne.s32.totalorder %s135, %s138
    %p147 = scmp.eq.s32.totalorder %s38, 1
    %p148 = por %p146, %p147
    %p149 = scmp.ne.s32.totalorder %s138, %s139
    %p150 = scmp.eq.s32.totalorder %s38, 0
    %p151 = por %p149, %p150
    %p152 = scmp.ne.s32.totalorder %s138, %s139
    %p153 = scmp.eq.s32.totalorder %s39, 1
    %p154 = por %p152, %p153
    %p156 = scmp.ne.s32.totalorder %s139, %s155
    %p157 = scmp.eq.s32.totalorder %s39, 0
    %p158 = por %p156, %p157
    %s159 = ssub.s32 %s40, %s52
    %p160 = scmp.eq.s32.totalorder %s159, 0
    %s162 = sadd.s32 %s161, 1
    %s163 = scalar_select %p160, %s161, %s162
    %p166 = pneg %p160
    %p167 = scmp.eq.s32.totalorder %s33, 1
    %p168 = por %p166, %p167
    %p169 = scmp.ne.s32.totalorder %s161, %s164
    %p170 = scmp.eq.s32.totalorder %s33, 0
    %p171 = por %p169, %p170
    %p172 = scmp.ne.s32.totalorder %s161, %s164
    %p173 = scmp.eq.s32.totalorder %s38, 1
    %p174 = por %p172, %p173
    %p175 = scmp.ne.s32.totalorder %s164, %s165
    %p176 = scmp.eq.s32.totalorder %s38, 0
    %p177 = por %p175, %p176
    %p178 = scmp.ne.s32.totalorder %s164, %s165
    %p179 = scmp.eq.s32.totalorder %s39, 1
    %p180 = por %p178, %p179
    %p182 = scmp.ne.s32.totalorder %s165, %s181
    %p183 = scmp.eq.s32.totalorder %s39, 0
    %p184 = por %p182, %p183
    %s186 = sadd.s32 %s185, 1
    %p189 = scmp.eq.s32.totalorder %s33, 1
    %p190 = scmp.ne.s32.totalorder %s185, %s187
    %p191 = scmp.eq.s32.totalorder %s33, 0
    %p192 = por %p190, %p191
    %p193 = scmp.ne.s32.totalorder %s185, %s187
    %p194 = scmp.eq.s32.totalorder %s38, 1
    %p195 = por %p193, %p194
    %p196 = scmp.ne.s32.totalorder %s187, %s188
    %p197 = scmp.eq.s32.totalorder %s38, 0
    %p198 = por %p196, %p197
    %p199 = scmp.ne.s32.totalorder %s187, %s188
    %p200 = scmp.eq.s32.totalorder %s39, 1
    %p201 = por %p199, %p200
    %p203 = scmp.ne.s32.totalorder %s188, %s202
    %p204 = scmp.eq.s32.totalorder %s39, 0
    %p205 = por %p203, %p204
    %s207 = sadd.s32 %s206, 1
    %p210 = scmp.eq.s32.totalorder %s33, 1
    %p211 = scmp.ne.s32.totalorder %s206, %s208
    %p212 = scmp.eq.s32.totalorder %s33, 0
    %p213 = por %p211, %p212
    %p214 = scmp.ne.s32.totalorder %s206, %s208
    %p215 = scmp.eq.s32.totalorder %s38, 1
    %p216 = por %p214, %p215
    %p217 = scmp.ne.s32.totalorder %s208, %s209
    %p218 = scmp.eq.s32.totalorder %s38, 0
    %p219 = por %p217, %p218
    %p220 = scmp.ne.s32.totalorder %s208, %s209
    %p221 = scmp.eq.s32.totalorder %s39, 1
    %p222 = por %p220, %p221
    %p224 = scmp.ne.s32.totalorder %s209, %s223
    %p225 = scmp.eq.s32.totalorder %s39, 0
    %p226 = por %p224, %p225
    %s228 = sadd.s32 %s227, 1
    %p231 = scmp.eq.s32.totalorder %s33, 1
    %p232 = scmp.ne.s32.totalorder %s227, %s229
    %p233 = scmp.eq.s32.totalorder %s33, 0
    %p234 = por %p232, %p233
    %p235 = scmp.ne.s32.totalorder %s227, %s229
    %p236 = scmp.eq.s32.totalorder %s38, 1
    %p237 = por %p235, %p236
    %p238 = scmp.ne.s32.totalorder %s229, %s230
    %p239 = scmp.eq.s32.totalorder %s38, 0
    %p240 = por %p238, %p239
    %p241 = scmp.ne.s32.totalorder %s229, %s230
    %p242 = scmp.eq.s32.totalorder %s39, 1
    %p243 = por %p241, %p242
    %p245 = scmp.ne.s32.totalorder %s230, %s244
    %p246 = scmp.eq.s32.totalorder %s39, 0
    %p247 = por %p245, %p246
    %s249 = sadd.s32 %s248, 1
    %p252 = scmp.eq.s32.totalorder %s33, 1
    %p253 = scmp.ne.s32.totalorder %s248, %s250
    %p254 = scmp.eq.s32.totalorder %s33, 0
    %p255 = por %p253, %p254
    %p256 = scmp.ne.s32.totalorder %s248, %s250
    %p257 = scmp.eq.s32.totalorder %s38, 1
    %p258 = por %p256, %p257
    %p259 = scmp.ne.s32.totalorder %s250, %s251
    %p260 = scmp.eq.s32.totalorder %s38, 0
    %p261 = por %p259, %p260
    %p262 = scmp.ne.s32.totalorder %s250, %s251
    %p263 = scmp.eq.s32.totalorder %s39, 1
    %p264 = por %p262, %p263
    %p266 = scmp.ne.s32.totalorder %s251, %s265
    %p267 = scmp.eq.s32.totalorder %s39, 0
    %p268 = por %p266, %p267
    %s270 = sadd.s32 %s269, 1
    %p273 = scmp.eq.s32.totalorder %s33, 1
    %p274 = scmp.ne.s32.totalorder %s269, %s271
    %p275 = scmp.eq.s32.totalorder %s33, 0
    %p276 = por %p274, %p275
    %p277 = scmp.ne.s32.totalorder %s269, %s271
    %p278 = scmp.eq.s32.totalorder %s38, 1
    %p279 = por %p277, %p278
    %p280 = scmp.ne.s32.totalorder %s271, %s272
    %p281 = scmp.eq.s32.totalorder %s38, 0
    %p282 = por %p280, %p281
    %p283 = scmp.ne.s32.totalorder %s271, %s272
    %p284 = scmp.eq.s32.totalorder %s39, 1
    %p285 = por %p283, %p284
    %p287 = scmp.ne.s32.totalorder %s272, %s286
    %p288 = scmp.eq.s32.totalorder %s39, 0
    %p289 = por %p287, %p288
    %s291 = sadd.s32 %s290, 1
    %p294 = scmp.eq.s32.totalorder %s33, 1
    %p295 = scmp.ne.s32.totalorder %s290, %s292
    %p296 = scmp.eq.s32.totalorder %s33, 0
    %p297 = por %p295, %p296
    %p298 = scmp.ne.s32.totalorder %s290, %s292
    %p299 = scmp.eq.s32.totalorder %s38, 1
    %p300 = por %p298, %p299
    %p301 = scmp.ne.s32.totalorder %s292, %s293
    %p302 = scmp.eq.s32.totalorder %s38, 0
    %p303 = por %p301, %p302
    %p304 = scmp.ne.s32.totalorder %s292, %s293
    %p305 = scmp.eq.s32.totalorder %s39, 1
    %p306 = por %p304, %p305
    %p308 = scmp.ne.s32.totalorder %s293, %s307
    %p309 = scmp.eq.s32.totalorder %s39, 0
    %p310 = por %p308, %p309
    %s312 = sadd.s32 %s311, 1
    %p315 = scmp.eq.s32.totalorder %s33, 1
    %p316 = scmp.ne.s32.totalorder %s311, %s313
    %p317 = scmp.eq.s32.totalorder %s33, 0
    %p318 = por %p316, %p317
    %p319 = scmp.ne.s32.totalorder %s311, %s313
    %p320 = scmp.eq.s32.totalorder %s38, 1
    %p321 = por %p319, %p320
    %p322 = scmp.ne.s32.totalorder %s313, %s314
    %p323 = scmp.eq.s32.totalorder %s38, 0
    %p324 = por %p322, %p323
    %p325 = scmp.ne.s32.totalorder %s313, %s314
    %p326 = scmp.eq.s32.totalorder %s39, 1
    %p327 = por %p325, %p326
    %p329 = scmp.ne.s32.totalorder %s314, %s328
    %p330 = scmp.eq.s32.totalorder %s39, 0
    %p331 = por %p329, %p330
    %s333 = sadd.s32 %s332, 1
    %p336 = scmp.eq.s32.totalorder %s33, 1
    %p337 = scmp.ne.s32.totalorder %s332, %s334
    %p338 = scmp.eq.s32.totalorder %s33, 0
    %p339 = por %p337, %p338
    %p340 = scmp.ne.s32.totalorder %s332, %s334
    %p341 = scmp.eq.s32.totalorder %s38, 1
    %p342 = por %p340, %p341
    %p343 = scmp.ne.s32.totalorder %s334, %s335
    %p344 = scmp.eq.s32.totalorder %s38, 0
    %p345 = por %p343, %p344
    %p346 = scmp.ne.s32.totalorder %s334, %s335
    %p347 = scmp.eq.s32.totalorder %s39, 1
    %p348 = por %p346, %p347
    %p350 = scmp.ne.s32.totalorder %s335, %s349
    %p351 = scmp.eq.s32.totalorder %s39, 0
    %p352 = por %p350, %p351
    %s354 = sadd.s32 %s353, 1
    %p357 = scmp.eq.s32.totalorder %s33, 1
    %p358 = scmp.ne.s32.totalorder %s353, %s355
    %p359 = scmp.eq.s32.totalorder %s33, 0
    %p360 = por %p358, %p359
    %p361 = scmp.ne.s32.totalorder %s353, %s355
    %p362 = scmp.eq.s32.totalorder %s38, 1
    %p363 = por %p361, %p362
    %p364 = scmp.ne.s32.totalorder %s355, %s356
    %p365 = scmp.eq.s32.totalorder %s38, 0
    %p366 = por %p364, %p365
    %p367 = scmp.ne.s32.totalorder %s355, %s356
    %p368 = scmp.eq.s32.totalorder %s39, 1
    %p369 = por %p367, %p368
    %p371 = scmp.ne.s32.totalorder %s356, %s370
    %p372 = scmp.eq.s32.totalorder %s39, 0
    %p373 = por %p371, %p372
    %s375 = sadd.s32 %s374, 1
    %p378 = scmp.eq.s32.totalorder %s33, 1
    %p379 = scmp.ne.s32.totalorder %s374, %s376
    %p380 = scmp.eq.s32.totalorder %s33, 0
    %p381 = por %p379, %p380
    %p382 = scmp.ne.s32.totalorder %s374, %s376
    %p383 = scmp.eq.s32.totalorder %s38, 1
    %p384 = por %p382, %p383
    %p385 = scmp.ne.s32.totalorder %s376, %s377
    %p386 = scmp.eq.s32.totalorder %s38, 0
    %p387 = por %p385, %p386
    %p388 = scmp.ne.s32.totalorder %s376, %s377
    %p389 = scmp.eq.s32.totalorder %s39, 1
    %p390 = por %p388, %p389
    %p392 = scmp.ne.s32.totalorder %s377, %s391
    %p393 = scmp.eq.s32.totalorder %s39, 0
    %p394 = por %p392, %p393
    %s396 = sadd.s32 %s395, 1
    %p399 = scmp.eq.s32.totalorder %s33, 1
    %p400 = scmp.ne.s32.totalorder %s395, %s397
    %p401 = scmp.eq.s32.totalorder %s33, 0
    %p402 = por %p400, %p401
    %p403 = scmp.ne.s32.totalorder %s395, %s397
    %p404 = scmp.eq.s32.totalorder %s38, 1
    %p405 = por %p403, %p404
    %p406 = scmp.ne.s32.totalorder %s397, %s398
    %p407 = scmp.eq.s32.totalorder %s38, 0
    %p408 = por %p406, %p407
    %p409 = scmp.ne.s32.totalorder %s397, %s398
    %p410 = scmp.eq.s32.totalorder %s39, 1
    %p411 = por %p409, %p410
    %p413 = scmp.ne.s32.totalorder %s398, %s412
    %p414 = scmp.eq.s32.totalorder %s39, 0
    %p415 = por %p413, %p414
    %s417 = sadd.s32 %s416, 1
    %p420 = scmp.eq.s32.totalorder %s33, 1
    %p421 = scmp.ne.s32.totalorder %s416, %s418
    %p422 = scmp.eq.s32.totalorder %s33, 0
    %p423 = por %p421, %p422
    %p424 = scmp.ne.s32.totalorder %s416, %s418
    %p425 = scmp.eq.s32.totalorder %s38, 1
    %p426 = por %p424, %p425
    %p427 = scmp.ne.s32.totalorder %s418, %s419
    %p428 = scmp.eq.s32.totalorder %s38, 0
    %p429 = por %p427, %p428
    %p430 = scmp.ne.s32.totalorder %s418, %s419
    %p431 = scmp.eq.s32.totalorder %s39, 1
    %p432 = por %p430, %p431
    %p434 = scmp.ne.s32.totalorder %s419, %s433
    %p435 = scmp.eq.s32.totalorder %s39, 0
    %p436 = por %p434, %p435
    %s438 = sadd.s32 %s437, 1
    %p441 = scmp.eq.s32.totalorder %s33, 1
    %p442 = scmp.ne.s32.totalorder %s437, %s439
    %p443 = scmp.eq.s32.totalorder %s33, 0
    %p444 = por %p442, %p443
    %p445 = scmp.ne.s32.totalorder %s437, %s439
    %p446 = scmp.eq.s32.totalorder %s38, 1
    %p447 = por %p445, %p446
    %p448 = scmp.ne.s32.totalorder %s439, %s440
    %p449 = scmp.eq.s32.totalorder %s38, 0
    %p450 = por %p448, %p449
    %p451 = scmp.ne.s32.totalorder %s439, %s440
    %p452 = scmp.eq.s32.totalorder %s39, 1
    %p453 = por %p451, %p452
    %p455 = scmp.ne.s32.totalorder %s440, %s454
    %p456 = scmp.eq.s32.totalorder %s39, 0
    %p457 = por %p455, %p456
    %s459 = sadd.s32 %s458, 1
    %p462 = scmp.eq.s32.totalorder %s33, 1
    %p463 = scmp.ne.s32.totalorder %s458, %s460
    %p464 = scmp.eq.s32.totalorder %s33, 0
    %p465 = por %p463, %p464
    %p466 = scmp.ne.s32.totalorder %s458, %s460
    %p467 = scmp.eq.s32.totalorder %s38, 1
    %p468 = por %p466, %p467
    %p469 = scmp.ne.s32.totalorder %s460, %s461
    %p470 = scmp.eq.s32.totalorder %s38, 0
    %p471 = por %p469, %p470
    %p472 = scmp.ne.s32.totalorder %s460, %s461
    %p473 = scmp.eq.s32.totalorder %s39, 1
    %p474 = por %p472, %p473
    %p476 = scmp.ne.s32.totalorder %s461, %s475
    %p477 = scmp.eq.s32.totalorder %s39, 0
    %p478 = por %p476, %p477
    %s480 = sadd.s32 %s479, 1
    %p483 = scmp.eq.s32.totalorder %s33, 1
    %p484 = scmp.ne.s32.totalorder %s479, %s481
    %p485 = scmp.eq.s32.totalorder %s33, 0
    %p486 = por %p484, %p485
    %p487 = scmp.ne.s32.totalorder %s479, %s481
    %p488 = scmp.eq.s32.totalorder %s38, 1
    %p489 = por %p487, %p488
    %p490 = scmp.ne.s32.totalorder %s481, %s482
    %p491 = scmp.eq.s32.totalorder %s38, 0
    %p492 = por %p490, %p491
    %p493 = scmp.ne.s32.totalorder %s481, %s482
    %p494 = scmp.eq.s32.totalorder %s39, 1
    %p495 = por %p493, %p494
    %p497 = scmp.ne.s32.totalorder %s482, %s496
    %p498 = scmp.eq.s32.totalorder %s39, 0
    %p499 = por %p497, %p498
    %s501 = sadd.s32 %s500, 1
    %p504 = scmp.eq.s32.totalorder %s33, 1
    %p505 = scmp.ne.s32.totalorder %s500, %s502
    %p506 = scmp.eq.s32.totalorder %s33, 0
    %p507 = por %p505, %p506
    %p508 = scmp.ne.s32.totalorder %s500, %s502
    %p509 = scmp.eq.s32.totalorder %s38, 1
    %p510 = por %p508, %p509
    %p511 = scmp.ne.s32.totalorder %s502, %s503
    %p512 = scmp.eq.s32.totalorder %s38, 0
    %p513 = por %p511, %p512
    %p514 = scmp.ne.s32.totalorder %s502, %s503
    %p515 = scmp.eq.s32.totalorder %s39, 1
    %p516 = por %p514, %p515
    %p518 = scmp.ne.s32.totalorder %s503, %s517
    %p519 = scmp.eq.s32.totalorder %s39, 0
    %p520 = por %p518, %p519
    %s522 = sadd.s32 %s521, 1
    %p525 = scmp.eq.s32.totalorder %s33, 1
    %p526 = scmp.ne.s32.totalorder %s521, %s523
    %p527 = scmp.eq.s32.totalorder %s33, 0
    %p528 = por %p526, %p527
    %p529 = scmp.ne.s32.totalorder %s521, %s523
    %p530 = scmp.eq.s32.totalorder %s38, 1
    %p531 = por %p529, %p530
    %p532 = scmp.ne.s32.totalorder %s523, %s524
    %p533 = scmp.eq.s32.totalorder %s38, 0
    %p534 = por %p532, %p533
    %p535 = scmp.ne.s32.totalorder %s523, %s524
    %p536 = scmp.eq.s32.totalorder %s39, 1
    %p537 = por %p535, %p536
    %p539 = scmp.ne.s32.totalorder %s524, %s538
    %p540 = scmp.eq.s32.totalorder %s39, 0
    %p541 = por %p539, %p540
    %s543 = sadd.s32 %s542, 1
    %p546 = scmp.eq.s32.totalorder %s33, 1
    %p547 = scmp.ne.s32.totalorder %s542, %s544
    %p548 = scmp.eq.s32.totalorder %s33, 0
    %p549 = por %p547, %p548
    %p550 = scmp.ne.s32.totalorder %s542, %s544
    %p551 = scmp.eq.s32.totalorder %s38, 1
    %p552 = por %p550, %p551
    %p553 = scmp.ne.s32.totalorder %s544, %s545
    %p554 = scmp.eq.s32.totalorder %s38, 0
    %p555 = por %p553, %p554
    %p556 = scmp.ne.s32.totalorder %s544, %s545
    %p557 = scmp.eq.s32.totalorder %s39, 1
    %p558 = por %p556, %p557
    %p560 = scmp.ne.s32.totalorder %s545, %s559
    %p561 = scmp.eq.s32.totalorder %s39, 0
    %p562 = por %p560, %p561
    %s564 = sadd.s32 %s563, 1
    %p567 = scmp.eq.s32.totalorder %s33, 1
    %p568 = scmp.ne.s32.totalorder %s563, %s565
    %p569 = scmp.eq.s32.totalorder %s33, 0
    %p570 = por %p568, %p569
    %p571 = scmp.ne.s32.totalorder %s563, %s565
    %p572 = scmp.eq.s32.totalorder %s38, 1
    %p573 = por %p571, %p572
    %p574 = scmp.ne.s32.totalorder %s565, %s566
    %p575 = scmp.eq.s32.totalorder %s38, 0
    %p576 = por %p574, %p575
    %p577 = scmp.ne.s32.totalorder %s565, %s566
    %p578 = scmp.eq.s32.totalorder %s39, 1
    %p579 = por %p577, %p578
    %p581 = scmp.ne.s32.totalorder %s566, %s580
    %p582 = scmp.eq.s32.totalorder %s39, 0
    %p583 = por %p581, %p582
    %s585 = sadd.s32 %s584, 1
    %p588 = scmp.eq.s32.totalorder %s33, 1
    %p589 = scmp.ne.s32.totalorder %s584, %s586
    %p590 = scmp.eq.s32.totalorder %s33, 0
    %p591 = por %p589, %p590
    %p592 = scmp.ne.s32.totalorder %s584, %s586
    %p593 = scmp.eq.s32.totalorder %s38, 1
    %p594 = por %p592, %p593
    %p595 = scmp.ne.s32.totalorder %s586, %s587
    %p596 = scmp.eq.s32.totalorder %s38, 0
    %p597 = por %p595, %p596
    %p598 = scmp.ne.s32.totalorder %s586, %s587
    %p599 = scmp.eq.s32.totalorder %s39, 1
    %p600 = por %p598, %p599
    %p602 = scmp.ne.s32.totalorder %s587, %s601
    %p603 = scmp.eq.s32.totalorder %s39, 0
    %p604 = por %p602, %p603
    %s606 = sadd.s32 %s605, 1
    %p609 = scmp.eq.s32.totalorder %s33, 1
    %p610 = scmp.ne.s32.totalorder %s605, %s607
    %p611 = scmp.eq.s32.totalorder %s33, 0
    %p612 = por %p610, %p611
    %p613 = scmp.ne.s32.totalorder %s605, %s607
    %p614 = scmp.eq.s32.totalorder %s38, 1
    %p615 = por %p613, %p614
    %p616 = scmp.ne.s32.totalorder %s607, %s608
    %p617 = scmp.eq.s32.totalorder %s38, 0
    %p618 = por %p616, %p617
    %p619 = scmp.ne.s32.totalorder %s607, %s608
    %p620 = scmp.eq.s32.totalorder %s39, 1
    %p621 = por %p619, %p620
    %p623 = scmp.ne.s32.totalorder %s608, %s622
    %p624 = scmp.eq.s32.totalorder %s39, 0
    %p625 = por %p623, %p624
    %s627 = sadd.s32 %s626, 1
    %p630 = scmp.eq.s32.totalorder %s33, 1
    %p631 = scmp.ne.s32.totalorder %s626, %s628
    %p632 = scmp.eq.s32.totalorder %s33, 0
    %p633 = por %p631, %p632
    %p634 = scmp.ne.s32.totalorder %s626, %s628
    %p635 = scmp.eq.s32.totalorder %s38, 1
    %p636 = por %p634, %p635
    %p637 = scmp.ne.s32.totalorder %s628, %s629
    %p638 = scmp.eq.s32.totalorder %s38, 0
    %p639 = por %p637, %p638
    %p640 = scmp.ne.s32.totalorder %s628, %s629
    %p641 = scmp.eq.s32.totalorder %s39, 1
    %p642 = por %p640, %p641
    %p644 = scmp.ne.s32.totalorder %s629, %s643
    %p645 = scmp.eq.s32.totalorder %s39, 0
    %p646 = por %p644, %p645
    %s647 = ssub.s32 %s40, %s52
    %s648 = ssub.s32 %s41, %s48
    %s649 = sor.u32 %s647, %s648
    %p650 = scmp.eq.s32.totalorder %s649, 0
    %s652 = sadd.s32 %s651, 1
    %s653 = scalar_select %p650, %s651, %s652
    %p656 = pneg %p650
    %p657 = scmp.eq.s32.totalorder %s33, 1
    %p658 = por %p656, %p657
    %p659 = scmp.ne.s32.totalorder %s651, %s654
    %p660 = scmp.eq.s32.totalorder %s33, 0
    %p661 = por %p659, %p660
    %p662 = scmp.ne.s32.totalorder %s651, %s654
    %p663 = scmp.eq.s32.totalorder %s38, 1
    %p664 = por %p662, %p663
    %p665 = scmp.ne.s32.totalorder %s654, %s655
    %p666 = scmp.eq.s32.totalorder %s38, 0
    %p667 = por %p665, %p666
    %p668 = scmp.ne.s32.totalorder %s654, %s655
    %p669 = scmp.eq.s32.totalorder %s39, 1
    %p670 = por %p668, %p669
    %p672 = scmp.ne.s32.totalorder %s655, %s671
    %p673 = scmp.eq.s32.totalorder %s39, 0
    %p674 = por %p672, %p673
    %p675 = scmp.le.s32.totalorder 1, %s33
    %p676 = scmp.lt.s32.totalorder %s33, 3
    %p677 = pnand %p675, %p676
    %p678 = pneg %p677
    // Predicated region
    $region9: #{decoder_forward.3} parent=5 // pred_check
      _
    $region10: #{decoder_forward.3} parent=5 // pred_check_branch
      %680 = sbr.rel (%p677) target = $region12
    $region11: #{decoder_forward.3} parent=5 // pred_region
      %s681 = ssub.s32 %s33, 1
      // Predicated region
      $region13: #{decoder_forward.3} parent=11 // pred_check
        %p682 = pneg %p198
      $region14: #{decoder_forward.3} parent=11 // pred_check_branch
        %684 = sbr.rel (%p682) target = $region16
      $region15: #{decoder_forward.3} parent=11 // pred_region
        _
      $region16: #{decoder_forward.3} parent=11 // pred_fallthru
        _
      // Predicated region
      $region17: #{decoder_forward.3} parent=11 // pred_check
        %p685 = pneg %p219
      $region18: #{decoder_forward.3} parent=11 // pred_check_branch
        %687 = sbr.rel (%p685) target = $region20
      $region19: #{decoder_forward.3} parent=11 // pred_region
        _
      $region20: #{decoder_forward.3} parent=11 // pred_fallthru
        _
      // Predicated region
      $region21: #{decoder_forward.3} parent=11 // pred_check
        %p688 = pneg %p240
      $region22: #{decoder_forward.3} parent=11 // pred_check_branch
        %690 = sbr.rel (%p688) target = $region24
      $region23: #{decoder_forward.3} parent=11 // pred_region
        _
      $region24: #{decoder_forward.3} parent=11 // pred_fallthru
        _
      // Predicated region
      $region25: #{decoder_forward.3} parent=11 // pred_check
        %p691 = pneg %p261
      $region26: #{decoder_forward.3} parent=11 // pred_check_branch
        %693 = sbr.rel (%p691) target = $region28
      $region27: #{decoder_forward.3} parent=11 // pred_region
        _
      $region28: #{decoder_forward.3} parent=11 // pred_fallthru
        _
      // Predicated region
      $region29: #{decoder_forward.3} parent=11 // pred_check
        %p694 = pneg %p282
      $region30: #{decoder_forward.3} parent=11 // pred_check_branch
        %696 = sbr.rel (%p694) target = $region32
      $region31: #{decoder_forward.3} parent=11 // pred_region
        _
      $region32: #{decoder_forward.3} parent=11 // pred_fallthru
        _
      // Predicated region
      $region33: #{decoder_forward.3} parent=11 // pred_check
        %p697 = pneg %p303
      $region34: #{decoder_forward.3} parent=11 // pred_check_branch
        %699 = sbr.rel (%p697) target = $region36
      $region35: #{decoder_forward.3} parent=11 // pred_region
        _
      $region36: #{decoder_forward.3} parent=11 // pred_fallthru
        _
      // Predicated region
      $region37: #{decoder_forward.3} parent=11 // pred_check
        %p700 = pneg %p324
      $region38: #{decoder_forward.3} parent=11 // pred_check_branch
        %702 = sbr.rel (%p700) target = $region40
      $region39: #{decoder_forward.3} parent=11 // pred_region
        _
      $region40: #{decoder_forward.3} parent=11 // pred_fallthru
        _
      // Predicated region
      $region41: #{decoder_forward.3} parent=11 // pred_check
        %p703 = pneg %p345
      $region42: #{decoder_forward.3} parent=11 // pred_check_branch
        %705 = sbr.rel (%p703) target = $region44
      $region43: #{decoder_forward.3} parent=11 // pred_region
        _
      $region44: #{decoder_forward.3} parent=11 // pred_fallthru
        _
      // Predicated region
      $region45: #{decoder_forward.3} parent=11 // pred_check
        %p706 = pneg %p366
      $region46: #{decoder_forward.3} parent=11 // pred_check_branch
        %708 = sbr.rel (%p706) target = $region48
      $region47: #{decoder_forward.3} parent=11 // pred_region
        _
      $region48: #{decoder_forward.3} parent=11 // pred_fallthru
        _
      // Predicated region
      $region49: #{decoder_forward.3} parent=11 // pred_check
        %p709 = pneg %p387
      $region50: #{decoder_forward.3} parent=11 // pred_check_branch
        %711 = sbr.rel (%p709) target = $region52
      $region51: #{decoder_forward.3} parent=11 // pred_region
        _
      $region52: #{decoder_forward.3} parent=11 // pred_fallthru
        _
      // Predicated region
      $region53: #{decoder_forward.3} parent=11 // pred_check
        %p712 = pneg %p408
      $region54: #{decoder_forward.3} parent=11 // pred_check_branch
        %714 = sbr.rel (%p712) target = $region56
      $region55: #{decoder_forward.3} parent=11 // pred_region
        _
      $region56: #{decoder_forward.3} parent=11 // pred_fallthru
        _
      // Predicated region
      $region57: #{decoder_forward.3} parent=11 // pred_check
        %p715 = pneg %p429
      $region58: #{decoder_forward.3} parent=11 // pred_check_branch
        %717 = sbr.rel (%p715) target = $region60
      $region59: #{decoder_forward.3} parent=11 // pred_region
        _
      $region60: #{decoder_forward.3} parent=11 // pred_fallthru
        _
      // Predicated region
      $region61: #{decoder_forward.3} parent=11 // pred_check
        %p718 = pneg %p450
      $region62: #{decoder_forward.3} parent=11 // pred_check_branch
        %720 = sbr.rel (%p718) target = $region64
      $region63: #{decoder_forward.3} parent=11 // pred_region
        _
      $region64: #{decoder_forward.3} parent=11 // pred_fallthru
        _
      // Predicated region
      $region65: #{decoder_forward.3} parent=11 // pred_check
        %p721 = pneg %p471
      $region66: #{decoder_forward.3} parent=11 // pred_check_branch
        %723 = sbr.rel (%p721) target = $region68
      $region67: #{decoder_forward.3} parent=11 // pred_region
        _
      $region68: #{decoder_forward.3} parent=11 // pred_fallthru
        _
      // Predicated region
      $region69: #{decoder_forward.3} parent=11 // pred_check
        %p724 = pneg %p492
      $region70: #{decoder_forward.3} parent=11 // pred_check_branch
        %726 = sbr.rel (%p724) target = $region72
      $region71: #{decoder_forward.3} parent=11 // pred_region
        _
      $region72: #{decoder_forward.3} parent=11 // pred_fallthru
        _
      // Predicated region
      $region73: #{decoder_forward.3} parent=11 // pred_check
        %p727 = pneg %p513
      $region74: #{decoder_forward.3} parent=11 // pred_check_branch
        %729 = sbr.rel (%p727) target = $region76
      $region75: #{decoder_forward.3} parent=11 // pred_region
        _
      $region76: #{decoder_forward.3} parent=11 // pred_fallthru
        _
      // Predicated region
      $region77: #{decoder_forward.3} parent=11 // pred_check
        %p730 = pneg %p534
      $region78: #{decoder_forward.3} parent=11 // pred_check_branch
        %732 = sbr.rel (%p730) target = $region80
      $region79: #{decoder_forward.3} parent=11 // pred_region
        _
      $region80: #{decoder_forward.3} parent=11 // pred_fallthru
        _
      // Predicated region
      $region81: #{decoder_forward.3} parent=11 // pred_check
        %p733 = pneg %p555
      $region82: #{decoder_forward.3} parent=11 // pred_check_branch
        %735 = sbr.rel (%p733) target = $region84
      $region83: #{decoder_forward.3} parent=11 // pred_region
        _
      $region84: #{decoder_forward.3} parent=11 // pred_fallthru
        _
      // Predicated region
      $region85: #{decoder_forward.3} parent=11 // pred_check
        %p736 = pneg %p576
      $region86: #{decoder_forward.3} parent=11 // pred_check_branch
        %738 = sbr.rel (%p736) target = $region88
      $region87: #{decoder_forward.3} parent=11 // pred_region
        _
      $region88: #{decoder_forward.3} parent=11 // pred_fallthru
        _
      // Predicated region
      $region89: #{decoder_forward.3} parent=11 // pred_check
        %p739 = pneg %p597
      $region90: #{decoder_forward.3} parent=11 // pred_check_branch
        %741 = sbr.rel (%p739) target = $region92
      $region91: #{decoder_forward.3} parent=11 // pred_region
        _
      $region92: #{decoder_forward.3} parent=11 // pred_fallthru
        _
      // Predicated region
      $region93: #{decoder_forward.3} parent=11 // pred_check
        %p742 = pneg %p618
      $region94: #{decoder_forward.3} parent=11 // pred_check_branch
        %744 = sbr.rel (%p742) target = $region96
      $region95: #{decoder_forward.3} parent=11 // pred_region
        _
      $region96: #{decoder_forward.3} parent=11 // pred_fallthru
        _
      // Predicated region
      $region97: #{decoder_forward.3} parent=11 // pred_check
        %p745 = pneg %p639
      $region98: #{decoder_forward.3} parent=11 // pred_check_branch
        %747 = sbr.rel (%p745) target = $region100
      $region99: #{decoder_forward.3} parent=11 // pred_region
        _
      $region100: #{decoder_forward.3} parent=11 // pred_fallthru
        _
    $region12: #{decoder_forward.3} parent=5 // pred_fallthru
      _
    %p748 = scmp.lt.s32.totalorder %s33, 2
    // Predicated region
    $region101: #{decoder_forward.3} parent=5 // pred_check
      %p749 = pneg %p748
    $region102: #{decoder_forward.3} parent=5 // pred_check_branch
      %751 = sbr.rel (%p749) target = $region104
    $region103: #{decoder_forward.3} parent=5 // pred_region
      // Predicated region
      $region105: #{decoder_forward.3} parent=103 // pred_check
        %p752 = pneg %p67
      $region106: #{decoder_forward.3} parent=103 // pred_check_branch
        %754 = sbr.rel (%p752) target = $region108
      $region107: #{decoder_forward.3} parent=103 // pred_region
        %p755 = scmp.lt.s32.totalorder %s40, 1
        %s756 = scalar_select %p755, %s40, 1
        %p757 = scmp.lt.s32.totalorder %s41, 0
        %s758 = scalar_select %p757, %s41, 0
        %s759 = sadd.s32 %s758, %s756
        %s760 = smul.addr %s759, 8
        %s761 = scalar_lea.vmem %s0, %s760
      $region108: #{decoder_forward.3} parent=103 // pred_fallthru
        _
      // Predicated region
      $region109: #{decoder_forward.3} parent=103 // pred_check
        %p762 = pneg %p93
      $region110: #{decoder_forward.3} parent=103 // pred_check_branch
        %764 = sbr.rel (%p762) target = $region112
      $region111: #{decoder_forward.3} parent=103 // pred_region
        %p765 = scmp.lt.s32.totalorder %s40, 1
        %s766 = scalar_select %p765, %s40, 1
        %s767 = smul.addr %s766, 8
        %s768 = scalar_lea.vmem %s1, %s767
      $region112: #{decoder_forward.3} parent=103 // pred_fallthru
        _
      // Predicated region
      $region113: #{decoder_forward.3} parent=103 // pred_check
        %p769 = pneg %p119
      $region114: #{decoder_forward.3} parent=103 // pred_check_branch
        %771 = sbr.rel (%p769) target = $region116
      $region115: #{decoder_forward.3} parent=103 // pred_region
        %p772 = scmp.lt.s32.totalorder %s40, 1
        %s773 = scalar_select %p772, %s40, 1
        %s774 = smul.addr %s773, 2
        %s775 = smul.addr %s774, 8
        %s776 = scalar_lea.vmem %s2, %s775
      $region116: #{decoder_forward.3} parent=103 // pred_fallthru
        _
      // Predicated region
      $region117: #{decoder_forward.3} parent=103 // pred_check
        %p777 = pneg %p145
      $region118: #{decoder_forward.3} parent=103 // pred_check_branch
        %779 = sbr.rel (%p777) target = $region120
      $region119: #{decoder_forward.3} parent=103 // pred_region
        %p780 = scmp.lt.s32.totalorder %s40, 1
        %s781 = scalar_select %p780, %s40, 1
        %s782 = scalar_lea.vmem %s3, %s781
      $region120: #{decoder_forward.3} parent=103 // pred_fallthru
        _
      // Predicated region
      $region121: #{decoder_forward.3} parent=103 // pred_check
        %p783 = pneg %p171
      $region122: #{decoder_forward.3} parent=103 // pred_check_branch
        %785 = sbr.rel (%p783) target = $region124
      $region123: #{decoder_forward.3} parent=103 // pred_region
        %p786 = scmp.lt.s32.totalorder %s40, 1
        %s787 = scalar_select %p786, %s40, 1
        %s788 = scalar_lea.vmem %s4, %s787
      $region124: #{decoder_forward.3} parent=103 // pred_fallthru
        _
    $region104: #{decoder_forward.3} parent=5 // pred_fallthru
      _
    %p789 = scmp.le.s32.totalorder 1, %s33
    %p790 = scmp.lt.s32.totalorder %s33, 3
    %p791 = pnand %p789, %p790
    %p792 = pneg %p791
    // Predicated region
    $region125: #{decoder_forward.3} parent=5 // pred_check
      _
    $region126: #{decoder_forward.3} parent=5 // pred_check_branch
      %794 = sbr.rel (%p791) target = $region128
    $region127: #{decoder_forward.3} parent=5 // pred_region
      %s795 = ssub.s32 %s33, 1
      %p796 = scmp.lt.s32.totalorder %s42, 1
      %s797 = scalar_select %p796, %s42, 1
      %p798 = scmp.lt.s32.totalorder %s43, 0
      %s799 = scalar_select %p798, %s43, 0
      %s800 = sadd.s32 %s799, %s797
      %s801 = smul.addr %s800, 8
      %s802 = scalar_lea.vmem %s0, %s801
      %p803 = pneg %p73
      %p804 = pneg %p70
      %p805 = scmp.lt.s32.totalorder %s42, 1
      %s806 = scalar_select %p805, %s42, 1
      %s807 = smul.addr %s806, 8
      %s808 = scalar_lea.vmem %s1, %s807
      %p809 = pneg %p99
      %p810 = pneg %p96
      %p811 = scmp.lt.s32.totalorder %s42, 1
      %s812 = scalar_select %p811, %s42, 1
      %s813 = smul.addr %s812, 2
      %s814 = smul.addr %s813, 8
      %s815 = scalar_lea.vmem %s2, %s814
      %p816 = pneg %p125
      %p817 = pneg %p122
      %p818 = scmp.lt.s32.totalorder %s42, 1
      %s819 = scalar_select %p818, %s42, 1
      %s820 = scalar_lea.vmem %s3, %s819
      %p821 = pneg %p151
      %p822 = pneg %p148
      %p823 = scmp.lt.s32.totalorder %s42, 1
      %s824 = scalar_select %p823, %s42, 1
      %s825 = scalar_lea.vmem %s4, %s824
      %p826 = pneg %p177
      %p827 = pneg %p174
      %p828 = pneg %p198
      %p829 = pneg %p195
      %p830 = pneg %p219
      %p831 = pneg %p216
      %p832 = pneg %p240
      %p833 = pneg %p237
      %p834 = pneg %p261
      %p835 = pneg %p258
      %p836 = pneg %p282
      %p837 = pneg %p279
      %p838 = pneg %p303
      %p839 = pneg %p300
      %p840 = pneg %p324
      %p841 = pneg %p321
      %p842 = pneg %p345
      %p843 = pneg %p342
      %p844 = pneg %p366
      %p845 = pneg %p363
      %p846 = pneg %p387
      %p847 = pneg %p384
      %p848 = pneg %p408
      %p849 = pneg %p405
      %p850 = pneg %p429
      %p851 = pneg %p426
      %p852 = pneg %p450
      %p853 = pneg %p447
      %p854 = pneg %p471
      %p855 = pneg %p468
      %p856 = pneg %p492
      %p857 = pneg %p489
      %p858 = pneg %p513
      %p859 = pneg %p510
      %p860 = pneg %p534
      %p861 = pneg %p531
      %p862 = pneg %p555
      %p863 = pneg %p552
      %p864 = pneg %p576
      %p865 = pneg %p573
      %p866 = pneg %p597
      %p867 = pneg %p594
      %p868 = pneg %p618
      %p869 = pneg %p615
      %p870 = pneg %p639
      %p871 = pneg %p636
      %p872 = pneg %p667
      %p873 = pneg %p664
      %p874 = scmp.lt.s32.totalorder %s42, 1
      %s875 = scalar_select %p874, %s42, 1
      %p876 = scmp.lt.s32.totalorder %s43, 0
      %s877 = scalar_select %p876, %s43, 0
      %s878 = sadd.s32 %s877, %s875
      %s879 = smul.addr %s878, 8
      %s880 = scalar_lea.vmem %s27, %s879
      %p881 = scmp.lt.s32.totalorder %s42, 1
      %s882 = scalar_select %p881, %s42, 1
      %p883 = scmp.lt.s32.totalorder %s43, 0
      %s884 = scalar_select %p883, %s43, 0
      %s885 = sadd.s32 %s884, %s882
      %s886 = smul.addr %s885, 8
      %s887 = scalar_lea.vmem %s0, %s886
      %p888 = scmp.lt.s32.totalorder %s42, 1
      %s889 = scalar_select %p888, %s42, 1
      %s890 = smul.addr %s889, 8
      %s891 = scalar_lea.vmem %s1, %s890
      %p892 = scmp.lt.s32.totalorder %s42, 1
      %s893 = scalar_select %p892, %s42, 1
      %s894 = smul.addr %s893, 2
      %s895 = smul.addr %s894, 8
      %s896 = scalar_lea.vmem %s2, %s895
      %p897 = scmp.lt.s32.totalorder %s42, 1
      %s898 = scalar_select %p897, %s42, 1
      %s899 = scalar_lea.vmem %s3, %s898
      %p900 = scmp.lt.s32.totalorder %s42, 1
      %s901 = scalar_select %p900, %s42, 1
      %s902 = scalar_lea.vmem %s4, %s901
      %p903 = scmp.lt.s32.totalorder %s42, 1
      %s904 = scalar_select %p903, %s42, 1
      %p905 = scmp.lt.s32.totalorder %s43, 0
      %s906 = scalar_select %p905, %s43, 0
      %s907 = sadd.s32 %s906, %s904
      %s908 = smul.addr %s907, 8
      %s909 = scalar_lea.vmem %s27, %s908
      %v911 = vld [vmem:[%s887] sm:$0xff]
      %v912 = vld [vmem:[%s891] sm:$0xff]
      %v913 = vld [vmem:[%s896] sm:$0xff]
      %v914 = vld [vmem:[%s896 + $0x8] sm:$0x3]
      %v915 = vlaneseq
      %v916 = vshrl.u32 %v915, 7
      %s917 = smul.u32 %s43, 8
      %v918 = vstv %s917
      %v919 = vadd.s32 %v916, %v918
      %v920 = vlaneseq
      %v921 = vand.u32 %v920, 127
      %v922 = vadd.s32 %v919, 1
      %vm923 = vcmp.le.s32.totalorder %v921, %v922
      %v924 = vld [vmem:[%s899] sm:$0x1]
      %v926 = vlaneseq
      %v927 = vshrl.u32 %v926, 7
      %v928 = vsub.s32 0, %v927
      %v929 = vrot.slane %v924, %v928
      %v931 = vsel %vm923, -1e+09, %v929
      %v932 = vld [vmem:[%s902] sm:$0x1]
      %v933 = vpack.c.bf16 %v911, %v911
      %v934 = vld [vmem:[%s5] sm:$0xf]
      %v935 = vld [vmem:[%s5 + $0x4] sm:$0xf]
      %v936 = vld [vmem:[%s5 + $0x8] sm:$0xf]
      %v937 = vld [vmem:[%s5 + $0xc] sm:$0xf]
      %v938 = vld [vmem:[%s6] sm:$0x1]
      %v940 = vlaneseq
      %v941 = vshrl.u32 %v940, 7
      %v942 = vsub.s32 0, %v941
      %v943 = vrot.slane %v938, %v942
      %v949 = vunpack.c.l.b16 %v934
      %v950 = vunpack.c.l.b16 %v935
      %v951 = vunpack.c.l.b16 %v936
      %v952 = vunpack.c.l.b16 %v937
      %v953 = vpack.c.b16 %v950, %v949
      %v954 = vpack.c.b16 %v952, %v951
      %vm957 = vcmask 261120
      %v959 = vsel %vm957, %v933, 0
      %961 = vmatprep.subr.bf16.mxu0 0
      %962 = vmatpush1.bf16.msra.mxu0 %v953
      %963 = vmatprep.subr.bf16.mxu0 0
      %964 = vmatpush1.bf16.msra.mxu0 %v954
      %965 = vmatprep.subr.bf16.mxu0 0
      %966 = vmatpush1.bf16.msra.mxu0 0
      %967 = vmatprep.subr.bf16.mxu0 0
      %968 = vmatpush1.bf16.msra.mxu0 0
      %969 = vmatprep.subr.bf16.mxu0 0
      %970 = vmatpush1.bf16.msra.mxu0 0
      %971 = vmatprep.subr.bf16.mxu0 0
      %972 = vmatpush1.bf16.msra.mxu0 0
      %973 = vmatprep.subr.bf16.mxu0 0
      %974 = vmatpush1.bf16.msra.mxu0 0
      %975 = vmatprep.subr.bf16.mxu0 0
      %976 = vmatpush1.bf16.msra.mxu0 0
      %977 = vmatprep.subr.bf16.mxu0 0
      %978 = vmatpush1.bf16.msra.mxu0 0
      %979 = vmatprep.subr.bf16.mxu0 0
      %980 = vmatpush1.bf16.msra.mxu0 0
      %981 = vmatprep.subr.bf16.mxu0 0
      %982 = vmatpush1.bf16.msra.mxu0 0
      %983 = vmatprep.subr.bf16.mxu0 0
      %984 = vmatpush1.bf16.msra.mxu0 0
      %985 = vmatprep.subr.bf16.mxu0 0
      %986 = vmatpush1.bf16.msra.mxu0 0
      %987 = vmatprep.subr.bf16.mxu0 0
      %988 = vmatpush1.bf16.msra.mxu0 0
      %989 = vmatprep.subr.bf16.mxu0 0
      %990 = vmatpush1.bf16.msra.mxu0 0
      %991 = vmatprep.subr.bf16.mxu0 0
      %992 = vmatpush1.bf16.msra.mxu0 0
      %993 = vmatprep.mubr.bf16.mxu0 0
      %994 = vmatmul.mubr.bf16.gmra.mrb[0].mxu0 %v959
      %v995 = vpop.f32.mrb[0].mxu0
      %v996 = vadd.f32 %v943, %v995
      %v997 = vpop.f32.mrb[0].mxu0
      %v998 = vpop.f32.mrb[0].mxu0
      %v999 = vpop.f32.mrb[0].mxu0
      %1000 = vdwg.mxu0
      %v1001 = vmul.f32 %v996, 0.25
      %v1002 = vpack.c.bf16 %v1001, %v1001
      %v1003 = vpack.c.bf16 %v912, %v912
      %v1004 = vld [vmem:[%s7] sm:$0xf]
      %v1005 = vld [vmem:[%s7 + $0x4] sm:$0xf]
      %v1006 = vld [vmem:[%s7 + $0x8] sm:$0xf]
      %v1007 = vld [vmem:[%s7 + $0xc] sm:$0xf]
      %v1008 = vld [vmem:[%s8] sm:$0x1]
      %v1010 = vlaneseq
      %v1011 = vshrl.u32 %v1010, 7
      %v1012 = vsub.s32 0, %v1011
      %v1013 = vrot.slane %v1008, %v1012
      %v1019 = vunpack.c.l.b16 %v1004
      %v1020 = vunpack.c.l.b16 %v1005
      %v1021 = vunpack.c.l.b16 %v1006
      %v1022 = vunpack.c.l.b16 %v1007
      %v1023 = vpack.c.b16 %v1020, %v1019
      %v1024 = vpack.c.b16 %v1022, %v1021
      %v1028 = vsel %vm957, %v1003, 0
      %1030 = vmatprep.subr.bf16.mxu0 0
      %1031 = vmatpush1.bf16.msra.mxu0 %v1023
      %1032 = vmatprep.subr.bf16.mxu0 0
      %1033 = vmatpush1.bf16.msra.mxu0 %v1024
      %1034 = vmatprep.subr.bf16.mxu0 0
      %1035 = vmatpush1.bf16.msra.mxu0 0
      %1036 = vmatprep.subr.bf16.mxu0 0
      %1037 = vmatpush1.bf16.msra.mxu0 0
      %1038 = vmatprep.subr.bf16.mxu0 0
      %1039 = vmatpush1.bf16.msra.mxu0 0
      %1040 = vmatprep.subr.bf16.mxu0 0
      %1041 = vmatpush1.bf16.msra.mxu0 0
      %1042 = vmatprep.subr.bf16.mxu0 0
      %1043 = vmatpush1.bf16.msra.mxu0 0
      %1044 = vmatprep.subr.bf16.mxu0 0
      %1045 = vmatpush1.bf16.msra.mxu0 0
      %1046 = vmatprep.subr.bf16.mxu0 0
      %1047 = vmatpush1.bf16.msra.mxu0 0
      %1048 = vmatprep.subr.bf16.mxu0 0
      %1049 = vmatpush1.bf16.msra.mxu0 0
      %1050 = vmatprep.subr.bf16.mxu0 0
      %1051 = vmatpush1.bf16.msra.mxu0 0
      %1052 = vmatprep.subr.bf16.mxu0 0
      %1053 = vmatpush1.bf16.msra.mxu0 0
      %1054 = vmatprep.subr.bf16.mxu0 0
      %1055 = vmatpush1.bf16.msra.mxu0 0
      %1056 = vmatprep.subr.bf16.mxu0 0
      %1057 = vmatpush1.bf16.msra.mxu0 0
      %1058 = vmatprep.subr.bf16.mxu0 0
      %1059 = vmatpush1.bf16.msra.mxu0 0
      %1060 = vmatprep.subr.bf16.mxu0 0
      %1061 = vmatpush1.bf16.msra.mxu0 0
      %1062 = vmatprep.mubr.bf16.mxu0 0
      %1063 = vmatmul.mubr.bf16.gmra.mrb[0].mxu0 %v1028
      %v1064 = vpop.f32.mrb[0].mxu0
      %v1065 = vadd.f32 %v1013, %v1064
      %v1066 = vpop.f32.mrb[0].mxu0
      %v1067 = vpop.f32.mrb[0].mxu0
      %v1068 = vpop.f32.mrb[0].mxu0
      %1069 = vdwg.mxu0
      %v1070 = vpack.c.bf16 %v1065, %v1065
      %vm1071 = vcmask 130048
      %v1073 = vsel %vm1071, %v1002, 0
      %v1076 = vsel %vm1071, %v1070, 0
      %1078 = vmatprep.subr.bf16.mxu0 0
      %1079 = vmatpush1.bf16.xpose.msra.mxu0 %v1076
      %1080 = vmatprep.subr.bf16.mxu0 0
      %1081 = vmatpush1.bf16.xpose.msra.mxu0 0
      %1082 = vmatprep.subr.bf16.mxu0 0
      %1083 = vmatpush1.bf16.xpose.msra.mxu0 0
      %1084 = vmatprep.subr.bf16.mxu0 0
      %1085 = vmatpush1.bf16.xpose.msra.mxu0 0
      %1086 = vmatprep.subr.bf16.mxu0 0
      %1087 = vmatpush1.bf16.xpose.msra.mxu0 0
      %1088 = vmatprep.subr.bf16.mxu0 0
      %1089 = vmatpush1.bf16.xpose.msra.mxu0 0
      %1090 = vmatprep.subr.bf16.mxu0 0
      %1091 = vmatpush1.bf16.xpose.msra.mxu0 0
      %1092 = vmatprep.subr.bf16.mxu0 0
      %1093 = vmatpush1.bf16.xpose.msra.mxu0 0
      %1094 = vmatprep.subr.bf16.mxu0 0
      %1095 = vmatpush1.bf16.xpose.msra.mxu0 0
      %1096 = vmatprep.subr.bf16.mxu0 0
      %1097 = vmatpush1.bf16.xpose.msra.mxu0 0
      %1098 = vmatprep.subr.bf16.mxu0 0
      %1099 = vmatpush1.bf16.xpose.msra.mxu0 0
      %1100 = vmatprep.subr.bf16.mxu0 0
      %1101 = vmatpush1.bf16.xpose.msra.mxu0 0
      %1102 = vmatprep.subr.bf16.mxu0 0
      %1103 = vmatpush1.bf16.xpose.msra.mxu0 0
      %1104 = vmatprep.subr.bf16.mxu0 0
      %1105 = vmatpush1.bf16.xpose.msra.mxu0 0
      %1106 = vmatprep.subr.bf16.mxu0 0
      %1107 = vmatpush1.bf16.xpose.msra.mxu0 0
      %1108 = vmatprep.subr.bf16.mxu0 0
      %1109 = vmatpush1.bf16.xpose.msra.mxu0 0
      %1110 = vmatprep.mubr.bf16.mxu0 0
      %1111 = vmatmul.mubr.bf16.gmra.mrb[0].mxu0 %v1073
      %v1112 = vpop.f32.mrb[0].mxu0
      %v1113 = vadd.f32 %v931, %v1112
      %v1114 = vpop.f32.mrb[0].mxu0
      %v1115 = vpop.f32.mrb[0].mxu0
      %v1116 = vpop.f32.mrb[0].mxu0
      %1117 = vdwg.mxu0
      %vm1118 = vcmask 64512
      %v1119 = vsel %vm1118, %v1113, -inf
      %1120 = vmax.xlane.f32.xlu0 %v1119
      %v1121 = vpop.xlane.xlu0 %1120
      %v1122 = vsub.f32 %v1113, %v1121
      %v1123 = vmul.f32 %v1122, 1.442695
      %v1124 = vpow.pop %v1123
      %v1125 = vsel %vm1118, %v1124, 0.0
      %1126 = vadd.xlane.f32.xlu0 %v1125
      %v1127 = vpop.xlane.xlu0 %1126
      %v1128 = vrcp.pop %v1127
      %v1129 = vmul.f32 1.0, %v1128
      %v1130 = vmul.f32 %v1124, %v1129
      %v1131 = vpack.c.bf16 %v1130, %v1130
      %1133 = vrot.lane.b32.xlu0 %v1070, 96
      %v1134 = vpop.permute.xlu0 %1133
      %v1136 = vsel %vm1118, %v1131, 0
      %vm1138 = vcmask 1043456
      %v1140 = vsel %vm1138, %v1134, 0
      %1142 = vmatprep.subr.bf16.mxu0 0
      %1143 = vmatpush1.bf16.msra.mxu0 %v1140
      %1144 = vmatprep.subr.bf16.mxu0 0
      %1145 = vmatpush1.bf16.msra.mxu0 0
      %1146 = vmatprep.subr.bf16.mxu0 0
      %1147 = vmatpush1.bf16.msra.mxu0 0
      %1148 = vmatprep.subr.bf16.mxu0 0
      %1149 = vmatpush1.bf16.msra.mxu0 0
      %1150 = vmatprep.subr.bf16.mxu0 0
      %1151 = vmatpush1.bf16.msra.mxu0 0
      %1152 = vmatprep.subr.bf16.mxu0 0
      %1153 = vmatpush1.bf16.msra.mxu0 0
      %1154 = vmatprep.subr.bf16.mxu0 0
      %1155 = vmatpush1.bf16.msra.mxu0 0
      %1156 = vmatprep.subr.bf16.mxu0 0
      %1157 = vmatpush1.bf16.msra.mxu0 0
      %1158 = vmatprep.subr.bf16.mxu0 0
      %1159 = vmatpush1.bf16.msra.mxu0 0
      %1160 = vmatprep.subr.bf16.mxu0 0
      %1161 = vmatpush1.bf16.msra.mxu0 0
      %1162 = vmatprep.subr.bf16.mxu0 0
      %1163 = vmatpush1.bf16.msra.mxu0 0
      %1164 = vmatprep.subr.bf16.mxu0 0
      %1165 = vmatpush1.bf16.msra.mxu0 0
      %1166 = vmatprep.subr.bf16.mxu0 0
      %1167 = vmatpush1.bf16.msra.mxu0 0
      %1168 = vmatprep.subr.bf16.mxu0 0
      %1169 = vmatpush1.bf16.msra.mxu0 0
      %1170 = vmatprep.subr.bf16.mxu0 0
      %1171 = vmatpush1.bf16.msra.mxu0 0
      %1172 = vmatprep.subr.bf16.mxu0 0
      %1173 = vmatpush1.bf16.msra.mxu0 0
      %1174 = vmatprep.mubr.bf16.mxu0 0
      %1175 = vmatmul.mubr.bf16.gmra.mrb[0].mxu0 %v1136
      %v1176 = vpop.f32.mrb[0].mxu0
      %v1177 = vadd.f32 0.0, %v1176
      %v1178 = vpop.f32.mrb[0].mxu0
      %v1179 = vpop.f32.mrb[0].mxu0
      %v1180 = vpop.f32.mrb[0].mxu0
      %1181 = vdwg.mxu0
      %1183 = vrot.lane.b32.xlu0 %v1002, 112
      %v1184 = vpop.permute.xlu0 %1183
      %1185 = vrot.lane.b32.xlu0 %v1070, 112
      %v1186 = vpop.permute.xlu0 %1185
      %v1188 = vsel %vm1071, %v1184, 0
      %v1191 = vsel %vm1071, %v1186, 0
      %1193 = vmatprep.subr.bf16.mxu0 0
      %1194 = vmatpush1.bf16.xpose.msra.mxu0 %v1191
      %1195 = vmatprep.subr.bf16.mxu0 0
      %1196 = vmatpush1.bf16.xpose.msra.mxu0 0
      %1197 = vmatprep.subr.bf16.mxu0 0
      %1198 = vmatpush1.bf16.xpose.msra.mxu0 0
      %1199 = vmatprep.subr.bf16.mxu0 0
      %1200 = vmatpush1.bf16.xpose.msra.mxu0 0
      %1201 = vmatprep.subr.bf16.mxu0 0
      %1202 = vmatpush1.bf16.xpose.msra.mxu0 0
      %1203 = vmatprep.subr.bf16.mxu0 0
      %1204 = vmatpush1.bf16.xpose.msra.mxu0 0
      %1205 = vmatprep.subr.bf16.mxu0 0
      %1206 = vmatpush1.bf16.xpose.msra.mxu0 0
      %1207 = vmatprep.subr.bf16.mxu0 0
      %1208 = vmatpush1.bf16.xpose.msra.mxu0 0
      %1209 = vmatprep.subr.bf16.mxu0 0
      %1210 = vmatpush1.bf16.xpose.msra.mxu0 0
      %1211 = vmatprep.subr.bf16.mxu0 0
      %1212 = vmatpush1.bf16.xpose.msra.mxu0 0
      %1213 = vmatprep.subr.bf16.mxu0 0
      %1214 = vmatpush1.bf16.xpose.msra.mxu0 0
      %1215 = vmatprep.subr.bf16.mxu0 0
      %1216 = vmatpush1.bf16.xpose.msra.mxu0 0
      %1217 = vmatprep.subr.bf16.mxu0 0
      %1218 = vmatpush1.bf16.xpose.msra.mxu0 0
      %1219 = vmatprep.subr.bf16.mxu0 0
      %1220 = vmatpush1.bf16.xpose.msra.mxu0 0
      %1221 = vmatprep.subr.bf16.mxu0 0
      %1222 = vmatpush1.bf16.xpose.msra.mxu0 0
      %1223 = vmatprep.subr.bf16.mxu0 0
      %1224 = vmatpush1.bf16.xpose.msra.mxu0 0
      %1225 = vmatprep.mubr.bf16.mxu0 0
      %1226 = vmatmul.mubr.bf16.gmra.mrb[0].mxu0 %v1188
      %v1227 = vpop.f32.mrb[0].mxu0
      %v1228 = vadd.f32 %v931, %v1227
      %v1229 = vpop.f32.mrb[0].mxu0
      %v1230 = vpop.f32.mrb[0].mxu0
      %v1231 = vpop.f32.mrb[0].mxu0
      %1232 = vdwg.mxu0
      %v1233 = vsel %vm1118, %v1228, -inf
      %1234 = vmax.xlane.f32.xlu0 %v1233
      %v1235 = vpop.xlane.xlu0 %1234
      %v1236 = vsub.f32 %v1228, %v1235
      %v1237 = vmul.f32 %v1236, 1.442695
      %v1238 = vpow.pop %v1237
      %v1239 = vsel %vm1118, %v1238, 0.0
      %1240 = vadd.xlane.f32.xlu0 %v1239
      %v1241 = vpop.xlane.xlu0 %1240
      %v1242 = vrcp.pop %v1241
      %v1243 = vmul.f32 1.0, %v1242
      %v1244 = vmul.f32 %v1238, %v1243
      %v1245 = vpack.c.bf16 %v1244, %v1244
      %1246 = vrot.lane.b32.xlu0 %v1070, 80
      %v1247 = vpop.permute.xlu0 %1246
      %v1249 = vsel %vm1118, %v1245, 0
      %v1252 = vsel %vm1138, %v1247, 0
      %1254 = vmatprep.subr.bf16.mxu0 0
      %1255 = vmatpush1.bf16.msra.mxu0 %v1252
      %1256 = vmatprep.subr.bf16.mxu0 0
      %1257 = vmatpush1.bf16.msra.mxu0 0
      %1258 = vmatprep.subr.bf16.mxu0 0
      %1259 = vmatpush1.bf16.msra.mxu0 0
      %1260 = vmatprep.subr.bf16.mxu0 0
      %1261 = vmatpush1.bf16.msra.mxu0 0
      %1262 = vmatprep.subr.bf16.mxu0 0
      %1263 = vmatpush1.bf16.msra.mxu0 0
      %1264 = vmatprep.subr.bf16.mxu0 0
      %1265 = vmatpush1.bf16.msra.mxu0 0
      %1266 = vmatprep.subr.bf16.mxu0 0
      %1267 = vmatpush1.bf16.msra.mxu0 0
      %1268 = vmatprep.subr.bf16.mxu0 0
      %1269 = vmatpush1.bf16.msra.mxu0 0
      %1270 = vmatprep.subr.bf16.mxu0 0
      %1271 = vmatpush1.bf16.msra.mxu0 0
      %1272 = vmatprep.subr.bf16.mxu0 0
      %1273 = vmatpush1.bf16.msra.mxu0 0
      %1274 = vmatprep.subr.bf16.mxu0 0
      %1275 = vmatpush1.bf16.msra.mxu0 0
      %1276 = vmatprep.subr.bf16.mxu0 0
      %1277 = vmatpush1.bf16.msra.mxu0 0
      %1278 = vmatprep.subr.bf16.mxu0 0
      %1279 = vmatpush1.bf16.msra.mxu0 0
      %1280 = vmatprep.subr.bf16.mxu0 0
      %1281 = vmatpush1.bf16.msra.mxu0 0
      %1282 = vmatprep.subr.bf16.mxu0 0
      %1283 = vmatpush1.bf16.msra.mxu0 0
      %1284 = vmatprep.subr.bf16.mxu0 0
      %1285 = vmatpush1.bf16.msra.mxu0 0
      %1286 = vmatprep.mubr.bf16.mxu0 0
      %1287 = vmatmul.mubr.bf16.gmra.mrb[0].mxu0 %v1249
      %v1288 = vpop.f32.mrb[0].mxu0
      %v1289 = vadd.f32 0.0, %v1288
      %v1290 = vpop.f32.mrb[0].mxu0
      %v1291 = vpop.f32.mrb[0].mxu0
      %v1292 = vpop.f32.mrb[0].mxu0
      %1293 = vdwg.mxu0
      %1295 = vrot.lane.b32.xlu0 %v1289, 16
      %v1296 = vpop.permute.xlu0 %1295
      %v1298 = vsel %vm1071, %v1177, %v1296
      %v1299 = vpack.c.bf16 %v1298, %v1298
      %v1300 = vld [vmem:[%s9] sm:$0xf]
      %v1301 = vld [vmem:[%s9 + $0x4] sm:$0xf]
      %v1302 = vld [vmem:[%s9 + $0x8] sm:$0xf]
      %v1303 = vld [vmem:[%s9 + $0xc] sm:$0xf]
      %v1304 = vld [vmem:[%s10] sm:$0x1]
      %v1306 = vlaneseq
      %v1307 = vshrl.u32 %v1306, 7
      %v1308 = vsub.s32 0, %v1307
      %v1309 = vrot.slane %v1304, %v1308
      %v1315 = vunpack.c.l.b16 %v1300
      %v1316 = vunpack.c.l.b16 %v1301
      %v1317 = vunpack.c.l.b16 %v1302
      %v1318 = vunpack.c.l.b16 %v1303
      %v1319 = vpack.c.b16 %v1316, %v1315
      %v1320 = vpack.c.b16 %v1318, %v1317
      %v1324 = vsel %vm957, %v1299, 0
      %1326 = vmatprep.subr.bf16.mxu0 0
      %1327 = vmatpush1.bf16.msra.mxu0 %v1319
      %1328 = vmatprep.subr.bf16.mxu0 0
      %1329 = vmatpush1.bf16.msra.mxu0 %v1320
      %1330 = vmatprep.subr.bf16.mxu0 0
      %1331 = vmatpush1.bf16.msra.mxu0 0
      %1332 = vmatprep.subr.bf16.mxu0 0
      %1333 = vmatpush1.bf16.msra.mxu0 0
      %1334 = vmatprep.subr.bf16.mxu0 0
      %1335 = vmatpush1.bf16.msra.mxu0 0
      %1336 = vmatprep.subr.bf16.mxu0 0
      %1337 = vmatpush1.bf16.msra.mxu0 0
      %1338 = vmatprep.subr.bf16.mxu0 0
      %1339 = vmatpush1.bf16.msra.mxu0 0
      %1340 = vmatprep.subr.bf16.mxu0 0
      %1341 = vmatpush1.bf16.msra.mxu0 0
      %1342 = vmatprep.subr.bf16.mxu0 0
      %1343 = vmatpush1.bf16.msra.mxu0 0
      %1344 = vmatprep.subr.bf16.mxu0 0
      %1345 = vmatpush1.bf16.msra.mxu0 0
      %1346 = vmatprep.subr.bf16.mxu0 0
      %1347 = vmatpush1.bf16.msra.mxu0 0
      %1348 = vmatprep.subr.bf16.mxu0 0
      %1349 = vmatpush1.bf16.msra.mxu0 0
      %1350 = vmatprep.subr.bf16.mxu0 0
      %1351 = vmatpush1.bf16.msra.mxu0 0
      %1352 = vmatprep.subr.bf16.mxu0 0
      %1353 = vmatpush1.bf16.msra.mxu0 0
      %1354 = vmatprep.subr.bf16.mxu0 0
      %1355 = vmatpush1.bf16.msra.mxu0 0
      %1356 = vmatprep.subr.bf16.mxu0 0
      %1357 = vmatpush1.bf16.msra.mxu0 0
      %1358 = vmatprep.mubr.bf16.mxu0 0
      %1359 = vmatmul.mubr.bf16.gmra.mrb[0].mxu0 %v1324
      %v1360 = vpop.f32.mrb[0].mxu0
      %v1361 = vadd.f32 %v1309, %v1360
      %v1362 = vpop.f32.mrb[0].mxu0
      %v1363 = vpop.f32.mrb[0].mxu0
      %v1364 = vpop.f32.mrb[0].mxu0
      %1365 = vdwg.mxu0
      %v1366 = vadd.f32 %v1361, %v911
      %v1367 = vsel %vm957, %v1366, 0.0
      %1368 = vadd.xlane.f32.xlu0 %v1367
      %v1369 = vpop.xlane.xlu0 %1368
      %v1370 = vrcp.pop 32.0
      %v1371 = vmul.f32 %v1369, %v1370
      %v1372 = vsub.f32 %v1366, %v1371
      %v1373 = vmul.f32 %v1372, %v1372
      %v1374 = vsel %vm957, %v1373, 0.0
      %1375 = vadd.xlane.f32.xlu0 %v1374
      %v1376 = vpop.xlane.xlu0 %1375
      %v1377 = vmul.f32 %v1376, %v1370
      %v1378 = vadd.f32 %v1377, 1e-05
      %v1379 = vrsqrt.pop %v1378
      %v1380 = vmul.f32 %v1372, %v1379
      %v1381 = vld [vmem:[%s11] sm:$0x1]
      %v1383 = vlaneseq
      %v1384 = vshrl.u32 %v1383, 7
      %v1385 = vsub.s32 0, %v1384
      %v1386 = vrot.slane %v1381, %v1385
      %v1388 = vmul.f32 %v1380, %v1386
      %v1389 = vld [vmem:[%s12] sm:$0x1]
      %v1391 = vlaneseq
      %v1392 = vshrl.u32 %v1391, 7
      %v1393 = vsub.s32 0, %v1392
      %v1394 = vrot.slane %v1389, %v1393
      %v1396 = vadd.f32 %v1388, %v1394
      %v1397 = vpack.c.bf16 %v1396, %v1396
      %v1398 = vld [vmem:[%s13] sm:$0xf]
      %v1399 = vld [vmem:[%s13 + $0x4] sm:$0xf]
      %v1400 = vld [vmem:[%s13 + $0x8] sm:$0xf]
      %v1401 = vld [vmem:[%s13 + $0xc] sm:$0xf]
      %v1402 = vld [vmem:[%s14] sm:$0x1]
      %v1404 = vlaneseq
      %v1405 = vshrl.u32 %v1404, 7
      %v1406 = vsub.s32 0, %v1405
      %v1407 = vrot.slane %v1402, %v1406
      %v1413 = vunpack.c.l.b16 %v1398
      %v1414 = vunpack.c.l.b16 %v1399
      %v1415 = vunpack.c.l.b16 %v1400
      %v1416 = vunpack.c.l.b16 %v1401
      %v1417 = vpack.c.b16 %v1414, %v1413
      %v1418 = vpack.c.b16 %v1416, %v1415
      %v1422 = vsel %vm957, %v1397, 0
      %1424 = vmatprep.subr.bf16.mxu0 0
      %1425 = vmatpush1.bf16.msra.mxu0 %v1417
      %1426 = vmatprep.subr.bf16.mxu0 0
      %1427 = vmatpush1.bf16.msra.mxu0 %v1418
      %1428 = vmatprep.subr.bf16.mxu0 0
      %1429 = vmatpush1.bf16.msra.mxu0 0
      %1430 = vmatprep.subr.bf16.mxu0 0
      %1431 = vmatpush1.bf16.msra.mxu0 0
      %1432 = vmatprep.subr.bf16.mxu0 0
      %1433 = vmatpush1.bf16.msra.mxu0 0
      %1434 = vmatprep.subr.bf16.mxu0 0
      %1435 = vmatpush1.bf16.msra.mxu0 0
      %1436 = vmatprep.subr.bf16.mxu0 0
      %1437 = vmatpush1.bf16.msra.mxu0 0
      %1438 = vmatprep.subr.bf16.mxu0 0
      %1439 = vmatpush1.bf16.msra.mxu0 0
      %1440 = vmatprep.subr.bf16.mxu0 0
      %1441 = vmatpush1.bf16.msra.mxu0 0
      %1442 = vmatprep.subr.bf16.mxu0 0
      %1443 = vmatpush1.bf16.msra.mxu0 0
      %1444 = vmatprep.subr.bf16.mxu0 0
      %1445 = vmatpush1.bf16.msra.mxu0 0
      %1446 = vmatprep.subr.bf16.mxu0 0
      %1447 = vmatpush1.bf16.msra.mxu0 0
      %1448 = vmatprep.subr.bf16.mxu0 0
      %1449 = vmatpush1.bf16.msra.mxu0 0
      %1450 = vmatprep.subr.bf16.mxu0 0
      %1451 = vmatpush1.bf16.msra.mxu0 0
      %1452 = vmatprep.subr.bf16.mxu0 0
      %1453 = vmatpush1.bf16.msra.mxu0 0
      %1454 = vmatprep.subr.bf16.mxu0 0
      %1455 = vmatpush1.bf16.msra.mxu0 0
      %1456 = vmatprep.mubr.bf16.mxu0 0
      %1457 = vmatmul.mubr.bf16.gmra.mrb[0].mxu0 %v1422
      %v1458 = vpop.f32.mrb[0].mxu0
      %v1459 = vadd.f32 %v1407, %v1458
      %v1460 = vpop.f32.mrb[0].mxu0
      %v1461 = vpop.f32.mrb[0].mxu0
      %v1462 = vpop.f32.mrb[0].mxu0
      %1463 = vdwg.mxu0
      %v1464 = vmul.f32 %v1459, 0.25
      %v1465 = vpack.c.bf16 %v1464, %v1464
      %v1466 = vpack.c.bf16 %v914, %v913
      %v1467 = vld [vmem:[%s15] sm:$0xf]
      %v1468 = vld [vmem:[%s15 + $0x4] sm:$0xf]
      %v1469 = vld [vmem:[%s15 + $0x8] sm:$0xf]
      %v1470 = vld [vmem:[%s15 + $0xc] sm:$0xf]
      %v1471 = vld [vmem:[%s16] sm:$0x1]
      %v1473 = vlaneseq
      %v1474 = vshrl.u32 %v1473, 7
      %v1475 = vsub.s32 0, %v1474
      %v1476 = vrot.slane %v1471, %v1475
      %v1482 = vunpack.c.l.b16 %v1467
      %v1483 = vunpack.c.l.b16 %v1468
      %v1484 = vunpack.c.l.b16 %v1469
      %v1485 = vunpack.c.l.b16 %v1470
      %v1486 = vpack.c.b16 %v1483, %v1482
      %v1487 = vpack.c.b16 %v1485, %v1484
      %v1491 = vsel %vm957, %v1466, 0
      %1493 = vmatprep.subr.bf16.mxu0 0
      %1494 = vmatpush1.bf16.msra.mxu0 %v1486
      %1495 = vmatprep.subr.bf16.mxu0 0
      %1496 = vmatpush1.bf16.msra.mxu0 %v1487
      %1497 = vmatprep.subr.bf16.mxu0 0
      %1498 = vmatpush1.bf16.msra.mxu0 0
      %1499 = vmatprep.subr.bf16.mxu0 0
      %1500 = vmatpush1.bf16.msra.mxu0 0
      %1501 = vmatprep.subr.bf16.mxu0 0
      %1502 = vmatpush1.bf16.msra.mxu0 0
      %1503 = vmatprep.subr.bf16.mxu0 0
      %1504 = vmatpush1.bf16.msra.mxu0 0
      %1505 = vmatprep.subr.bf16.mxu0 0
      %1506 = vmatpush1.bf16.msra.mxu0 0
      %1507 = vmatprep.subr.bf16.mxu0 0
      %1508 = vmatpush1.bf16.msra.mxu0 0
      %1509 = vmatprep.subr.bf16.mxu0 0
      %1510 = vmatpush1.bf16.msra.mxu0 0
      %1511 = vmatprep.subr.bf16.mxu0 0
      %1512 = vmatpush1.bf16.msra.mxu0 0
      %1513 = vmatprep.subr.bf16.mxu0 0
      %1514 = vmatpush1.bf16.msra.mxu0 0
      %1515 = vmatprep.subr.bf16.mxu0 0
      %1516 = vmatpush1.bf16.msra.mxu0 0
      %1517 = vmatprep.subr.bf16.mxu0 0
      %1518 = vmatpush1.bf16.msra.mxu0 0
      %1519 = vmatprep.subr.bf16.mxu0 0
      %1520 = vmatpush1.bf16.msra.mxu0 0
      %1521 = vmatprep.subr.bf16.mxu0 0
      %1522 = vmatpush1.bf16.msra.mxu0 0
      %1523 = vmatprep.subr.bf16.mxu0 0
      %1524 = vmatpush1.bf16.msra.mxu0 0
      %1525 = vmatprep.mubr.bf16.mxu0 0
      %1526 = vmatmul.mubr.bf16.gmra.mrb[0].mxu0 %v1491
      %v1527 = vpop.f32.mrb[0].mxu0
      %v1528 = vadd.f32 %v1476, %v1527
      %v1529 = vpop.f32.mrb[0].mxu0
      %v1530 = vpop.f32.mrb[0].mxu0
      %v1531 = vadd.f32 %v1476, %v1530
      %v1532 = vpop.f32.mrb[0].mxu0
      %1533 = vdwg.mxu0
      %v1534 = vpack.c.bf16 %v1531, %v1528
      %v1536 = vlaneseq
      %v1537 = vshrl.u32 %v1536, 7
      %v1538 = vsub.s32 0, %v1537
      %v1539 = vrot.slane %v932, %v1538
      %v1542 = vsel %vm1071, %v1465, 0
      %v1545 = vsel %vm1071, %v1534, 0
      %1547 = vmatprep.subr.bf16.mxu0 0
      %1548 = vmatpush1.bf16.xpose.msra.mxu0 %v1545
      %1549 = vmatprep.subr.bf16.mxu0 0
      %1550 = vmatpush1.bf16.xpose.msra.mxu0 0
      %1551 = vmatprep.subr.bf16.mxu0 0
      %1552 = vmatpush1.bf16.xpose.msra.mxu0 0
      %1553 = vmatprep.subr.bf16.mxu0 0
      %1554 = vmatpush1.bf16.xpose.msra.mxu0 0
      %1555 = vmatprep.subr.bf16.mxu0 0
      %1556 = vmatpush1.bf16.xpose.msra.mxu0 0
      %1557 = vmatprep.subr.bf16.mxu0 0
      %1558 = vmatpush1.bf16.xpose.msra.mxu0 0
      %1559 = vmatprep.subr.bf16.mxu0 0
      %1560 = vmatpush1.bf16.xpose.msra.mxu0 0
      %1561 = vmatprep.subr.bf16.mxu0 0
      %1562 = vmatpush1.bf16.xpose.msra.mxu0 0
      %1563 = vmatprep.subr.bf16.mxu0 0
      %1564 = vmatpush1.bf16.xpose.msra.mxu0 0
      %1565 = vmatprep.subr.bf16.mxu0 0
      %1566 = vmatpush1.bf16.xpose.msra.mxu0 0
      %1567 = vmatprep.subr.bf16.mxu0 0
      %1568 = vmatpush1.bf16.xpose.msra.mxu0 0
      %1569 = vmatprep.subr.bf16.mxu0 0
      %1570 = vmatpush1.bf16.xpose.msra.mxu0 0
      %1571 = vmatprep.subr.bf16.mxu0 0
      %1572 = vmatpush1.bf16.xpose.msra.mxu0 0
      %1573 = vmatprep.subr.bf16.mxu0 0
      %1574 = vmatpush1.bf16.xpose.msra.mxu0 0
      %1575 = vmatprep.subr.bf16.mxu0 0
      %1576 = vmatpush1.bf16.xpose.msra.mxu0 0
      %1577 = vmatprep.subr.bf16.mxu0 0
      %1578 = vmatpush1.bf16.xpose.msra.mxu0 0
      %1579 = vmatprep.mubr.bf16.mxu0 0
      %1580 = vmatmul.mubr.bf16.gmra.mrb[0].mxu0 %v1542
      %v1581 = vpop.f32.mrb[0].mxu0
      %v1582 = vadd.f32 %v1539, %v1581
      %v1583 = vpop.f32.mrb[0].mxu0
      %v1584 = vpop.f32.mrb[0].mxu0
      %v1585 = vpop.f32.mrb[0].mxu0
      %1586 = vdwg.mxu0
      %vm1587 = vcmask 80896
      %v1588 = vsel %vm1587, %v1582, -inf
      %1589 = vmax.xlane.f32.xlu0 %v1588
      %v1590 = vpop.xlane.xlu0 %1589
      %v1591 = vsub.f32 %v1582, %v1590
      %v1592 = vmul.f32 %v1591, 1.442695
      %v1593 = vpow.pop %v1592
      %v1594 = vsel %vm1587, %v1593, 0.0
      %1595 = vadd.xlane.f32.xlu0 %v1594
      %v1596 = vpop.xlane.xlu0 %1595
      %v1597 = vrcp.pop %v1596
      %v1598 = vmul.f32 1.0, %v1597
      %v1599 = vmul.f32 %v1593, %v1598
      %v1600 = vpack.c.bf16 %v1599, %v1599
      %1602 = vrot.lane.b32.xlu0 %v1534, 96
      %v1603 = vpop.permute.xlu0 %1602
      %v1605 = vsel %vm1587, %v1600, 0
      %vm1607 = vcmask 1044480
      %v1609 = vsel %vm1607, %v1603, 0
      %1611 = vmatprep.subr.bf16.mxu0 0
      %1612 = vmatpush1.bf16.msra.mxu0 %v1609
      %1613 = vmatprep.subr.bf16.mxu0 0
      %1614 = vmatpush1.bf16.msra.mxu0 0
      %1615 = vmatprep.subr.bf16.mxu0 0
      %1616 = vmatpush1.bf16.msra.mxu0 0
      %1617 = vmatprep.subr.bf16.mxu0 0
      %1618 = vmatpush1.bf16.msra.mxu0 0
      %1619 = vmatprep.subr.bf16.mxu0 0
      %1620 = vmatpush1.bf16.msra.mxu0 0
      %1621 = vmatprep.subr.bf16.mxu0 0
      %1622 = vmatpush1.bf16.msra.mxu0 0
      %1623 = vmatprep.subr.bf16.mxu0 0
      %1624 = vmatpush1.bf16.msra.mxu0 0
      %1625 = vmatprep.subr.bf16.mxu0 0
      %1626 = vmatpush1.bf16.msra.mxu0 0
      %1627 = vmatprep.subr.bf16.mxu0 0
      %1628 = vmatpush1.bf16.msra.mxu0 0
      %1629 = vmatprep.subr.bf16.mxu0 0
      %1630 = vmatpush1.bf16.msra.mxu0 0
      %1631 = vmatprep.subr.bf16.mxu0 0
      %1632 = vmatpush1.bf16.msra.mxu0 0
      %1633 = vmatprep.subr.bf16.mxu0 0
      %1634 = vmatpush1.bf16.msra.mxu0 0
      %1635 = vmatprep.subr.bf16.mxu0 0
      %1636 = vmatpush1.bf16.msra.mxu0 0
      %1637 = vmatprep.subr.bf16.mxu0 0
      %1638 = vmatpush1.bf16.msra.mxu0 0
      %1639 = vmatprep.subr.bf16.mxu0 0
      %1640 = vmatpush1.bf16.msra.mxu0 0
      %1641 = vmatprep.subr.bf16.mxu0 0
      %1642 = vmatpush1.bf16.msra.mxu0 0
      %1643 = vmatprep.mubr.bf16.mxu0 0
      %1644 = vmatmul.mubr.bf16.gmra.mrb[0].mxu0 %v1605
      %v1645 = vpop.f32.mrb[0].mxu0
      %v1646 = vadd.f32 0.0, %v1645
      %v1647 = vpop.f32.mrb[0].mxu0
      %v1648 = vpop.f32.mrb[0].mxu0
      %v1649 = vpop.f32.mrb[0].mxu0
      %1650 = vdwg.mxu0
      %1652 = vrot.lane.b32.xlu0 %v1465, 112
      %v1653 = vpop.permute.xlu0 %1652
      %1654 = vrot.lane.b32.xlu0 %v1534, 112
      %v1655 = vpop.permute.xlu0 %1654
      %v1657 = vsel %vm1071, %v1653, 0
      %v1660 = vsel %vm1071, %v1655, 0
      %1662 = vmatprep.subr.bf16.mxu0 0
      %1663 = vmatpush1.bf16.xpose.msra.mxu0 %v1660
      %1664 = vmatprep.subr.bf16.mxu0 0
      %1665 = vmatpush1.bf16.xpose.msra.mxu0 0
      %1666 = vmatprep.subr.bf16.mxu0 0
      %1667 = vmatpush1.bf16.xpose.msra.mxu0 0
      %1668 = vmatprep.subr.bf16.mxu0 0
      %1669 = vmatpush1.bf16.xpose.msra.mxu0 0
      %1670 = vmatprep.subr.bf16.mxu0 0
      %1671 = vmatpush1.bf16.xpose.msra.mxu0 0
      %1672 = vmatprep.subr.bf16.mxu0 0
      %1673 = vmatpush1.bf16.xpose.msra.mxu0 0
      %1674 = vmatprep.subr.bf16.mxu0 0
      %1675 = vmatpush1.bf16.xpose.msra.mxu0 0
      %1676 = vmatprep.subr.bf16.mxu0 0
      %1677 = vmatpush1.bf16.xpose.msra.mxu0 0
      %1678 = vmatprep.subr.bf16.mxu0 0
      %1679 = vmatpush1.bf16.xpose.msra.mxu0 0
      %1680 = vmatprep.subr.bf16.mxu0 0
      %1681 = vmatpush1.bf16.xpose.msra.mxu0 0
      %1682 = vmatprep.subr.bf16.mxu0 0
      %1683 = vmatpush1.bf16.xpose.msra.mxu0 0
      %1684 = vmatprep.subr.bf16.mxu0 0
      %1685 = vmatpush1.bf16.xpose.msra.mxu0 0
      %1686 = vmatprep.subr.bf16.mxu0 0
      %1687 = vmatpush1.bf16.xpose.msra.mxu0 0
      %1688 = vmatprep.subr.bf16.mxu0 0
      %1689 = vmatpush1.bf16.xpose.msra.mxu0 0
      %1690 = vmatprep.subr.bf16.mxu0 0
      %1691 = vmatpush1.bf16.xpose.msra.mxu0 0
      %1692 = vmatprep.subr.bf16.mxu0 0
      %1693 = vmatpush1.bf16.xpose.msra.mxu0 0
      %1694 = vmatprep.mubr.bf16.mxu0 0
      %1695 = vmatmul.mubr.bf16.gmra.mrb[0].mxu0 %v1657
      %v1696 = vpop.f32.mrb[0].mxu0
      %v1697 = vadd.f32 %v1539, %v1696
      %v1698 = vpop.f32.mrb[0].mxu0
      %v1699 = vpop.f32.mrb[0].mxu0
      %v1700 = vpop.f32.mrb[0].mxu0
      %1701 = vdwg.mxu0
      %v1702 = vsel %vm1587, %v1697, -inf
      %1703 = vmax.xlane.f32.xlu0 %v1702
      %v1704 = vpop.xlane.xlu0 %1703
      %v1705 = vsub.f32 %v1697, %v1704
      %v1706 = vmul.f32 %v1705, 1.442695
      %v1707 = vpow.pop %v1706
      %v1708 = vsel %vm1587, %v1707, 0.0
      %1709 = vadd.xlane.f32.xlu0 %v1708
      %v1710 = vpop.xlane.xlu0 %1709
      %v1711 = vrcp.pop %v1710
      %v1712 = vmul.f32 1.0, %v1711
      %v1713 = vmul.f32 %v1707, %v1712
      %v1714 = vpack.c.bf16 %v1713, %v1713
      %1715 = vrot.lane.b32.xlu0 %v1534, 80
      %v1716 = vpop.permute.xlu0 %1715
      %v1718 = vsel %vm1587, %v1714, 0
      %v1721 = vsel %vm1607, %v1716, 0
      %1723 = vmatprep.subr.bf16.mxu0 0
      %1724 = vmatpush1.bf16.msra.mxu0 %v1721
      %1725 = vmatprep.subr.bf16.mxu0 0
      %1726 = vmatpush1.bf16.msra.mxu0 0
      %1727 = vmatprep.subr.bf16.mxu0 0
      %1728 = vmatpush1.bf16.msra.mxu0 0
      %1729 = vmatprep.subr.bf16.mxu0 0
      %1730 = vmatpush1.bf16.msra.mxu0 0
      %1731 = vmatprep.subr.bf16.mxu0 0
      %1732 = vmatpush1.bf16.msra.mxu0 0
      %1733 = vmatprep.subr.bf16.mxu0 0
      %1734 = vmatpush1.bf16.msra.mxu0 0
      %1735 = vmatprep.subr.bf16.mxu0 0
      %1736 = vmatpush1.bf16.msra.mxu0 0
      %1737 = vmatprep.subr.bf16.mxu0 0
      %1738 = vmatpush1.bf16.msra.mxu0 0
      %1739 = vmatprep.subr.bf16.mxu0 0
      %1740 = vmatpush1.bf16.msra.mxu0 0
      %1741 = vmatprep.subr.bf16.mxu0 0
      %1742 = vmatpush1.bf16.msra.mxu0 0
      %1743 = vmatprep.subr.bf16.mxu0 0
      %1744 = vmatpush1.bf16.msra.mxu0 0
      %1745 = vmatprep.subr.bf16.mxu0 0
      %1746 = vmatpush1.bf16.msra.mxu0 0
      %1747 = vmatprep.subr.bf16.mxu0 0
      %1748 = vmatpush1.bf16.msra.mxu0 0
      %1749 = vmatprep.subr.bf16.mxu0 0
      %1750 = vmatpush1.bf16.msra.mxu0 0
      %1751 = vmatprep.subr.bf16.mxu0 0
      %1752 = vmatpush1.bf16.msra.mxu0 0
      %1753 = vmatprep.subr.bf16.mxu0 0
      %1754 = vmatpush1.bf16.msra.mxu0 0
      %1755 = vmatprep.mubr.bf16.mxu0 0
      %1756 = vmatmul.mubr.bf16.gmra.mrb[0].mxu0 %v1718
      %v1757 = vpop.f32.mrb[0].mxu0
      %v1758 = vadd.f32 0.0, %v1757
      %v1759 = vpop.f32.mrb[0].mxu0
      %v1760 = vpop.f32.mrb[0].mxu0
      %v1761 = vpop.f32.mrb[0].mxu0
      %1762 = vdwg.mxu0
      %1764 = vrot.lane.b32.xlu0 %v1758, 16
      %v1765 = vpop.permute.xlu0 %1764
      %v1767 = vsel %vm1071, %v1646, %v1765
      %v1768 = vpack.c.bf16 %v1767, %v1767
      %v1769 = vld [vmem:[%s17] sm:$0xf]
      %v1770 = vld [vmem:[%s17 + $0x4] sm:$0xf]
      %v1771 = vld [vmem:[%s17 + $0x8] sm:$0xf]
      %v1772 = vld [vmem:[%s17 + $0xc] sm:$0xf]
      %v1773 = vld [vmem:[%s18] sm:$0x1]
      %v1775 = vlaneseq
      %v1776 = vshrl.u32 %v1775, 7
      %v1777 = vsub.s32 0, %v1776
      %v1778 = vrot.slane %v1773, %v1777
      %v1784 = vunpack.c.l.b16 %v1769
      %v1785 = vunpack.c.l.b16 %v1770
      %v1786 = vunpack.c.l.b16 %v1771
      %v1787 = vunpack.c.l.b16 %v1772
      %v1788 = vpack.c.b16 %v1785, %v1784
      %v1789 = vpack.c.b16 %v1787, %v1786
      %v1793 = vsel %vm957, %v1768, 0
      %1795 = vmatprep.subr.bf16.mxu0 0
      %1796 = vmatpush1.bf16.msra.mxu0 %v1788
      %1797 = vmatprep.subr.bf16.mxu0 0
      %1798 = vmatpush1.bf16.msra.mxu0 %v1789
      %1799 = vmatprep.subr.bf16.mxu0 0
      %1800 = vmatpush1.bf16.msra.mxu0 0
      %1801 = vmatprep.subr.bf16.mxu0 0
      %1802 = vmatpush1.bf16.msra.mxu0 0
      %1803 = vmatprep.subr.bf16.mxu0 0
      %1804 = vmatpush1.bf16.msra.mxu0 0
      %1805 = vmatprep.subr.bf16.mxu0 0
      %1806 = vmatpush1.bf16.msra.mxu0 0
      %1807 = vmatprep.subr.bf16.mxu0 0
      %1808 = vmatpush1.bf16.msra.mxu0 0
      %1809 = vmatprep.subr.bf16.mxu0 0
      %1810 = vmatpush1.bf16.msra.mxu0 0
      %1811 = vmatprep.subr.bf16.mxu0 0
      %1812 = vmatpush1.bf16.msra.mxu0 0
      %1813 = vmatprep.subr.bf16.mxu0 0
      %1814 = vmatpush1.bf16.msra.mxu0 0
      %1815 = vmatprep.subr.bf16.mxu0 0
      %1816 = vmatpush1.bf16.msra.mxu0 0
      %1817 = vmatprep.subr.bf16.mxu0 0
      %1818 = vmatpush1.bf16.msra.mxu0 0
      %1819 = vmatprep.subr.bf16.mxu0 0
      %1820 = vmatpush1.bf16.msra.mxu0 0
      %1821 = vmatprep.subr.bf16.mxu0 0
      %1822 = vmatpush1.bf16.msra.mxu0 0
      %1823 = vmatprep.subr.bf16.mxu0 0
      %1824 = vmatpush1.bf16.msra.mxu0 0
      %1825 = vmatprep.subr.bf16.mxu0 0
      %1826 = vmatpush1.bf16.msra.mxu0 0
      %1827 = vmatprep.mubr.bf16.mxu0 0
      %1828 = vmatmul.mubr.bf16.gmra.mrb[0].mxu0 %v1793
      %v1829 = vpop.f32.mrb[0].mxu0
      %v1830 = vadd.f32 %v1778, %v1829
      %v1831 = vpop.f32.mrb[0].mxu0
      %v1832 = vpop.f32.mrb[0].mxu0
      %v1833 = vpop.f32.mrb[0].mxu0
      %1834 = vdwg.mxu0
      %v1835 = vadd.f32 %v1830, %v1396
      %v1836 = vsel %vm957, %v1835, 0.0
      %1837 = vadd.xlane.f32.xlu0 %v1836
      %v1838 = vpop.xlane.xlu0 %1837
      %v1839 = vmul.f32 %v1838, %v1370
      %v1840 = vsub.f32 %v1835, %v1839
      %v1841 = vmul.f32 %v1840, %v1840
      %v1842 = vsel %vm957, %v1841, 0.0
      %1843 = vadd.xlane.f32.xlu0 %v1842
      %v1844 = vpop.xlane.xlu0 %1843
      %v1845 = vmul.f32 %v1844, %v1370
      %v1846 = vadd.f32 %v1845, 1e-05
      %v1847 = vrsqrt.pop %v1846
      %v1848 = vmul.f32 %v1840, %v1847
      %v1849 = vld [vmem:[%s19] sm:$0x1]
      %v1851 = vlaneseq
      %v1852 = vshrl.u32 %v1851, 7
      %v1853 = vsub.s32 0, %v1852
      %v1854 = vrot.slane %v1849, %v1853
      %v1856 = vmul.f32 %v1848, %v1854
      %v1857 = vld [vmem:[%s20] sm:$0x1]
      %v1859 = vlaneseq
      %v1860 = vshrl.u32 %v1859, 7
      %v1861 = vsub.s32 0, %v1860
      %v1862 = vrot.slane %v1857, %v1861
      %v1864 = vadd.f32 %v1856, %v1862
      %v1865 = vpack.c.bf16 %v1864, %v1864
      %v1866 = vld [vmem:[%s21] sm:$0xf]
      %v1867 = vld [vmem:[%s21 + $0x4] sm:$0xf]
      %v1868 = vld [vmem:[%s21 + $0x8] sm:$0xf]
      %v1869 = vld [vmem:[%s21 + $0xc] sm:$0xf]
      %v1870 = vld [vmem:[%s22] sm:$0x1]
      %v1872 = vlaneseq
      %v1873 = vshrl.u32 %v1872, 7
      %v1874 = vsub.s32 0, %v1873
      %v1875 = vrot.slane %v1870, %v1874
      %v1881 = vunpack.c.l.b16 %v1866
      %v1882 = vunpack.c.l.b16 %v1867
      %v1883 = vunpack.c.l.b16 %v1868
      %v1884 = vunpack.c.l.b16 %v1869
      %v1885 = vpack.c.b16 %v1882, %v1881
      %v1886 = vpack.c.b16 %v1884, %v1883
      %v1890 = vsel %vm957, %v1865, 0
      %1892 = vmatprep.subr.bf16.mxu0 0
      %1893 = vmatpush1.bf16.msra.mxu0 %v1885
      %1894 = vmatprep.subr.bf16.mxu0 0
      %1895 = vmatpush1.bf16.msra.mxu0 %v1886
      %1896 = vmatprep.subr.bf16.mxu0 0
      %1897 = vmatpush1.bf16.msra.mxu0 0
      %1898 = vmatprep.subr.bf16.mxu0 0
      %1899 = vmatpush1.bf16.msra.mxu0 0
      %1900 = vmatprep.subr.bf16.mxu0 0
      %1901 = vmatpush1.bf16.msra.mxu0 0
      %1902 = vmatprep.subr.bf16.mxu0 0
      %1903 = vmatpush1.bf16.msra.mxu0 0
      %1904 = vmatprep.subr.bf16.mxu0 0
      %1905 = vmatpush1.bf16.msra.mxu0 0
      %1906 = vmatprep.subr.bf16.mxu0 0
      %1907 = vmatpush1.bf16.msra.mxu0 0
      %1908 = vmatprep.subr.bf16.mxu0 0
      %1909 = vmatpush1.bf16.msra.mxu0 0
      %1910 = vmatprep.subr.bf16.mxu0 0
      %1911 = vmatpush1.bf16.msra.mxu0 0
      %1912 = vmatprep.subr.bf16.mxu0 0
      %1913 = vmatpush1.bf16.msra.mxu0 0
      %1914 = vmatprep.subr.bf16.mxu0 0
      %1915 = vmatpush1.bf16.msra.mxu0 0
      %1916 = vmatprep.subr.bf16.mxu0 0
      %1917 = vmatpush1.bf16.msra.mxu0 0
      %1918 = vmatprep.subr.bf16.mxu0 0
      %1919 = vmatpush1.bf16.msra.mxu0 0
      %1920 = vmatprep.subr.bf16.mxu0 0
      %1921 = vmatpush1.bf16.msra.mxu0 0
      %1922 = vmatprep.subr.bf16.mxu0 0
      %1923 = vmatpush1.bf16.msra.mxu0 0
      %1924 = vmatprep.mubr.bf16.mxu0 0
      %1925 = vmatmul.mubr.bf16.gmra.mrb[0].mxu0 %v1890
      %v1926 = vpop.f32.mrb[0].mxu0
      %v1927 = vadd.f32 %v1875, %v1926
      %v1928 = vpop.f32.mrb[0].mxu0
      %v1929 = vpop.f32.mrb[0].mxu0
      %v1930 = vpop.f32.mrb[0].mxu0
      %1931 = vdwg.mxu0
      %v1932 = vmax.f32 %v1927, 0.0
      %v1933 = vpack.c.bf16 %v1932, %v1932
      %v1934 = vld [vmem:[%s23] sm:$0xf]
      %v1935 = vld [vmem:[%s23 + $0x4] sm:$0xf]
      %v1936 = vld [vmem:[%s23 + $0x8] sm:$0xf]
      %v1937 = vld [vmem:[%s23 + $0xc] sm:$0xf]
      %v1938 = vld [vmem:[%s23 + $0x10] sm:$0xf]
      %v1939 = vld [vmem:[%s23 + $0x14] sm:$0xf]
      %v1940 = vld [vmem:[%s23 + $0x18] sm:$0xf]
      %v1941 = vld [vmem:[%s23 + $0x1c] sm:$0xf]
      %v1942 = vld [vmem:[%s24] sm:$0x1]
      %v1944 = vlaneseq
      %v1945 = vshrl.u32 %v1944, 7
      %v1946 = vsub.s32 0, %v1945
      %v1947 = vrot.slane %v1942, %v1946
      %v1957 = vunpack.c.l.b16 %v1934
      %v1958 = vunpack.c.l.b16 %v1935
      %v1959 = vunpack.c.l.b16 %v1936
      %v1960 = vunpack.c.l.b16 %v1937
      %v1961 = vunpack.c.l.b16 %v1938
      %v1962 = vunpack.c.l.b16 %v1939
      %v1963 = vunpack.c.l.b16 %v1940
      %v1964 = vunpack.c.l.b16 %v1941
      %v1965 = vpack.c.b16 %v1958, %v1957
      %v1966 = vpack.c.b16 %v1960, %v1959
      %v1967 = vpack.c.b16 %v1962, %v1961
      %v1968 = vpack.c.b16 %v1964, %v1963
      %vm1973 = vcmask 523264
      %v1975 = vsel %vm1973, %v1933, 0
      %1977 = vmatprep.subr.bf16.mxu0 0
      %1978 = vmatpush1.bf16.msra.mxu0 %v1965
      %1979 = vmatprep.subr.bf16.mxu0 0
      %1980 = vmatpush1.bf16.msra.mxu0 %v1966
      %1981 = vmatprep.subr.bf16.mxu0 0
      %1982 = vmatpush1.bf16.msra.mxu0 %v1967
      %1983 = vmatprep.subr.bf16.mxu0 0
      %1984 = vmatpush1.bf16.msra.mxu0 %v1968
      %1985 = vmatprep.subr.bf16.mxu0 0
      %1986 = vmatpush1.bf16.msra.mxu0 0
      %1987 = vmatprep.subr.bf16.mxu0 0
      %1988 = vmatpush1.bf16.msra.mxu0 0
      %1989 = vmatprep.subr.bf16.mxu0 0
      %1990 = vmatpush1.bf16.msra.mxu0 0
      %1991 = vmatprep.subr.bf16.mxu0 0
      %1992 = vmatpush1.bf16.msra.mxu0 0
      %1993 = vmatprep.subr.bf16.mxu0 0
      %1994 = vmatpush1.bf16.msra.mxu0 0
      %1995 = vmatprep.subr.bf16.mxu0 0
      %1996 = vmatpush1.bf16.msra.mxu0 0
      %1997 = vmatprep.subr.bf16.mxu0 0
      %1998 = vmatpush1.bf16.msra.mxu0 0
      %1999 = vmatprep.subr.bf16.mxu0 0
      %2000 = vmatpush1.bf16.msra.mxu0 0
      %2001 = vmatprep.subr.bf16.mxu0 0
      %2002 = vmatpush1.bf16.msra.mxu0 0
      %2003 = vmatprep.subr.bf16.mxu0 0
      %2004 = vmatpush1.bf16.msra.mxu0 0
      %2005 = vmatprep.subr.bf16.mxu0 0
      %2006 = vmatpush1.bf16.msra.mxu0 0
      %2007 = vmatprep.subr.bf16.mxu0 0
      %2008 = vmatpush1.bf16.msra.mxu0 0
      %2009 = vmatprep.mubr.bf16.mxu0 0
      %2010 = vmatmul.mubr.bf16.gmra.mrb[0].mxu0 %v1975
      %v2011 = vpop.f32.mrb[0].mxu0
      %v2012 = vadd.f32 %v1947, %v2011
      %v2013 = vpop.f32.mrb[0].mxu0
      %v2014 = vpop.f32.mrb[0].mxu0
      %v2015 = vpop.f32.mrb[0].mxu0
      %2016 = vdwg.mxu0
      %v2017 = vadd.f32 %v2012, %v1864
      %v2018 = vsel %vm957, %v2017, 0.0
      %2019 = vadd.xlane.f32.xlu0 %v2018
      %v2020 = vpop.xlane.xlu0 %2019
      %v2021 = vmul.f32 %v2020, %v1370
      %v2022 = vsub.f32 %v2017, %v2021
      %v2023 = vmul.f32 %v2022, %v2022
      %v2024 = vsel %vm957, %v2023, 0.0
      %2025 = vadd.xlane.f32.xlu0 %v2024
      %v2026 = vpop.xlane.xlu0 %2025
      %v2027 = vmul.f32 %v2026, %v1370
      %v2028 = vadd.f32 %v2027, 1e-05
      %v2029 = vrsqrt.pop %v2028
      %v2030 = vmul.f32 %v2022, %v2029
      %v2031 = vld [vmem:[%s25] sm:$0x1]
      %v2033 = vlaneseq
      %v2034 = vshrl.u32 %v2033, 7
      %v2035 = vsub.s32 0, %v2034
      %v2036 = vrot.slane %v2031, %v2035
      %v2038 = vmul.f32 %v2030, %v2036
      %v2039 = vld [vmem:[%s26] sm:$0x1]
      %v2041 = vlaneseq
      %v2042 = vshrl.u32 %v2041, 7
      %v2043 = vsub.s32 0, %v2042
      %v2044 = vrot.slane %v2039, %v2043
      %v2046 = vadd.f32 %v2038, %v2044
      %2047 = vst.msk [vmem:[%s909] sm:$0xff] %vm957, %v2046
      %p2048 = scmp.lt.s32.totalorder %s42, 1
      %s2049 = scalar_select %p2048, %s42, 1
      %p2050 = scmp.lt.s32.totalorder %s43, 0
      %s2051 = scalar_select %p2050, %s43, 0
      %s2052 = sadd.s32 %s2051, %s2049
      %s2053 = smul.addr %s2052, 8
      %s2054 = scalar_lea.vmem %s27, %s2053
      // Predicated region
      $region129: #{decoder_forward.3} parent=127 // pred_check
        %p2055 = pneg %p664
      $region130: #{decoder_forward.3} parent=127 // pred_check_branch
        %2057 = sbr.rel (%p2055) target = $region132
      $region131: #{decoder_forward.3} parent=127 // pred_region
        _
      $region132: #{decoder_forward.3} parent=127 // pred_fallthru
        _
    $region128: #{decoder_forward.3} parent=5 // pred_fallthru
      _
    %p2058 = scmp.le.s32.totalorder 2, %s33
    // Predicated region
    $region133: #{decoder_forward.3} parent=5 // pred_check
      %p2059 = pneg %p2058
    $region134: #{decoder_forward.3} parent=5 // pred_check_branch
      %2061 = sbr.rel (%p2059) target = $region136
    $region135: #{decoder_forward.3} parent=5 // pred_region
      %s2062 = ssub.s32 %s33, 2
      // Predicated region
      $region137: #{decoder_forward.3} parent=135 // pred_check
        %p2063 = pneg %p670
      $region138: #{decoder_forward.3} parent=135 // pred_check_branch
        %2065 = sbr.rel (%p2063) target = $region140
      $region139: #{decoder_forward.3} parent=135 // pred_region
        %p2066 = scmp.lt.s32.totalorder %s44, 1
        %s2067 = scalar_select %p2066, %s44, 1
        %p2068 = scmp.lt.s32.totalorder %s45, 0
        %s2069 = scalar_select %p2068, %s45, 0
        %s2070 = sadd.s32 %s2069, %s2067
        %s2071 = smul.addr %s2070, 8
        %s2072 = scalar_lea.vmem %s27, %s2071
      $region140: #{decoder_forward.3} parent=135 // pred_fallthru
        _
    $region136: #{decoder_forward.3} parent=5 // pred_fallthru
      _
  $region6: #{decoder_forward.3} parent=0 // loop_footer
    %s37 = sadd.s32 1, %s33
  $region7: #{decoder_forward.3} parent=0 // loop_footer_branch
    %32 = sbr.rel target = $region3
  $region8: #{decoder_forward.3} parent=0 // loop_exit
    _

// kernel: decoder_forward.4
$region0: #{decoder_forward.4}
  #allocation0 [shape = 'u32[]', space=smem, size = 0x4, offset = 0x4, fixed_abs, tag = 'smem constant byte address 0x4 - core index']
  #allocation1 [shape = 'u32[144,128]{1,0:T(1,128)}', space=vmem, size = 0x12000, scoped, tag = 'internal scratch']
  %s0 = inlined_call_operand.vmem [shape: f32[2,8,32], index: 0, kind: input, shape index: {}, may-alias: {0,1}]
  %s1 = inlined_call_operand.vmem [shape: f32[2,8,32], index: 1, kind: input, shape index: {}, may-alias: {0,1}]
  %s2 = inlined_call_operand.vmem [shape: f32[2,10,32], index: 2, kind: input, shape index: {}]
  %s3 = inlined_call_operand.vmem [shape: f32[2,1,8], index: 3, kind: input, shape index: {}]
  %s4 = inlined_call_operand.vmem [shape: f32[2,1,10], index: 4, kind: input, shape index: {}]
  %s5 = inlined_call_operand.vmem [shape: bf16[32,32], index: 5, kind: input, shape index: {}]
  %s6 = inlined_call_operand.vmem [shape: f32[1,32], index: 6, kind: input, shape index: {}]
  %s7 = inlined_call_operand.vmem [shape: bf16[32,64], index: 7, kind: input, shape index: {}]
  %s8 = inlined_call_operand.vmem [shape: f32[1,64], index: 8, kind: input, shape index: {}]
  %s9 = inlined_call_operand.vmem [shape: bf16[32,32], index: 9, kind: input, shape index: {}]
  %s10 = inlined_call_operand.vmem [shape: f32[1,32], index: 10, kind: input, shape index: {}]
  %s11 = inlined_call_operand.vmem [shape: f32[1,32], index: 11, kind: input, shape index: {}]
  %s12 = inlined_call_operand.vmem [shape: f32[1,32], index: 12, kind: input, shape index: {}]
  %s13 = inlined_call_operand.vmem [shape: bf16[32,32], index: 13, kind: input, shape index: {}]
  %s14 = inlined_call_operand.vmem [shape: f32[1,32], index: 14, kind: input, shape index: {}]
  %s15 = inlined_call_operand.vmem [shape: bf16[32,64], index: 15, kind: input, shape index: {}]
  %s16 = inlined_call_operand.vmem [shape: f32[1,64], index: 16, kind: input, shape index: {}]
  %s17 = inlined_call_operand.vmem [shape: bf16[32,32], index: 17, kind: input, shape index: {}]
  %s18 = inlined_call_operand.vmem [shape: f32[1,32], index: 18, kind: input, shape index: {}]
  %s19 = inlined_call_operand.vmem [shape: f32[1,32], index: 19, kind: input, shape index: {}]
  %s20 = inlined_call_operand.hbm [shape: f32[1,32], index: 20, kind: input, shape index: {}]
  %s21 = inlined_call_operand.vmem [shape: bf16[32,64], index: 21, kind: input, shape index: {}]
  %s22 = inlined_call_operand.hbm [shape: f32[1,64], index: 22, kind: input, shape index: {}]
  %s23 = inlined_call_operand.vmem [shape: bf16[64,32], index: 23, kind: input, shape index: {}]
  %s24 = inlined_call_operand.hbm [shape: f32[1,32], index: 24, kind: input, shape index: {}]
  %s25 = inlined_call_operand.hbm [shape: f32[1,32], index: 25, kind: input, shape index: {}]
  %s26 = inlined_call_operand.hbm [shape: f32[1,32], index: 26, kind: input, shape index: {}]
  %s27 = inlined_call_operand.vmem [shape: f32[2,8,32], index: 27, kind: output, shape index: {}]
  %s28 = sld [smem:[#allocation0]]
  $region161: #{decoder_forward.4} parent=0
    _
  %s30 = ssub.s32 1, %s28
  %s31 = scalar_select 0, %s30, %s28
  $region1: #{decoder_forward.4} parent=0
    #allocation2 [shape = 'u8[512]{0}', space=vmem, size = 0x400, scoped, tag = 'input window, operand 20, single buffered']
    #allocation3 [shape = 's32[2]{0}', space=sflag, size = 0x8, scoped, tag = 'scoped memory for decoder_forward.4']
    #allocation4 [shape = 'u8[512]{0}', space=vmem, size = 0x400, scoped, tag = 'input window, operand 22, single buffered']
    #allocation5 [shape = 's32[1]{0}', space=sflag, size = 0x4, scoped, tag = 'scoped memory for decoder_forward.4']
    #allocation6 [shape = 'u8[512]{0}', space=vmem, size = 0x400, scoped, tag = 'input window, operand 24, single buffered']
    #allocation7 [shape = 'u8[512]{0}', space=vmem, size = 0x400, scoped, tag = 'input window, operand 25, single buffered']
    #allocation8 [shape = 's32[1]{0}', space=sflag, size = 0x4, scoped, tag = 'scoped memory for decoder_forward.4']
    #allocation9 [shape = 'u8[512]{0}', space=vmem, size = 0x400, scoped, tag = 'input window, operand 26, single buffered']
    %32 = vsyncpa [#allocation3], 0
    %33 = vsyncpa [#allocation5], 0
    %34 = vsyncpa [#allocation8], 0
    loop: start=0, step=1, limit=4
    $region2: #{decoder_forward.4} parent=1 // loop_pre_header
      _
    $region3: #{decoder_forward.4} parent=1 // loop_header
      %s36 = sphi 0, %s40
      %p37 = scmp.ge.s32.totalorder %s36, 4
      %s43 = sphi 0, %s55
      %s44 = sphi 0, %s51
      %s45 = sphi 0, %s43
      %s46 = sphi 0, %s44
      %s47 = sphi 0, %s45
      %s48 = sphi 0, %s46
      %s60 = sphi 0, %s62
      %s63 = sphi 0, %s60
      %s64 = sphi 0, %s63
      %s80 = sphi 0, %s64
      %s86 = sphi 0, %s88
      %s89 = sphi 0, %s86
      %s90 = sphi 0, %s89
      %s106 = sphi 0, %s90
      %s112 = sphi 0, %s114
      %s115 = sphi 0, %s112
      %s116 = sphi 0, %s115
      %s132 = sphi 0, %s116
      %s138 = sphi 0, %s140
      %s141 = sphi 0, %s138
      %s142 = sphi 0, %s141
      %s158 = sphi 0, %s142
      %s164 = sphi 0, %s166
      %s167 = sphi 0, %s164
      %s168 = sphi 0, %s167
      %s184 = sphi 0, %s168
      %s188 = sphi 0, %s188
      %s190 = sphi 0, %s188
      %s191 = sphi 0, %s190
      %s205 = sphi 0, %s191
      %s209 = sphi 0, %s209
      %s211 = sphi 0, %s209
      %s212 = sphi 0, %s211
      %s226 = sphi 0, %s212
      %s230 = sphi 0, %s230
      %s232 = sphi 0, %s230
      %s233 = sphi 0, %s232
      %s247 = sphi 0, %s233
      %s251 = sphi 0, %s251
      %s253 = sphi 0, %s251
      %s254 = sphi 0, %s253
      %s268 = sphi 0, %s254
      %s272 = sphi 0, %s272
      %s274 = sphi 0, %s272
      %s275 = sphi 0, %s274
      %s289 = sphi 0, %s275
      %s293 = sphi 0, %s293
      %s295 = sphi 0, %s293
      %s296 = sphi 0, %s295
      %s310 = sphi 0, %s296
      %s314 = sphi 0, %s314
      %s316 = sphi 0, %s314
      %s317 = sphi 0, %s316
      %s331 = sphi 0, %s317
      %s335 = sphi 0, %s335
      %s337 = sphi 0, %s335
      %s338 = sphi 0, %s337
      %s352 = sphi 0, %s338
      %s356 = sphi 0, %s356
      %s358 = sphi 0, %s356
      %s359 = sphi 0, %s358
      %s373 = sphi 0, %s359
      %s377 = sphi 0, %s377
      %s379 = sphi 0, %s377
      %s380 = sphi 0, %s379
      %s394 = sphi 0, %s380
      %s398 = sphi 0, %s398
      %s400 = sphi 0, %s398
      %s401 = sphi 0, %s400
      %s415 = sphi 0, %s401
      %s419 = sphi 0, %s419
      %s421 = sphi 0, %s419
      %s422 = sphi 0, %s421
      %s436 = sphi 0, %s422
      %s440 = sphi 0, %s440
      %s442 = sphi 0, %s440
      %s443 = sphi 0, %s442
      %s457 = sphi 0, %s443
      %s461 = sphi 0, %s461
      %s463 = sphi 0, %s461
      %s464 = sphi 0, %s463
      %s478 = sphi 0, %s464
      %s482 = sphi 0, %s482
      %s484 = sphi 0, %s482
      %s485 = sphi 0, %s484
      %s499 = sphi 0, %s485
      %s503 = sphi 0, %s503
      %s505 = sphi 0, %s503
      %s506 = sphi 0, %s505
      %s520 = sphi 0, %s506
      %s524 = sphi 0, %s524
      %s526 = sphi 0, %s524
      %s527 = sphi 0, %s526
      %s541 = sphi 0, %s527
      %s545 = sphi 0, %s545
      %s547 = sphi 0, %s545
      %s548 = sphi 0, %s547
      %s562 = sphi 0, %s548
      %s566 = sphi 0, %s566
      %s568 = sphi 0, %s566
      %s569 = sphi 0, %s568
      %s583 = sphi 0, %s569
      %s587 = sphi 0, %s587
      %s589 = sphi 0, %s587
      %s590 = sphi 0, %s589
      %s604 = sphi 0, %s590
      %s608 = sphi 0, %s608
      %s610 = sphi 0, %s608
      %s611 = sphi 0, %s610
      %s625 = sphi 0, %s611
      %s629 = sphi 0, %s629
      %s631 = sphi 0, %s629
      %s632 = sphi 0, %s631
      %s646 = sphi 0, %s632
      %s654 = sphi 0, %s656
      %s657 = sphi 0, %s654
      %s658 = sphi 0, %s657
      %s674 = sphi 0, %s658
    $region4: #{decoder_forward.4} parent=1 // loop_header_branch
      %39 = sbr.rel (%p37) target = $region8
    $region5: #{decoder_forward.4} parent=1 // loop_body
      %s41 = ssub.s32 %s36, 1
      %s42 = ssub.s32 %s36, 2
      %s49 = sadd.s32 1, %s44
      %p50 = scmp.ge.s32.totalorder %s49, 1
      %s51 = scalar_select %p50, 0, %s49
      %s52 = sadd.s32 1, %s43
      %s53 = scalar_select %p50, %s52, %s43
      %p54 = scmp.ge.s32.totalorder %s53, 2
      %s55 = scalar_select %p54, 0, %s53
      %s56 = ssub.s32 %s43, %s55
      %s57 = ssub.s32 %s44, %s51
      %s58 = sor.u32 %s56, %s57
      %p59 = scmp.eq.s32.totalorder %s58, 0
      %s61 = sadd.s32 %s60, 1
      %s62 = scalar_select %p59, %s60, %s61
      %p65 = pneg %p59
      %p66 = scmp.eq.s32.totalorder %s36, 1
      %p67 = por %p65, %p66
      %p68 = scmp.ne.s32.totalorder %s60, %s63
      %p69 = scmp.eq.s32.totalorder %s36, 0
      %p70 = por %p68, %p69
      %p71 = scmp.ne.s32.totalorder %s60, %s63
      %p72 = scmp.eq.s32.totalorder %s41, 1
      %p73 = por %p71, %p72
      %p74 = scmp.ne.s32.totalorder %s63, %s64
      %p75 = scmp.eq.s32.totalorder %s41, 0
      %p76 = por %p74, %p75
      %p77 = scmp.ne.s32.totalorder %s63, %s64
      %p78 = scmp.eq.s32.totalorder %s42, 1
      %p79 = por %p77, %p78
      %p81 = scmp.ne.s32.totalorder %s64, %s80
      %p82 = scmp.eq.s32.totalorder %s42, 0
      %p83 = por %p81, %p82
      %s84 = ssub.s32 %s43, %s55
      %p85 = scmp.eq.s32.totalorder %s84, 0
      %s87 = sadd.s32 %s86, 1
      %s88 = scalar_select %p85, %s86, %s87
      %p91 = pneg %p85
      %p92 = scmp.eq.s32.totalorder %s36, 1
      %p93 = por %p91, %p92
      %p94 = scmp.ne.s32.totalorder %s86, %s89
      %p95 = scmp.eq.s32.totalorder %s36, 0
      %p96 = por %p94, %p95
      %p97 = scmp.ne.s32.totalorder %s86, %s89
      %p98 = scmp.eq.s32.totalorder %s41, 1
      %p99 = por %p97, %p98
      %p100 = scmp.ne.s32.totalorder %s89, %s90
      %p101 = scmp.eq.s32.totalorder %s41, 0
      %p102 = por %p100, %p101
      %p103 = scmp.ne.s32.totalorder %s89, %s90
      %p104 = scmp.eq.s32.totalorder %s42, 1
      %p105 = por %p103, %p104
      %p107 = scmp.ne.s32.totalorder %s90, %s106
      %p108 = scmp.eq.s32.totalorder %s42, 0
      %p109 = por %p107, %p108
      %s110 = ssub.s32 %s43, %s55
      %p111 = scmp.eq.s32.totalorder %s110, 0
      %s113 = sadd.s32 %s112, 1
      %s114 = scalar_select %p111, %s112, %s113
      %p117 = pneg %p111
      %p118 = scmp.eq.s32.totalorder %s36, 1
      %p119 = por %p117, %p118
      %p120 = scmp.ne.s32.totalorder %s112, %s115
      %p121 = scmp.eq.s32.totalorder %s36, 0
      %p122 = por %p120, %p121
      %p123 = scmp.ne.s32.totalorder %s112, %s115
      %p124 = scmp.eq.s32.totalorder %s41, 1
      %p125 = por %p123, %p124
      %p126 = scmp.ne.s32.totalorder %s115, %s116
      %p127 = scmp.eq.s32.totalorder %s41, 0
      %p128 = por %p126, %p127
      %p129 = scmp.ne.s32.totalorder %s115, %s116
      %p130 = scmp.eq.s32.totalorder %s42, 1
      %p131 = por %p129, %p130
      %p133 = scmp.ne.s32.totalorder %s116, %s132
      %p134 = scmp.eq.s32.totalorder %s42, 0
      %p135 = por %p133, %p134
      %s136 = ssub.s32 %s43, %s55
      %p137 = scmp.eq.s32.totalorder %s136, 0
      %s139 = sadd.s32 %s138, 1
      %s140 = scalar_select %p137, %s138, %s139
      %p143 = pneg %p137
      %p144 = scmp.eq.s32.totalorder %s36, 1
      %p145 = por %p143, %p144
      %p146 = scmp.ne.s32.totalorder %s138, %s141
      %p147 = scmp.eq.s32.totalorder %s36, 0
      %p148 = por %p146, %p147
      %p149 = scmp.ne.s32.totalorder %s138, %s141
      %p150 = scmp.eq.s32.totalorder %s41, 1
      %p151 = por %p149, %p150
      %p152 = scmp.ne.s32.totalorder %s141, %s142
      %p153 = scmp.eq.s32.totalorder %s41, 0
      %p154 = por %p152, %p153
      %p155 = scmp.ne.s32.totalorder %s141, %s142
      %p156 = scmp.eq.s32.totalorder %s42, 1
      %p157 = por %p155, %p156
      %p159 = scmp.ne.s32.totalorder %s142, %s158
      %p160 = scmp.eq.s32.totalorder %s42, 0
      %p161 = por %p159, %p160
      %s162 = ssub.s32 %s43, %s55
      %p163 = scmp.eq.s32.totalorder %s162, 0
      %s165 = sadd.s32 %s164, 1
      %s166 = scalar_select %p163, %s164, %s165
      %p169 = pneg %p163
      %p170 = scmp.eq.s32.totalorder %s36, 1
      %p171 = por %p169, %p170
      %p172 = scmp.ne.s32.totalorder %s164, %s167
      %p173 = scmp.eq.s32.totalorder %s36, 0
      %p174 = por %p172, %p173
      %p175 = scmp.ne.s32.totalorder %s164, %s167
      %p176 = scmp.eq.s32.totalorder %s41, 1
      %p177 = por %p175, %p176
      %p178 = scmp.ne.s32.totalorder %s167, %s168
      %p179 = scmp.eq.s32.totalorder %s41, 0
      %p180 = por %p178, %p179
      %p181 = scmp.ne.s32.totalorder %s167, %s168
      %p182 = scmp.eq.s32.totalorder %s42, 1
      %p183 = por %p181, %p182
      %p185 = scmp.ne.s32.totalorder %s168, %s184
      %p186 = scmp.eq.s32.totalorder %s42, 0
      %p187 = por %p185, %p186
      %s189 = sadd.s32 %s188, 1
      %p192 = scmp.eq.s32.totalorder %s36, 1
      %p193 = scmp.ne.s32.totalorder %s188, %s190
      %p194 = scmp.eq.s32.totalorder %s36, 0
      %p195 = por %p193, %p194
      %p196 = scmp.ne.s32.totalorder %s188, %s190
      %p197 = scmp.eq.s32.totalorder %s41, 1
      %p198 = por %p196, %p197
      %p199 = scmp.ne.s32.totalorder %s190, %s191
      %p200 = scmp.eq.s32.totalorder %s41, 0
      %p201 = por %p199, %p200
      %p202 = scmp.ne.s32.totalorder %s190, %s191
      %p203 = scmp.eq.s32.totalorder %s42, 1
      %p204 = por %p202, %p203
      %p206 = scmp.ne.s32.totalorder %s191, %s205
      %p207 = scmp.eq.s32.totalorder %s42, 0
      %p208 = por %p206, %p207
      %s210 = sadd.s32 %s209, 1
      %p213 = scmp.eq.s32.totalorder %s36, 1
      %p214 = scmp.ne.s32.totalorder %s209, %s211
      %p215 = scmp.eq.s32.totalorder %s36, 0
      %p216 = por %p214, %p215
      %p217 = scmp.ne.s32.totalorder %s209, %s211
      %p218 = scmp.eq.s32.totalorder %s41, 1
      %p219 = por %p217, %p218
      %p220 = scmp.ne.s32.totalorder %s211, %s212
      %p221 = scmp.eq.s32.totalorder %s41, 0
      %p222 = por %p220, %p221
      %p223 = scmp.ne.s32.totalorder %s211, %s212
      %p224 = scmp.eq.s32.totalorder %s42, 1
      %p225 = por %p223, %p224
      %p227 = scmp.ne.s32.totalorder %s212, %s226
      %p228 = scmp.eq.s32.totalorder %s42, 0
      %p229 = por %p227, %p228
      %s231 = sadd.s32 %s230, 1
      %p234 = scmp.eq.s32.totalorder %s36, 1
      %p235 = scmp.ne.s32.totalorder %s230, %s232
      %p236 = scmp.eq.s32.totalorder %s36, 0
      %p237 = por %p235, %p236
      %p238 = scmp.ne.s32.totalorder %s230, %s232
      %p239 = scmp.eq.s32.totalorder %s41, 1
      %p240 = por %p238, %p239
      %p241 = scmp.ne.s32.totalorder %s232, %s233
      %p242 = scmp.eq.s32.totalorder %s41, 0
      %p243 = por %p241, %p242
      %p244 = scmp.ne.s32.totalorder %s232, %s233
      %p245 = scmp.eq.s32.totalorder %s42, 1
      %p246 = por %p244, %p245
      %p248 = scmp.ne.s32.totalorder %s233, %s247
      %p249 = scmp.eq.s32.totalorder %s42, 0
      %p250 = por %p248, %p249
      %s252 = sadd.s32 %s251, 1
      %p255 = scmp.eq.s32.totalorder %s36, 1
      %p256 = scmp.ne.s32.totalorder %s251, %s253
      %p257 = scmp.eq.s32.totalorder %s36, 0
      %p258 = por %p256, %p257
      %p259 = scmp.ne.s32.totalorder %s251, %s253
      %p260 = scmp.eq.s32.totalorder %s41, 1
      %p261 = por %p259, %p260
      %p262 = scmp.ne.s32.totalorder %s253, %s254
      %p263 = scmp.eq.s32.totalorder %s41, 0
      %p264 = por %p262, %p263
      %p265 = scmp.ne.s32.totalorder %s253, %s254
      %p266 = scmp.eq.s32.totalorder %s42, 1
      %p267 = por %p265, %p266
      %p269 = scmp.ne.s32.totalorder %s254, %s268
      %p270 = scmp.eq.s32.totalorder %s42, 0
      %p271 = por %p269, %p270
      %s273 = sadd.s32 %s272, 1
      %p276 = scmp.eq.s32.totalorder %s36, 1
      %p277 = scmp.ne.s32.totalorder %s272, %s274
      %p278 = scmp.eq.s32.totalorder %s36, 0
      %p279 = por %p277, %p278
      %p280 = scmp.ne.s32.totalorder %s272, %s274
      %p281 = scmp.eq.s32.totalorder %s41, 1
      %p282 = por %p280, %p281
      %p283 = scmp.ne.s32.totalorder %s274, %s275
      %p284 = scmp.eq.s32.totalorder %s41, 0
      %p285 = por %p283, %p284
      %p286 = scmp.ne.s32.totalorder %s274, %s275
      %p287 = scmp.eq.s32.totalorder %s42, 1
      %p288 = por %p286, %p287
      %p290 = scmp.ne.s32.totalorder %s275, %s289
      %p291 = scmp.eq.s32.totalorder %s42, 0
      %p292 = por %p290, %p291
      %s294 = sadd.s32 %s293, 1
      %p297 = scmp.eq.s32.totalorder %s36, 1
      %p298 = scmp.ne.s32.totalorder %s293, %s295
      %p299 = scmp.eq.s32.totalorder %s36, 0
      %p300 = por %p298, %p299
      %p301 = scmp.ne.s32.totalorder %s293, %s295
      %p302 = scmp.eq.s32.totalorder %s41, 1
      %p303 = por %p301, %p302
      %p304 = scmp.ne.s32.totalorder %s295, %s296
      %p305 = scmp.eq.s32.totalorder %s41, 0
      %p306 = por %p304, %p305
      %p307 = scmp.ne.s32.totalorder %s295, %s296
      %p308 = scmp.eq.s32.totalorder %s42, 1
      %p309 = por %p307, %p308
      %p311 = scmp.ne.s32.totalorder %s296, %s310
      %p312 = scmp.eq.s32.totalorder %s42, 0
      %p313 = por %p311, %p312
      %s315 = sadd.s32 %s314, 1
      %p318 = scmp.eq.s32.totalorder %s36, 1
      %p319 = scmp.ne.s32.totalorder %s314, %s316
      %p320 = scmp.eq.s32.totalorder %s36, 0
      %p321 = por %p319, %p320
      %p322 = scmp.ne.s32.totalorder %s314, %s316
      %p323 = scmp.eq.s32.totalorder %s41, 1
      %p324 = por %p322, %p323
      %p325 = scmp.ne.s32.totalorder %s316, %s317
      %p326 = scmp.eq.s32.totalorder %s41, 0
      %p327 = por %p325, %p326
      %p328 = scmp.ne.s32.totalorder %s316, %s317
      %p329 = scmp.eq.s32.totalorder %s42, 1
      %p330 = por %p328, %p329
      %p332 = scmp.ne.s32.totalorder %s317, %s331
      %p333 = scmp.eq.s32.totalorder %s42, 0
      %p334 = por %p332, %p333
      %s336 = sadd.s32 %s335, 1
      %p339 = scmp.eq.s32.totalorder %s36, 1
      %p340 = scmp.ne.s32.totalorder %s335, %s337
      %p341 = scmp.eq.s32.totalorder %s36, 0
      %p342 = por %p340, %p341
      %p343 = scmp.ne.s32.totalorder %s335, %s337
      %p344 = scmp.eq.s32.totalorder %s41, 1
      %p345 = por %p343, %p344
      %p346 = scmp.ne.s32.totalorder %s337, %s338
      %p347 = scmp.eq.s32.totalorder %s41, 0
      %p348 = por %p346, %p347
      %p349 = scmp.ne.s32.totalorder %s337, %s338
      %p350 = scmp.eq.s32.totalorder %s42, 1
      %p351 = por %p349, %p350
      %p353 = scmp.ne.s32.totalorder %s338, %s352
      %p354 = scmp.eq.s32.totalorder %s42, 0
      %p355 = por %p353, %p354
      %s357 = sadd.s32 %s356, 1
      %p360 = scmp.eq.s32.totalorder %s36, 1
      %p361 = scmp.ne.s32.totalorder %s356, %s358
      %p362 = scmp.eq.s32.totalorder %s36, 0
      %p363 = por %p361, %p362
      %p364 = scmp.ne.s32.totalorder %s356, %s358
      %p365 = scmp.eq.s32.totalorder %s41, 1
      %p366 = por %p364, %p365
      %p367 = scmp.ne.s32.totalorder %s358, %s359
      %p368 = scmp.eq.s32.totalorder %s41, 0
      %p369 = por %p367, %p368
      %p370 = scmp.ne.s32.totalorder %s358, %s359
      %p371 = scmp.eq.s32.totalorder %s42, 1
      %p372 = por %p370, %p371
      %p374 = scmp.ne.s32.totalorder %s359, %s373
      %p375 = scmp.eq.s32.totalorder %s42, 0
      %p376 = por %p374, %p375
      %s378 = sadd.s32 %s377, 1
      %p381 = scmp.eq.s32.totalorder %s36, 1
      %p382 = scmp.ne.s32.totalorder %s377, %s379
      %p383 = scmp.eq.s32.totalorder %s36, 0
      %p384 = por %p382, %p383
      %p385 = scmp.ne.s32.totalorder %s377, %s379
      %p386 = scmp.eq.s32.totalorder %s41, 1
      %p387 = por %p385, %p386
      %p388 = scmp.ne.s32.totalorder %s379, %s380
      %p389 = scmp.eq.s32.totalorder %s41, 0
      %p390 = por %p388, %p389
      %p391 = scmp.ne.s32.totalorder %s379, %s380
      %p392 = scmp.eq.s32.totalorder %s42, 1
      %p393 = por %p391, %p392
      %p395 = scmp.ne.s32.totalorder %s380, %s394
      %p396 = scmp.eq.s32.totalorder %s42, 0
      %p397 = por %p395, %p396
      %s399 = sadd.s32 %s398, 1
      %p402 = scmp.eq.s32.totalorder %s36, 1
      %p403 = scmp.ne.s32.totalorder %s398, %s400
      %p404 = scmp.eq.s32.totalorder %s36, 0
      %p405 = por %p403, %p404
      %p406 = scmp.ne.s32.totalorder %s398, %s400
      %p407 = scmp.eq.s32.totalorder %s41, 1
      %p408 = por %p406, %p407
      %p409 = scmp.ne.s32.totalorder %s400, %s401
      %p410 = scmp.eq.s32.totalorder %s41, 0
      %p411 = por %p409, %p410
      %p412 = scmp.ne.s32.totalorder %s400, %s401
      %p413 = scmp.eq.s32.totalorder %s42, 1
      %p414 = por %p412, %p413
      %p416 = scmp.ne.s32.totalorder %s401, %s415
      %p417 = scmp.eq.s32.totalorder %s42, 0
      %p418 = por %p416, %p417
      %s420 = sadd.s32 %s419, 1
      %p423 = scmp.eq.s32.totalorder %s36, 1
      %p424 = scmp.ne.s32.totalorder %s419, %s421
      %p425 = scmp.eq.s32.totalorder %s36, 0
      %p426 = por %p424, %p425
      %p427 = scmp.ne.s32.totalorder %s419, %s421
      %p428 = scmp.eq.s32.totalorder %s41, 1
      %p429 = por %p427, %p428
      %p430 = scmp.ne.s32.totalorder %s421, %s422
      %p431 = scmp.eq.s32.totalorder %s41, 0
      %p432 = por %p430, %p431
      %p433 = scmp.ne.s32.totalorder %s421, %s422
      %p434 = scmp.eq.s32.totalorder %s42, 1
      %p435 = por %p433, %p434
      %p437 = scmp.ne.s32.totalorder %s422, %s436
      %p438 = scmp.eq.s32.totalorder %s42, 0
      %p439 = por %p437, %p438
      %s441 = sadd.s32 %s440, 1
      %p444 = scmp.eq.s32.totalorder %s36, 1
      %p445 = scmp.ne.s32.totalorder %s440, %s442
      %p446 = scmp.eq.s32.totalorder %s36, 0
      %p447 = por %p445, %p446
      %p448 = scmp.ne.s32.totalorder %s440, %s442
      %p449 = scmp.eq.s32.totalorder %s41, 1
      %p450 = por %p448, %p449
      %p451 = scmp.ne.s32.totalorder %s442, %s443
      %p452 = scmp.eq.s32.totalorder %s41, 0
      %p453 = por %p451, %p452
      %p454 = scmp.ne.s32.totalorder %s442, %s443
      %p455 = scmp.eq.s32.totalorder %s42, 1
      %p456 = por %p454, %p455
      %p458 = scmp.ne.s32.totalorder %s443, %s457
      %p459 = scmp.eq.s32.totalorder %s42, 0
      %p460 = por %p458, %p459
      %s462 = sadd.s32 %s461, 1
      %p465 = scmp.eq.s32.totalorder %s36, 1
      %p466 = scmp.ne.s32.totalorder %s461, %s463
      %p467 = scmp.eq.s32.totalorder %s36, 0
      %p468 = por %p466, %p467
      %p469 = scmp.ne.s32.totalorder %s461, %s463
      %p470 = scmp.eq.s32.totalorder %s41, 1
      %p471 = por %p469, %p470
      %p472 = scmp.ne.s32.totalorder %s463, %s464
      %p473 = scmp.eq.s32.totalorder %s41, 0
      %p474 = por %p472, %p473
      %p475 = scmp.ne.s32.totalorder %s463, %s464
      %p476 = scmp.eq.s32.totalorder %s42, 1
      %p477 = por %p475, %p476
      %p479 = scmp.ne.s32.totalorder %s464, %s478
      %p480 = scmp.eq.s32.totalorder %s42, 0
      %p481 = por %p479, %p480
      %s483 = sadd.s32 %s482, 1
      %p486 = scmp.eq.s32.totalorder %s36, 1
      %p487 = scmp.ne.s32.totalorder %s482, %s484
      %p488 = scmp.eq.s32.totalorder %s36, 0
      %p489 = por %p487, %p488
      %p490 = scmp.ne.s32.totalorder %s482, %s484
      %p491 = scmp.eq.s32.totalorder %s41, 1
      %p492 = por %p490, %p491
      %p493 = scmp.ne.s32.totalorder %s484, %s485
      %p494 = scmp.eq.s32.totalorder %s41, 0
      %p495 = por %p493, %p494
      %p496 = scmp.ne.s32.totalorder %s484, %s485
      %p497 = scmp.eq.s32.totalorder %s42, 1
      %p498 = por %p496, %p497
      %p500 = scmp.ne.s32.totalorder %s485, %s499
      %p501 = scmp.eq.s32.totalorder %s42, 0
      %p502 = por %p500, %p501
      %s504 = sadd.s32 %s503, 1
      %p507 = scmp.eq.s32.totalorder %s36, 1
      %p508 = scmp.ne.s32.totalorder %s503, %s505
      %p509 = scmp.eq.s32.totalorder %s36, 0
      %p510 = por %p508, %p509
      %p511 = scmp.ne.s32.totalorder %s503, %s505
      %p512 = scmp.eq.s32.totalorder %s41, 1
      %p513 = por %p511, %p512
      %p514 = scmp.ne.s32.totalorder %s505, %s506
      %p515 = scmp.eq.s32.totalorder %s41, 0
      %p516 = por %p514, %p515
      %p517 = scmp.ne.s32.totalorder %s505, %s506
      %p518 = scmp.eq.s32.totalorder %s42, 1
      %p519 = por %p517, %p518
      %p521 = scmp.ne.s32.totalorder %s506, %s520
      %p522 = scmp.eq.s32.totalorder %s42, 0
      %p523 = por %p521, %p522
      %s525 = sadd.s32 %s524, 1
      %p528 = scmp.eq.s32.totalorder %s36, 1
      %p529 = scmp.ne.s32.totalorder %s524, %s526
      %p530 = scmp.eq.s32.totalorder %s36, 0
      %p531 = por %p529, %p530
      %p532 = scmp.ne.s32.totalorder %s524, %s526
      %p533 = scmp.eq.s32.totalorder %s41, 1
      %p534 = por %p532, %p533
      %p535 = scmp.ne.s32.totalorder %s526, %s527
      %p536 = scmp.eq.s32.totalorder %s41, 0
      %p537 = por %p535, %p536
      %p538 = scmp.ne.s32.totalorder %s526, %s527
      %p539 = scmp.eq.s32.totalorder %s42, 1
      %p540 = por %p538, %p539
      %p542 = scmp.ne.s32.totalorder %s527, %s541
      %p543 = scmp.eq.s32.totalorder %s42, 0
      %p544 = por %p542, %p543
      %s546 = sadd.s32 %s545, 1
      %p549 = scmp.eq.s32.totalorder %s36, 1
      %p550 = scmp.ne.s32.totalorder %s545, %s547
      %p551 = scmp.eq.s32.totalorder %s36, 0
      %p552 = por %p550, %p551
      %p553 = scmp.ne.s32.totalorder %s545, %s547
      %p554 = scmp.eq.s32.totalorder %s41, 1
      %p555 = por %p553, %p554
      %p556 = scmp.ne.s32.totalorder %s547, %s548
      %p557 = scmp.eq.s32.totalorder %s41, 0
      %p558 = por %p556, %p557
      %p559 = scmp.ne.s32.totalorder %s547, %s548
      %p560 = scmp.eq.s32.totalorder %s42, 1
      %p561 = por %p559, %p560
      %p563 = scmp.ne.s32.totalorder %s548, %s562
      %p564 = scmp.eq.s32.totalorder %s42, 0
      %p565 = por %p563, %p564
      %s567 = sadd.s32 %s566, 1
      %p570 = scmp.eq.s32.totalorder %s36, 1
      %p571 = scmp.ne.s32.totalorder %s566, %s568
      %p572 = scmp.eq.s32.totalorder %s36, 0
      %p573 = por %p571, %p572
      %p574 = scmp.ne.s32.totalorder %s566, %s568
      %p575 = scmp.eq.s32.totalorder %s41, 1
      %p576 = por %p574, %p575
      %p577 = scmp.ne.s32.totalorder %s568, %s569
      %p578 = scmp.eq.s32.totalorder %s41, 0
      %p579 = por %p577, %p578
      %p580 = scmp.ne.s32.totalorder %s568, %s569
      %p581 = scmp.eq.s32.totalorder %s42, 1
      %p582 = por %p580, %p581
      %p584 = scmp.ne.s32.totalorder %s569, %s583
      %p585 = scmp.eq.s32.totalorder %s42, 0
      %p586 = por %p584, %p585
      %s588 = sadd.s32 %s587, 1
      %p591 = scmp.eq.s32.totalorder %s36, 1
      %p592 = scmp.ne.s32.totalorder %s587, %s589
      %p593 = scmp.eq.s32.totalorder %s36, 0
      %p594 = por %p592, %p593
      %p595 = scmp.ne.s32.totalorder %s587, %s589
      %p596 = scmp.eq.s32.totalorder %s41, 1
      %p597 = por %p595, %p596
      %p598 = scmp.ne.s32.totalorder %s589, %s590
      %p599 = scmp.eq.s32.totalorder %s41, 0
      %p600 = por %p598, %p599
      %p601 = scmp.ne.s32.totalorder %s589, %s590
      %p602 = scmp.eq.s32.totalorder %s42, 1
      %p603 = por %p601, %p602
      %p605 = scmp.ne.s32.totalorder %s590, %s604
      %p606 = scmp.eq.s32.totalorder %s42, 0
      %p607 = por %p605, %p606
      %s609 = sadd.s32 %s608, 1
      %p612 = scmp.eq.s32.totalorder %s36, 1
      %p613 = scmp.ne.s32.totalorder %s608, %s610
      %p614 = scmp.eq.s32.totalorder %s36, 0
      %p615 = por %p613, %p614
      %p616 = scmp.ne.s32.totalorder %s608, %s610
      %p617 = scmp.eq.s32.totalorder %s41, 1
      %p618 = por %p616, %p617
      %p619 = scmp.ne.s32.totalorder %s610, %s611
      %p620 = scmp.eq.s32.totalorder %s41, 0
      %p621 = por %p619, %p620
      %p622 = scmp.ne.s32.totalorder %s610, %s611
      %p623 = scmp.eq.s32.totalorder %s42, 1
      %p624 = por %p622, %p623
      %p626 = scmp.ne.s32.totalorder %s611, %s625
      %p627 = scmp.eq.s32.totalorder %s42, 0
      %p628 = por %p626, %p627
      %s630 = sadd.s32 %s629, 1
      %p633 = scmp.eq.s32.totalorder %s36, 1
      %p634 = scmp.ne.s32.totalorder %s629, %s631
      %p635 = scmp.eq.s32.totalorder %s36, 0
      %p636 = por %p634, %p635
      %p637 = scmp.ne.s32.totalorder %s629, %s631
      %p638 = scmp.eq.s32.totalorder %s41, 1
      %p639 = por %p637, %p638
      %p640 = scmp.ne.s32.totalorder %s631, %s632
      %p641 = scmp.eq.s32.totalorder %s41, 0
      %p642 = por %p640, %p641
      %p643 = scmp.ne.s32.totalorder %s631, %s632
      %p644 = scmp.eq.s32.totalorder %s42, 1
      %p645 = por %p643, %p644
      %p647 = scmp.ne.s32.totalorder %s632, %s646
      %p648 = scmp.eq.s32.totalorder %s42, 0
      %p649 = por %p647, %p648
      %s650 = ssub.s32 %s43, %s55
      %s651 = ssub.s32 %s44, %s51
      %s652 = sor.u32 %s650, %s651
      %p653 = scmp.eq.s32.totalorder %s652, 0
      %s655 = sadd.s32 %s654, 1
      %s656 = scalar_select %p653, %s654, %s655
      %p659 = pneg %p653
      %p660 = scmp.eq.s32.totalorder %s36, 1
      %p661 = por %p659, %p660
      %p662 = scmp.ne.s32.totalorder %s654, %s657
      %p663 = scmp.eq.s32.totalorder %s36, 0
      %p664 = por %p662, %p663
      %p665 = scmp.ne.s32.totalorder %s654, %s657
      %p666 = scmp.eq.s32.totalorder %s41, 1
      %p667 = por %p665, %p666
      %p668 = scmp.ne.s32.totalorder %s657, %s658
      %p669 = scmp.eq.s32.totalorder %s41, 0
      %p670 = por %p668, %p669
      %p671 = scmp.ne.s32.totalorder %s657, %s658
      %p672 = scmp.eq.s32.totalorder %s42, 1
      %p673 = por %p671, %p672
      %p675 = scmp.ne.s32.totalorder %s658, %s674
      %p676 = scmp.eq.s32.totalorder %s42, 0
      %p677 = por %p675, %p676
      %p678 = scmp.le.s32.totalorder 1, %s36
      %p679 = scmp.lt.s32.totalorder %s36, 3
      %p680 = pnand %p678, %p679
      %p681 = pneg %p680
      // Predicated region
      $region9: #{decoder_forward.4} parent=5 // pred_check
        _
      $region10: #{decoder_forward.4} parent=5 // pred_check_branch
        %683 = sbr.rel (%p680) target = $region12
      $region11: #{decoder_forward.4} parent=5 // pred_region
        %s684 = ssub.s32 %s36, 1
        // Predicated region
        $region13: #{decoder_forward.4} parent=11 // pred_check
          %p685 = pneg %p201
        $region14: #{decoder_forward.4} parent=11 // pred_check_branch
          %687 = sbr.rel (%p685) target = $region16
        $region15: #{decoder_forward.4} parent=11 // pred_region
          _
        $region16: #{decoder_forward.4} parent=11 // pred_fallthru
          _
        // Predicated region
        $region17: #{decoder_forward.4} parent=11 // pred_check
          %p688 = pneg %p222
        $region18: #{decoder_forward.4} parent=11 // pred_check_branch
          %690 = sbr.rel (%p688) target = $region20
        $region19: #{decoder_forward.4} parent=11 // pred_region
          _
        $region20: #{decoder_forward.4} parent=11 // pred_fallthru
          _
        // Predicated region
        $region21: #{decoder_forward.4} parent=11 // pred_check
          %p691 = pneg %p243
        $region22: #{decoder_forward.4} parent=11 // pred_check_branch
          %693 = sbr.rel (%p691) target = $region24
        $region23: #{decoder_forward.4} parent=11 // pred_region
          _
        $region24: #{decoder_forward.4} parent=11 // pred_fallthru
          _
        // Predicated region
        $region25: #{decoder_forward.4} parent=11 // pred_check
          %p694 = pneg %p264
        $region26: #{decoder_forward.4} parent=11 // pred_check_branch
          %696 = sbr.rel (%p694) target = $region28
        $region27: #{decoder_forward.4} parent=11 // pred_region
          _
        $region28: #{decoder_forward.4} parent=11 // pred_fallthru
          _
        // Predicated region
        $region29: #{decoder_forward.4} parent=11 // pred_check
          %p697 = pneg %p285
        $region30: #{decoder_forward.4} parent=11 // pred_check_branch
          %699 = sbr.rel (%p697) target = $region32
        $region31: #{decoder_forward.4} parent=11 // pred_region
          _
        $region32: #{decoder_forward.4} parent=11 // pred_fallthru
          _
        // Predicated region
        $region33: #{decoder_forward.4} parent=11 // pred_check
          %p700 = pneg %p306
        $region34: #{decoder_forward.4} parent=11 // pred_check_branch
          %702 = sbr.rel (%p700) target = $region36
        $region35: #{decoder_forward.4} parent=11 // pred_region
          _
        $region36: #{decoder_forward.4} parent=11 // pred_fallthru
          _
        // Predicated region
        $region37: #{decoder_forward.4} parent=11 // pred_check
          %p703 = pneg %p327
        $region38: #{decoder_forward.4} parent=11 // pred_check_branch
          %705 = sbr.rel (%p703) target = $region40
        $region39: #{decoder_forward.4} parent=11 // pred_region
          _
        $region40: #{decoder_forward.4} parent=11 // pred_fallthru
          _
        // Predicated region
        $region41: #{decoder_forward.4} parent=11 // pred_check
          %p706 = pneg %p348
        $region42: #{decoder_forward.4} parent=11 // pred_check_branch
          %708 = sbr.rel (%p706) target = $region44
        $region43: #{decoder_forward.4} parent=11 // pred_region
          _
        $region44: #{decoder_forward.4} parent=11 // pred_fallthru
          _
        // Predicated region
        $region45: #{decoder_forward.4} parent=11 // pred_check
          %p709 = pneg %p369
        $region46: #{decoder_forward.4} parent=11 // pred_check_branch
          %711 = sbr.rel (%p709) target = $region48
        $region47: #{decoder_forward.4} parent=11 // pred_region
          _
        $region48: #{decoder_forward.4} parent=11 // pred_fallthru
          _
        // Predicated region
        $region49: #{decoder_forward.4} parent=11 // pred_check
          %p712 = pneg %p390
        $region50: #{decoder_forward.4} parent=11 // pred_check_branch
          %714 = sbr.rel (%p712) target = $region52
        $region51: #{decoder_forward.4} parent=11 // pred_region
          _
        $region52: #{decoder_forward.4} parent=11 // pred_fallthru
          _
        // Predicated region
        $region53: #{decoder_forward.4} parent=11 // pred_check
          %p715 = pneg %p411
        $region54: #{decoder_forward.4} parent=11 // pred_check_branch
          %717 = sbr.rel (%p715) target = $region56
        $region55: #{decoder_forward.4} parent=11 // pred_region
          _
        $region56: #{decoder_forward.4} parent=11 // pred_fallthru
          _
        // Predicated region
        $region57: #{decoder_forward.4} parent=11 // pred_check
          %p718 = pneg %p432
        $region58: #{decoder_forward.4} parent=11 // pred_check_branch
          %720 = sbr.rel (%p718) target = $region60
        $region59: #{decoder_forward.4} parent=11 // pred_region
          _
        $region60: #{decoder_forward.4} parent=11 // pred_fallthru
          _
        // Predicated region
        $region61: #{decoder_forward.4} parent=11 // pred_check
          %p721 = pneg %p453
        $region62: #{decoder_forward.4} parent=11 // pred_check_branch
          %723 = sbr.rel (%p721) target = $region64
        $region63: #{decoder_forward.4} parent=11 // pred_region
          _
        $region64: #{decoder_forward.4} parent=11 // pred_fallthru
          _
        // Predicated region
        $region65: #{decoder_forward.4} parent=11 // pred_check
          %p724 = pneg %p474
        $region66: #{decoder_forward.4} parent=11 // pred_check_branch
          %726 = sbr.rel (%p724) target = $region68
        $region67: #{decoder_forward.4} parent=11 // pred_region
          _
        $region68: #{decoder_forward.4} parent=11 // pred_fallthru
          _
        // Predicated region
        $region69: #{decoder_forward.4} parent=11 // pred_check
          %p727 = pneg %p495
        $region70: #{decoder_forward.4} parent=11 // pred_check_branch
          %729 = sbr.rel (%p727) target = $region72
        $region71: #{decoder_forward.4} parent=11 // pred_region
          _
        $region72: #{decoder_forward.4} parent=11 // pred_fallthru
          _
        // Predicated region
        $region73: #{decoder_forward.4} parent=11 // pred_check
          %p730 = pneg %p516
        $region74: #{decoder_forward.4} parent=11 // pred_check_branch
          %732 = sbr.rel (%p730) target = $region76
        $region75: #{decoder_forward.4} parent=11 // pred_region
          %s734 = ssub.s32 16, 16
          %735 = vsyncadd [#allocation3], %s734
          %s737 = sshll.u32 [#allocation2], 4
          %s738 = int_to_ptr.vmem [resolvable:$true] %s737
          %740 = dma.hbm_to_vmem [thread:$0]  %s20, 16, %s738, [#allocation3]
        $region76: #{decoder_forward.4} parent=11 // pred_fallthru
          _
        // Predicated region
        $region77: #{decoder_forward.4} parent=11 // pred_check
          %p741 = pneg %p537
        $region78: #{decoder_forward.4} parent=11 // pred_check_branch
          %743 = sbr.rel (%p741) target = $region80
        $region79: #{decoder_forward.4} parent=11 // pred_region
          _
        $region80: #{decoder_forward.4} parent=11 // pred_fallthru
          _
        // Predicated region
        $region81: #{decoder_forward.4} parent=11 // pred_check
          %p744 = pneg %p558
        $region82: #{decoder_forward.4} parent=11 // pred_check_branch
          %746 = sbr.rel (%p744) target = $region84
        $region83: #{decoder_forward.4} parent=11 // pred_region
          %s748 = ssub.s32 16, 16
          %749 = vsyncadd [#allocation5], %s748
          %s751 = sshll.u32 [#allocation4], 4
          %s752 = int_to_ptr.vmem [resolvable:$true] %s751
          %754 = dma.hbm_to_vmem [thread:$0]  %s22, 16, %s752, [#allocation5]
        $region84: #{decoder_forward.4} parent=11 // pred_fallthru
          _
        // Predicated region
        $region85: #{decoder_forward.4} parent=11 // pred_check
          %p755 = pneg %p579
        $region86: #{decoder_forward.4} parent=11 // pred_check_branch
          %757 = sbr.rel (%p755) target = $region88
        $region87: #{decoder_forward.4} parent=11 // pred_region
          _
        $region88: #{decoder_forward.4} parent=11 // pred_fallthru
          _
        // Predicated region
        $region89: #{decoder_forward.4} parent=11 // pred_check
          %p758 = pneg %p600
        $region90: #{decoder_forward.4} parent=11 // pred_check_branch
          %760 = sbr.rel (%p758) target = $region92
        $region91: #{decoder_forward.4} parent=11 // pred_region
          %s762 = ssub.s32 16, 16
          %763 = vsyncadd [#allocation5], %s762
          %s765 = sshll.u32 [#allocation6], 4
          %s766 = int_to_ptr.vmem [resolvable:$true] %s765
          %768 = dma.hbm_to_vmem [thread:$0]  %s24, 16, %s766, [#allocation5]
        $region92: #{decoder_forward.4} parent=11 // pred_fallthru
          _
        // Predicated region
        $region93: #{decoder_forward.4} parent=11 // pred_check
          %p769 = pneg %p621
        $region94: #{decoder_forward.4} parent=11 // pred_check_branch
          %771 = sbr.rel (%p769) target = $region96
        $region95: #{decoder_forward.4} parent=11 // pred_region
          %s773 = ssub.s32 16, 16
          %774 = vsyncadd [#allocation8], %s773
          %s776 = sshll.u32 [#allocation7], 4
          %s777 = int_to_ptr.vmem [resolvable:$true] %s776
          %779 = dma.hbm_to_vmem [thread:$0]  %s25, 16, %s777, [#allocation8]
        $region96: #{decoder_forward.4} parent=11 // pred_fallthru
          _
        // Predicated region
        $region97: #{decoder_forward.4} parent=11 // pred_check
          %p780 = pneg %p642
        $region98: #{decoder_forward.4} parent=11 // pred_check_branch
          %782 = sbr.rel (%p780) target = $region100
        $region99: #{decoder_forward.4} parent=11 // pred_region
          %s784 = ssub.s32 16, 16
          %785 = vsyncadd [#allocation8], %s784
          %s787 = sshll.u32 [#allocation9], 4
          %s788 = int_to_ptr.vmem [resolvable:$true] %s787
          %790 = dma.hbm_to_vmem [thread:$0]  %s26, 16, %s788, [#allocation8]
        $region100: #{decoder_forward.4} parent=11 // pred_fallthru
          _
      $region12: #{decoder_forward.4} parent=5 // pred_fallthru
        _
      %p791 = scmp.lt.s32.totalorder %s36, 2
      // Predicated region
      $region101: #{decoder_forward.4} parent=5 // pred_check
        %p792 = pneg %p791
      $region102: #{decoder_forward.4} parent=5 // pred_check_branch
        %794 = sbr.rel (%p792) target = $region104
      $region103: #{decoder_forward.4} parent=5 // pred_region
        // Predicated region
        $region105: #{decoder_forward.4} parent=103 // pred_check
          %p795 = pneg %p70
        $region106: #{decoder_forward.4} parent=103 // pred_check_branch
          %797 = sbr.rel (%p795) target = $region108
        $region107: #{decoder_forward.4} parent=103 // pred_region
          %p798 = scmp.lt.s32.totalorder %s43, 1
          %s799 = scalar_select %p798, %s43, 1
          %p800 = scmp.lt.s32.totalorder %s44, 0
          %s801 = scalar_select %p800, %s44, 0
          %s802 = sadd.s32 %s801, %s799
          %s803 = smul.addr %s802, 8
          %s804 = scalar_lea.vmem %s0, %s803
        $region108: #{decoder_forward.4} parent=103 // pred_fallthru
          _
        // Predicated region
        $region109: #{decoder_forward.4} parent=103 // pred_check
          %p805 = pneg %p96
        $region110: #{decoder_forward.4} parent=103 // pred_check_branch
          %807 = sbr.rel (%p805) target = $region112
        $region111: #{decoder_forward.4} parent=103 // pred_region
          %p808 = scmp.lt.s32.totalorder %s43, 1
          %s809 = scalar_select %p808, %s43, 1
          %s810 = smul.addr %s809, 8
          %s811 = scalar_lea.vmem %s1, %s810
        $region112: #{decoder_forward.4} parent=103 // pred_fallthru
          _
        // Predicated region
        $region113: #{decoder_forward.4} parent=103 // pred_check
          %p812 = pneg %p122
        $region114: #{decoder_forward.4} parent=103 // pred_check_branch
          %814 = sbr.rel (%p812) target = $region116
        $region115: #{decoder_forward.4} parent=103 // pred_region
          %p815 = scmp.lt.s32.totalorder %s43, 1
          %s816 = scalar_select %p815, %s43, 1
          %s817 = smul.addr %s816, 2
          %s818 = smul.addr %s817, 8
          %s819 = scalar_lea.vmem %s2, %s818
        $region116: #{decoder_forward.4} parent=103 // pred_fallthru
          _
        // Predicated region
        $region117: #{decoder_forward.4} parent=103 // pred_check
          %p820 = pneg %p148
        $region118: #{decoder_forward.4} parent=103 // pred_check_branch
          %822 = sbr.rel (%p820) target = $region120
        $region119: #{decoder_forward.4} parent=103 // pred_region
          %p823 = scmp.lt.s32.totalorder %s43, 1
          %s824 = scalar_select %p823, %s43, 1
          %s825 = scalar_lea.vmem %s3, %s824
        $region120: #{decoder_forward.4} parent=103 // pred_fallthru
          _
        // Predicated region
        $region121: #{decoder_forward.4} parent=103 // pred_check
          %p826 = pneg %p174
        $region122: #{decoder_forward.4} parent=103 // pred_check_branch
          %828 = sbr.rel (%p826) target = $region124
        $region123: #{decoder_forward.4} parent=103 // pred_region
          %p829 = scmp.lt.s32.totalorder %s43, 1
          %s830 = scalar_select %p829, %s43, 1
          %s831 = scalar_lea.vmem %s4, %s830
        $region124: #{decoder_forward.4} parent=103 // pred_fallthru
          _
      $region104: #{decoder_forward.4} parent=5 // pred_fallthru
        _
      %p832 = scmp.le.s32.totalorder 1, %s36
      %p833 = scmp.lt.s32.totalorder %s36, 3
      %p834 = pnand %p832, %p833
      %p835 = pneg %p834
      // Predicated region
      $region125: #{decoder_forward.4} parent=5 // pred_check
        _
      $region126: #{decoder_forward.4} parent=5 // pred_check_branch
        %837 = sbr.rel (%p834) target = $region128
      $region127: #{decoder_forward.4} parent=5 // pred_region
        %s838 = ssub.s32 %s36, 1
        // Predicated region
        $region129: #{decoder_forward.4} parent=127 // pred_check
          %p839 = pneg %p516
        $region130: #{decoder_forward.4} parent=127 // pred_check_branch
          %841 = sbr.rel (%p839) target = $region132
        $region131: #{decoder_forward.4} parent=127 // pred_region
          %842 = dma.done [#allocation3], 16
        $region132: #{decoder_forward.4} parent=127 // pred_fallthru
          _
        // Predicated region
        $region133: #{decoder_forward.4} parent=127 // pred_check
          %p843 = pneg %p558
        $region134: #{decoder_forward.4} parent=127 // pred_check_branch
          %845 = sbr.rel (%p843) target = $region136
        $region135: #{decoder_forward.4} parent=127 // pred_region
          %846 = dma.done [#allocation5], 16
        $region136: #{decoder_forward.4} parent=127 // pred_fallthru
          _
        // Predicated region
        $region137: #{decoder_forward.4} parent=127 // pred_check
          %p847 = pneg %p600
        $region138: #{decoder_forward.4} parent=127 // pred_check_branch
          %849 = sbr.rel (%p847) target = $region140
        $region139: #{decoder_forward.4} parent=127 // pred_region
          %850 = dma.done [#allocation5], 16
        $region140: #{decoder_forward.4} parent=127 // pred_fallthru
          _
        // Predicated region
        $region141: #{decoder_forward.4} parent=127 // pred_check
          %p851 = pneg %p621
        $region142: #{decoder_forward.4} parent=127 // pred_check_branch
          %853 = sbr.rel (%p851) target = $region144
        $region143: #{decoder_forward.4} parent=127 // pred_region
          %854 = dma.done [#allocation8], 16
        $region144: #{decoder_forward.4} parent=127 // pred_fallthru
          _
        // Predicated region
        $region145: #{decoder_forward.4} parent=127 // pred_check
          %p855 = pneg %p642
        $region146: #{decoder_forward.4} parent=127 // pred_check_branch
          %857 = sbr.rel (%p855) target = $region148
        $region147: #{decoder_forward.4} parent=127 // pred_region
          %858 = dma.done [#allocation8], 16
        $region148: #{decoder_forward.4} parent=127 // pred_fallthru
          _
        %p859 = scmp.lt.s32.totalorder %s45, 1
        %s860 = scalar_select %p859, %s45, 1
        %p861 = scmp.lt.s32.totalorder %s46, 0
        %s862 = scalar_select %p861, %s46, 0
        %s863 = sadd.s32 %s862, %s860
        %s864 = smul.addr %s863, 8
        %s865 = scalar_lea.vmem %s0, %s864
        %p866 = pneg %p76
        %p867 = pneg %p73
        %p868 = scmp.lt.s32.totalorder %s45, 1
        %s869 = scalar_select %p868, %s45, 1
        %s870 = smul.addr %s869, 8
        %s871 = scalar_lea.vmem %s1, %s870
        %p872 = pneg %p102
        %p873 = pneg %p99
        %p874 = scmp.lt.s32.totalorder %s45, 1
        %s875 = scalar_select %p874, %s45, 1
        %s876 = smul.addr %s875, 2
        %s877 = smul.addr %s876, 8
        %s878 = scalar_lea.vmem %s2, %s877
        %p879 = pneg %p128
        %p880 = pneg %p125
        %p881 = scmp.lt.s32.totalorder %s45, 1
        %s882 = scalar_select %p881, %s45, 1
        %s883 = scalar_lea.vmem %s3, %s882
        %p884 = pneg %p154
        %p885 = pneg %p151
        %p886 = scmp.lt.s32.totalorder %s45, 1
        %s887 = scalar_select %p886, %s45, 1
        %s888 = scalar_lea.vmem %s4, %s887
        %p889 = pneg %p180
        %p890 = pneg %p177
        %p891 = pneg %p201
        %p892 = pneg %p198
        %p893 = pneg %p222
        %p894 = pneg %p219
        %p895 = pneg %p243
        %p896 = pneg %p240
        %p897 = pneg %p264
        %p898 = pneg %p261
        %p899 = pneg %p285
        %p900 = pneg %p282
        %p901 = pneg %p306
        %p902 = pneg %p303
        %p903 = pneg %p327
        %p904 = pneg %p324
        %p905 = pneg %p348
        %p906 = pneg %p345
        %p907 = pneg %p369
        %p908 = pneg %p366
        %p909 = pneg %p390
        %p910 = pneg %p387
        %p911 = pneg %p411
        %p912 = pneg %p408
        %p913 = pneg %p432
        %p914 = pneg %p429
        %p915 = pneg %p453
        %p916 = pneg %p450
        %p917 = pneg %p474
        %p918 = pneg %p471
        %p919 = pneg %p495
        %p920 = pneg %p492
        %p921 = pneg %p516
        %p922 = pneg %p513
        %p923 = pneg %p537
        %p924 = pneg %p534
        %p925 = pneg %p558
        %p926 = pneg %p555
        %p927 = pneg %p579
        %p928 = pneg %p576
        %p929 = pneg %p600
        %p930 = pneg %p597
        %p931 = pneg %p621
        %p932 = pneg %p618
        %p933 = pneg %p642
        %p934 = pneg %p639
        %p935 = pneg %p670
        %p936 = pneg %p667
        %p937 = scmp.lt.s32.totalorder %s45, 1
        %s938 = scalar_select %p937, %s45, 1
        %p939 = scmp.lt.s32.totalorder %s46, 0
        %s940 = scalar_select %p939, %s46, 0
        %s941 = sadd.s32 %s940, %s938
        %s942 = smul.addr %s941, 8
        %s943 = scalar_lea.vmem %s27, %s942
        %p944 = scmp.lt.s32.totalorder %s45, 1
        %s945 = scalar_select %p944, %s45, 1
        %p946 = scmp.lt.s32.totalorder %s46, 0
        %s947 = scalar_select %p946, %s46, 0
        %s948 = sadd.s32 %s947, %s945
        %s949 = smul.addr %s948, 8
        %s950 = scalar_lea.vmem %s0, %s949
        %p951 = scmp.lt.s32.totalorder %s45, 1
        %s952 = scalar_select %p951, %s45, 1
        %s953 = smul.addr %s952, 8
        %s954 = scalar_lea.vmem %s1, %s953
        %p955 = scmp.lt.s32.totalorder %s45, 1
        %s956 = scalar_select %p955, %s45, 1
        %s957 = smul.addr %s956, 2
        %s958 = smul.addr %s957, 8
        %s959 = scalar_lea.vmem %s2, %s958
        %p960 = scmp.lt.s32.totalorder %s45, 1
        %s961 = scalar_select %p960, %s45, 1
        %s962 = scalar_lea.vmem %s3, %s961
        %p963 = scmp.lt.s32.totalorder %s45, 1
        %s964 = scalar_select %p963, %s45, 1
        %s965 = scalar_lea.vmem %s4, %s964
        %p966 = scmp.lt.s32.totalorder %s45, 1
        %s967 = scalar_select %p966, %s45, 1
        %p968 = scmp.lt.s32.totalorder %s46, 0
        %s969 = scalar_select %p968, %s46, 0
        %s970 = sadd.s32 %s969, %s967
        %s971 = smul.addr %s970, 8
        %s972 = scalar_lea.vmem %s27, %s971
        %v974 = vld [vmem:[%s950] sm:$0xff]
        %v975 = vld [vmem:[%s954] sm:$0xff]
        %v976 = vld [vmem:[%s959] sm:$0xff]
        %v977 = vld [vmem:[%s959 + $0x8] sm:$0x3]
        %v978 = vlaneseq
        %v979 = vshrl.u32 %v978, 7
        %s980 = smul.u32 %s46, 8
        %v981 = vstv %s980
        %v982 = vadd.s32 %v979, %v981
        %v983 = vlaneseq
        %v984 = vand.u32 %v983, 127
        %v985 = vadd.s32 %v982, 1
        %vm986 = vcmp.le.s32.totalorder %v984, %v985
        %v987 = vld [vmem:[%s962] sm:$0x1]
        %v989 = vlaneseq
        %v990 = vshrl.u32 %v989, 7
        %v991 = vsub.s32 0, %v990
        %v992 = vrot.slane %v987, %v991
        %v994 = vsel %vm986, -1e+09, %v992
        %v995 = vld [vmem:[%s965] sm:$0x1]
        %v996 = vpack.c.bf16 %v974, %v974
        %v997 = vld [vmem:[%s5] sm:$0xf]
        %v998 = vld [vmem:[%s5 + $0x4] sm:$0xf]
        %v999 = vld [vmem:[%s5 + $0x8] sm:$0xf]
        %v1000 = vld [vmem:[%s5 + $0xc] sm:$0xf]
        %v1001 = vld [vmem:[%s6] sm:$0x1]
        %v1003 = vlaneseq
        %v1004 = vshrl.u32 %v1003, 7
        %v1005 = vsub.s32 0, %v1004
        %v1006 = vrot.slane %v1001, %v1005
        %v1012 = vunpack.c.l.b16 %v997
        %v1013 = vunpack.c.l.b16 %v998
        %v1014 = vunpack.c.l.b16 %v999
        %v1015 = vunpack.c.l.b16 %v1000
        %v1016 = vpack.c.b16 %v1013, %v1012
        %v1017 = vpack.c.b16 %v1015, %v1014
        %vm1020 = vcmask 261120
        %v1022 = vsel %vm1020, %v996, 0
        %1024 = vmatprep.subr.bf16.mxu0 0
        %1025 = vmatpush1.bf16.msra.mxu0 %v1016
        %1026 = vmatprep.subr.bf16.mxu0 0
        %1027 = vmatpush1.bf16.msra.mxu0 %v1017
        %1028 = vmatprep.subr.bf16.mxu0 0
        %1029 = vmatpush1.bf16.msra.mxu0 0
        %1030 = vmatprep.subr.bf16.mxu0 0
        %1031 = vmatpush1.bf16.msra.mxu0 0
        %1032 = vmatprep.subr.bf16.mxu0 0
        %1033 = vmatpush1.bf16.msra.mxu0 0
        %1034 = vmatprep.subr.bf16.mxu0 0
        %1035 = vmatpush1.bf16.msra.mxu0 0
        %1036 = vmatprep.subr.bf16.mxu0 0
        %1037 = vmatpush1.bf16.msra.mxu0 0
        %1038 = vmatprep.subr.bf16.mxu0 0
        %1039 = vmatpush1.bf16.msra.mxu0 0
        %1040 = vmatprep.subr.bf16.mxu0 0
        %1041 = vmatpush1.bf16.msra.mxu0 0
        %1042 = vmatprep.subr.bf16.mxu0 0
        %1043 = vmatpush1.bf16.msra.mxu0 0
        %1044 = vmatprep.subr.bf16.mxu0 0
        %1045 = vmatpush1.bf16.msra.mxu0 0
        %1046 = vmatprep.subr.bf16.mxu0 0
        %1047 = vmatpush1.bf16.msra.mxu0 0
        %1048 = vmatprep.subr.bf16.mxu0 0
        %1049 = vmatpush1.bf16.msra.mxu0 0
        %1050 = vmatprep.subr.bf16.mxu0 0
        %1051 = vmatpush1.bf16.msra.mxu0 0
        %1052 = vmatprep.subr.bf16.mxu0 0
        %1053 = vmatpush1.bf16.msra.mxu0 0
        %1054 = vmatprep.subr.bf16.mxu0 0
        %1055 = vmatpush1.bf16.msra.mxu0 0
        %1056 = vmatprep.mubr.bf16.mxu0 0
        %1057 = vmatmul.mubr.bf16.gmra.mrb[0].mxu0 %v1022
        %v1058 = vpop.f32.mrb[0].mxu0
        %v1059 = vadd.f32 %v1006, %v1058
        %v1060 = vpop.f32.mrb[0].mxu0
        %v1061 = vpop.f32.mrb[0].mxu0
        %v1062 = vpop.f32.mrb[0].mxu0
        %1063 = vdwg.mxu0
        %v1064 = vmul.f32 %v1059, 0.25
        %v1065 = vpack.c.bf16 %v1064, %v1064
        %v1066 = vpack.c.bf16 %v975, %v975
        %v1067 = vld [vmem:[%s7] sm:$0xf]
        %v1068 = vld [vmem:[%s7 + $0x4] sm:$0xf]
        %v1069 = vld [vmem:[%s7 + $0x8] sm:$0xf]
        %v1070 = vld [vmem:[%s7 + $0xc] sm:$0xf]
        %v1071 = vld [vmem:[%s8] sm:$0x1]
        %v1073 = vlaneseq
        %v1074 = vshrl.u32 %v1073, 7
        %v1075 = vsub.s32 0, %v1074
        %v1076 = vrot.slane %v1071, %v1075
        %v1082 = vunpack.c.l.b16 %v1067
        %v1083 = vunpack.c.l.b16 %v1068
        %v1084 = vunpack.c.l.b16 %v1069
        %v1085 = vunpack.c.l.b16 %v1070
        %v1086 = vpack.c.b16 %v1083, %v1082
        %v1087 = vpack.c.b16 %v1085, %v1084
        %v1091 = vsel %vm1020, %v1066, 0
        %1093 = vmatprep.subr.bf16.mxu0 0
        %1094 = vmatpush1.bf16.msra.mxu0 %v1086
        %1095 = vmatprep.subr.bf16.mxu0 0
        %1096 = vmatpush1.bf16.msra.mxu0 %v1087
        %1097 = vmatprep.subr.bf16.mxu0 0
        %1098 = vmatpush1.bf16.msra.mxu0 0
        %1099 = vmatprep.subr.bf16.mxu0 0
        %1100 = vmatpush1.bf16.msra.mxu0 0
        %1101 = vmatprep.subr.bf16.mxu0 0
        %1102 = vmatpush1.bf16.msra.mxu0 0
        %1103 = vmatprep.subr.bf16.mxu0 0
        %1104 = vmatpush1.bf16.msra.mxu0 0
        %1105 = vmatprep.subr.bf16.mxu0 0
        %1106 = vmatpush1.bf16.msra.mxu0 0
        %1107 = vmatprep.subr.bf16.mxu0 0
        %1108 = vmatpush1.bf16.msra.mxu0 0
        %1109 = vmatprep.subr.bf16.mxu0 0
        %1110 = vmatpush1.bf16.msra.mxu0 0
        %1111 = vmatprep.subr.bf16.mxu0 0
        %1112 = vmatpush1.bf16.msra.mxu0 0
        %1113 = vmatprep.subr.bf16.mxu0 0
        %1114 = vmatpush1.bf16.msra.mxu0 0
        %1115 = vmatprep.subr.bf16.mxu0 0
        %1116 = vmatpush1.bf16.msra.mxu0 0
        %1117 = vmatprep.subr.bf16.mxu0 0
        %1118 = vmatpush1.bf16.msra.mxu0 0
        %1119 = vmatprep.subr.bf16.mxu0 0
        %1120 = vmatpush1.bf16.msra.mxu0 0
        %1121 = vmatprep.subr.bf16.mxu0 0
        %1122 = vmatpush1.bf16.msra.mxu0 0
        %1123 = vmatprep.subr.bf16.mxu0 0
        %1124 = vmatpush1.bf16.msra.mxu0 0
        %1125 = vmatprep.mubr.bf16.mxu0 0
        %1126 = vmatmul.mubr.bf16.gmra.mrb[0].mxu0 %v1091
        %v1127 = vpop.f32.mrb[0].mxu0
        %v1128 = vadd.f32 %v1076, %v1127
        %v1129 = vpop.f32.mrb[0].mxu0
        %v1130 = vpop.f32.mrb[0].mxu0
        %v1131 = vpop.f32.mrb[0].mxu0
        %1132 = vdwg.mxu0
        %v1133 = vpack.c.bf16 %v1128, %v1128
        %vm1134 = vcmask 130048
        %v1136 = vsel %vm1134, %v1065, 0
        %v1139 = vsel %vm1134, %v1133, 0
        %1141 = vmatprep.subr.bf16.mxu0 0
        %1142 = vmatpush1.bf16.xpose.msra.mxu0 %v1139
        %1143 = vmatprep.subr.bf16.mxu0 0
        %1144 = vmatpush1.bf16.xpose.msra.mxu0 0
        %1145 = vmatprep.subr.bf16.mxu0 0
        %1146 = vmatpush1.bf16.xpose.msra.mxu0 0
        %1147 = vmatprep.subr.bf16.mxu0 0
        %1148 = vmatpush1.bf16.xpose.msra.mxu0 0
        %1149 = vmatprep.subr.bf16.mxu0 0
        %1150 = vmatpush1.bf16.xpose.msra.mxu0 0
        %1151 = vmatprep.subr.bf16.mxu0 0
        %1152 = vmatpush1.bf16.xpose.msra.mxu0 0
        %1153 = vmatprep.subr.bf16.mxu0 0
        %1154 = vmatpush1.bf16.xpose.msra.mxu0 0
        %1155 = vmatprep.subr.bf16.mxu0 0
        %1156 = vmatpush1.bf16.xpose.msra.mxu0 0
        %1157 = vmatprep.subr.bf16.mxu0 0
        %1158 = vmatpush1.bf16.xpose.msra.mxu0 0
        %1159 = vmatprep.subr.bf16.mxu0 0
        %1160 = vmatpush1.bf16.xpose.msra.mxu0 0
        %1161 = vmatprep.subr.bf16.mxu0 0
        %1162 = vmatpush1.bf16.xpose.msra.mxu0 0
        %1163 = vmatprep.subr.bf16.mxu0 0
        %1164 = vmatpush1.bf16.xpose.msra.mxu0 0
        %1165 = vmatprep.subr.bf16.mxu0 0
        %1166 = vmatpush1.bf16.xpose.msra.mxu0 0
        %1167 = vmatprep.subr.bf16.mxu0 0
        %1168 = vmatpush1.bf16.xpose.msra.mxu0 0
        %1169 = vmatprep.subr.bf16.mxu0 0
        %1170 = vmatpush1.bf16.xpose.msra.mxu0 0
        %1171 = vmatprep.subr.bf16.mxu0 0
        %1172 = vmatpush1.bf16.xpose.msra.mxu0 0
        %1173 = vmatprep.mubr.bf16.mxu0 0
        %1174 = vmatmul.mubr.bf16.gmra.mrb[0].mxu0 %v1136
        %v1175 = vpop.f32.mrb[0].mxu0
        %v1176 = vadd.f32 %v994, %v1175
        %v1177 = vpop.f32.mrb[0].mxu0
        %v1178 = vpop.f32.mrb[0].mxu0
        %v1179 = vpop.f32.mrb[0].mxu0
        %1180 = vdwg.mxu0
        %vm1181 = vcmask 64512
        %v1182 = vsel %vm1181, %v1176, -inf
        %1183 = vmax.xlane.f32.xlu0 %v1182
        %v1184 = vpop.xlane.xlu0 %1183
        %v1185 = vsub.f32 %v1176, %v1184
        %v1186 = vmul.f32 %v1185, 1.442695
        %v1187 = vpow.pop %v1186
        %v1188 = vsel %vm1181, %v1187, 0.0
        %1189 = vadd.xlane.f32.xlu0 %v1188
        %v1190 = vpop.xlane.xlu0 %1189
        %v1191 = vrcp.pop %v1190
        %v1192 = vmul.f32 1.0, %v1191
        %v1193 = vmul.f32 %v1187, %v1192
        %v1194 = vpack.c.bf16 %v1193, %v1193
        %1196 = vrot.lane.b32.xlu0 %v1133, 96
        %v1197 = vpop.permute.xlu0 %1196
        %v1199 = vsel %vm1181, %v1194, 0
        %vm1201 = vcmask 1043456
        %v1203 = vsel %vm1201, %v1197, 0
        %1205 = vmatprep.subr.bf16.mxu0 0
        %1206 = vmatpush1.bf16.msra.mxu0 %v1203
        %1207 = vmatprep.subr.bf16.mxu0 0
        %1208 = vmatpush1.bf16.msra.mxu0 0
        %1209 = vmatprep.subr.bf16.mxu0 0
        %1210 = vmatpush1.bf16.msra.mxu0 0
        %1211 = vmatprep.subr.bf16.mxu0 0
        %1212 = vmatpush1.bf16.msra.mxu0 0
        %1213 = vmatprep.subr.bf16.mxu0 0
        %1214 = vmatpush1.bf16.msra.mxu0 0
        %1215 = vmatprep.subr.bf16.mxu0 0
        %1216 = vmatpush1.bf16.msra.mxu0 0
        %1217 = vmatprep.subr.bf16.mxu0 0
        %1218 = vmatpush1.bf16.msra.mxu0 0
        %1219 = vmatprep.subr.bf16.mxu0 0
        %1220 = vmatpush1.bf16.msra.mxu0 0
        %1221 = vmatprep.subr.bf16.mxu0 0
        %1222 = vmatpush1.bf16.msra.mxu0 0
        %1223 = vmatprep.subr.bf16.mxu0 0
        %1224 = vmatpush1.bf16.msra.mxu0 0
        %1225 = vmatprep.subr.bf16.mxu0 0
        %1226 = vmatpush1.bf16.msra.mxu0 0
        %1227 = vmatprep.subr.bf16.mxu0 0
        %1228 = vmatpush1.bf16.msra.mxu0 0
        %1229 = vmatprep.subr.bf16.mxu0 0
        %1230 = vmatpush1.bf16.msra.mxu0 0
        %1231 = vmatprep.subr.bf16.mxu0 0
        %1232 = vmatpush1.bf16.msra.mxu0 0
        %1233 = vmatprep.subr.bf16.mxu0 0
        %1234 = vmatpush1.bf16.msra.mxu0 0
        %1235 = vmatprep.subr.bf16.mxu0 0
        %1236 = vmatpush1.bf16.msra.mxu0 0
        %1237 = vmatprep.mubr.bf16.mxu0 0
        %1238 = vmatmul.mubr.bf16.gmra.mrb[0].mxu0 %v1199
        %v1239 = vpop.f32.mrb[0].mxu0
        %v1240 = vadd.f32 0.0, %v1239
        %v1241 = vpop.f32.mrb[0].mxu0
        %v1242 = vpop.f32.mrb[0].mxu0
        %v1243 = vpop.f32.mrb[0].mxu0
        %1244 = vdwg.mxu0
        %1246 = vrot.lane.b32.xlu0 %v1065, 112
        %v1247 = vpop.permute.xlu0 %1246
        %1248 = vrot.lane.b32.xlu0 %v1133, 112
        %v1249 = vpop.permute.xlu0 %1248
        %v1251 = vsel %vm1134, %v1247, 0
        %v1254 = vsel %vm1134, %v1249, 0
        %1256 = vmatprep.subr.bf16.mxu0 0
        %1257 = vmatpush1.bf16.xpose.msra.mxu0 %v1254
        %1258 = vmatprep.subr.bf16.mxu0 0
        %1259 = vmatpush1.bf16.xpose.msra.mxu0 0
        %1260 = vmatprep.subr.bf16.mxu0 0
        %1261 = vmatpush1.bf16.xpose.msra.mxu0 0
        %1262 = vmatprep.subr.bf16.mxu0 0
        %1263 = vmatpush1.bf16.xpose.msra.mxu0 0
        %1264 = vmatprep.subr.bf16.mxu0 0
        %1265 = vmatpush1.bf16.xpose.msra.mxu0 0
        %1266 = vmatprep.subr.bf16.mxu0 0
        %1267 = vmatpush1.bf16.xpose.msra.mxu0 0
        %1268 = vmatprep.subr.bf16.mxu0 0
        %1269 = vmatpush1.bf16.xpose.msra.mxu0 0
        %1270 = vmatprep.subr.bf16.mxu0 0
        %1271 = vmatpush1.bf16.xpose.msra.mxu0 0
        %1272 = vmatprep.subr.bf16.mxu0 0
        %1273 = vmatpush1.bf16.xpose.msra.mxu0 0
        %1274 = vmatprep.subr.bf16.mxu0 0
        %1275 = vmatpush1.bf16.xpose.msra.mxu0 0
        %1276 = vmatprep.subr.bf16.mxu0 0
        %1277 = vmatpush1.bf16.xpose.msra.mxu0 0
        %1278 = vmatprep.subr.bf16.mxu0 0
        %1279 = vmatpush1.bf16.xpose.msra.mxu0 0
        %1280 = vmatprep.subr.bf16.mxu0 0
        %1281 = vmatpush1.bf16.xpose.msra.mxu0 0
        %1282 = vmatprep.subr.bf16.mxu0 0
        %1283 = vmatpush1.bf16.xpose.msra.mxu0 0
        %1284 = vmatprep.subr.bf16.mxu0 0
        %1285 = vmatpush1.bf16.xpose.msra.mxu0 0
        %1286 = vmatprep.subr.bf16.mxu0 0
        %1287 = vmatpush1.bf16.xpose.msra.mxu0 0
        %1288 = vmatprep.mubr.bf16.mxu0 0
        %1289 = vmatmul.mubr.bf16.gmra.mrb[0].mxu0 %v1251
        %v1290 = vpop.f32.mrb[0].mxu0
        %v1291 = vadd.f32 %v994, %v1290
        %v1292 = vpop.f32.mrb[0].mxu0
        %v1293 = vpop.f32.mrb[0].mxu0
        %v1294 = vpop.f32.mrb[0].mxu0
        %1295 = vdwg.mxu0
        %v1296 = vsel %vm1181, %v1291, -inf
        %1297 = vmax.xlane.f32.xlu0 %v1296
        %v1298 = vpop.xlane.xlu0 %1297
        %v1299 = vsub.f32 %v1291, %v1298
        %v1300 = vmul.f32 %v1299, 1.442695
        %v1301 = vpow.pop %v1300
        %v1302 = vsel %vm1181, %v1301, 0.0
        %1303 = vadd.xlane.f32.xlu0 %v1302
        %v1304 = vpop.xlane.xlu0 %1303
        %v1305 = vrcp.pop %v1304
        %v1306 = vmul.f32 1.0, %v1305
        %v1307 = vmul.f32 %v1301, %v1306
        %v1308 = vpack.c.bf16 %v1307, %v1307
        %1309 = vrot.lane.b32.xlu0 %v1133, 80
        %v1310 = vpop.permute.xlu0 %1309
        %v1312 = vsel %vm1181, %v1308, 0
        %v1315 = vsel %vm1201, %v1310, 0
        %1317 = vmatprep.subr.bf16.mxu0 0
        %1318 = vmatpush1.bf16.msra.mxu0 %v1315
        %1319 = vmatprep.subr.bf16.mxu0 0
        %1320 = vmatpush1.bf16.msra.mxu0 0
        %1321 = vmatprep.subr.bf16.mxu0 0
        %1322 = vmatpush1.bf16.msra.mxu0 0
        %1323 = vmatprep.subr.bf16.mxu0 0
        %1324 = vmatpush1.bf16.msra.mxu0 0
        %1325 = vmatprep.subr.bf16.mxu0 0
        %1326 = vmatpush1.bf16.msra.mxu0 0
        %1327 = vmatprep.subr.bf16.mxu0 0
        %1328 = vmatpush1.bf16.msra.mxu0 0
        %1329 = vmatprep.subr.bf16.mxu0 0
        %1330 = vmatpush1.bf16.msra.mxu0 0
        %1331 = vmatprep.subr.bf16.mxu0 0
        %1332 = vmatpush1.bf16.msra.mxu0 0
        %1333 = vmatprep.subr.bf16.mxu0 0
        %1334 = vmatpush1.bf16.msra.mxu0 0
        %1335 = vmatprep.subr.bf16.mxu0 0
        %1336 = vmatpush1.bf16.msra.mxu0 0
        %1337 = vmatprep.subr.bf16.mxu0 0
        %1338 = vmatpush1.bf16.msra.mxu0 0
        %1339 = vmatprep.subr.bf16.mxu0 0
        %1340 = vmatpush1.bf16.msra.mxu0 0
        %1341 = vmatprep.subr.bf16.mxu0 0
        %1342 = vmatpush1.bf16.msra.mxu0 0
        %1343 = vmatprep.subr.bf16.mxu0 0
        %1344 = vmatpush1.bf16.msra.mxu0 0
        %1345 = vmatprep.subr.bf16.mxu0 0
        %1346 = vmatpush1.bf16.msra.mxu0 0
        %1347 = vmatprep.subr.bf16.mxu0 0
        %1348 = vmatpush1.bf16.msra.mxu0 0
        %1349 = vmatprep.mubr.bf16.mxu0 0
        %1350 = vmatmul.mubr.bf16.gmra.mrb[0].mxu0 %v1312
        %v1351 = vpop.f32.mrb[0].mxu0
        %v1352 = vadd.f32 0.0, %v1351
        %v1353 = vpop.f32.mrb[0].mxu0
        %v1354 = vpop.f32.mrb[0].mxu0
        %v1355 = vpop.f32.mrb[0].mxu0
        %1356 = vdwg.mxu0
        %1358 = vrot.lane.b32.xlu0 %v1352, 16
        %v1359 = vpop.permute.xlu0 %1358
        %v1361 = vsel %vm1134, %v1240, %v1359
        %v1362 = vpack.c.bf16 %v1361, %v1361
        %v1363 = vld [vmem:[%s9] sm:$0xf]
        %v1364 = vld [vmem:[%s9 + $0x4] sm:$0xf]
        %v1365 = vld [vmem:[%s9 + $0x8] sm:$0xf]
        %v1366 = vld [vmem:[%s9 + $0xc] sm:$0xf]
        %v1367 = vld [vmem:[%s10] sm:$0x1]
        %v1369 = vlaneseq
        %v1370 = vshrl.u32 %v1369, 7
        %v1371 = vsub.s32 0, %v1370
        %v1372 = vrot.slane %v1367, %v1371
        %v1378 = vunpack.c.l.b16 %v1363
        %v1379 = vunpack.c.l.b16 %v1364
        %v1380 = vunpack.c.l.b16 %v1365
        %v1381 = vunpack.c.l.b16 %v1366
        %v1382 = vpack.c.b16 %v1379, %v1378
        %v1383 = vpack.c.b16 %v1381, %v1380
        %v1387 = vsel %vm1020, %v1362, 0
        %1389 = vmatprep.subr.bf16.mxu0 0
        %1390 = vmatpush1.bf16.msra.mxu0 %v1382
        %1391 = vmatprep.subr.bf16.mxu0 0
        %1392 = vmatpush1.bf16.msra.mxu0 %v1383
        %1393 = vmatprep.subr.bf16.mxu0 0
        %1394 = vmatpush1.bf16.msra.mxu0 0
        %1395 = vmatprep.subr.bf16.mxu0 0
        %1396 = vmatpush1.bf16.msra.mxu0 0
        %1397 = vmatprep.subr.bf16.mxu0 0
        %1398 = vmatpush1.bf16.msra.mxu0 0
        %1399 = vmatprep.subr.bf16.mxu0 0
        %1400 = vmatpush1.bf16.msra.mxu0 0
        %1401 = vmatprep.subr.bf16.mxu0 0
        %1402 = vmatpush1.bf16.msra.mxu0 0
        %1403 = vmatprep.subr.bf16.mxu0 0
        %1404 = vmatpush1.bf16.msra.mxu0 0
        %1405 = vmatprep.subr.bf16.mxu0 0
        %1406 = vmatpush1.bf16.msra.mxu0 0
        %1407 = vmatprep.subr.bf16.mxu0 0
        %1408 = vmatpush1.bf16.msra.mxu0 0
        %1409 = vmatprep.subr.bf16.mxu0 0
        %1410 = vmatpush1.bf16.msra.mxu0 0
        %1411 = vmatprep.subr.bf16.mxu0 0
        %1412 = vmatpush1.bf16.msra.mxu0 0
        %1413 = vmatprep.subr.bf16.mxu0 0
        %1414 = vmatpush1.bf16.msra.mxu0 0
        %1415 = vmatprep.subr.bf16.mxu0 0
        %1416 = vmatpush1.bf16.msra.mxu0 0
        %1417 = vmatprep.subr.bf16.mxu0 0
        %1418 = vmatpush1.bf16.msra.mxu0 0
        %1419 = vmatprep.subr.bf16.mxu0 0
        %1420 = vmatpush1.bf16.msra.mxu0 0
        %1421 = vmatprep.mubr.bf16.mxu0 0
        %1422 = vmatmul.mubr.bf16.gmra.mrb[0].mxu0 %v1387
        %v1423 = vpop.f32.mrb[0].mxu0
        %v1424 = vadd.f32 %v1372, %v1423
        %v1425 = vpop.f32.mrb[0].mxu0
        %v1426 = vpop.f32.mrb[0].mxu0
        %v1427 = vpop.f32.mrb[0].mxu0
        %1428 = vdwg.mxu0
        %v1429 = vadd.f32 %v1424, %v974
        %v1430 = vsel %vm1020, %v1429, 0.0
        %1431 = vadd.xlane.f32.xlu0 %v1430
        %v1432 = vpop.xlane.xlu0 %1431
        %v1433 = vrcp.pop 32.0
        %v1434 = vmul.f32 %v1432, %v1433
        %v1435 = vsub.f32 %v1429, %v1434
        %v1436 = vmul.f32 %v1435, %v1435
        %v1437 = vsel %vm1020, %v1436, 0.0
        %1438 = vadd.xlane.f32.xlu0 %v1437
        %v1439 = vpop.xlane.xlu0 %1438
        %v1440 = vmul.f32 %v1439, %v1433
        %v1441 = vadd.f32 %v1440, 1e-05
        %v1442 = vrsqrt.pop %v1441
        %v1443 = vmul.f32 %v1435, %v1442
        %v1444 = vld [vmem:[%s11] sm:$0x1]
        %v1446 = vlaneseq
        %v1447 = vshrl.u32 %v1446, 7
        %v1448 = vsub.s32 0, %v1447
        %v1449 = vrot.slane %v1444, %v1448
        %v1451 = vmul.f32 %v1443, %v1449
        %v1452 = vld [vmem:[%s12] sm:$0x1]
        %v1454 = vlaneseq
        %v1455 = vshrl.u32 %v1454, 7
        %v1456 = vsub.s32 0, %v1455
        %v1457 = vrot.slane %v1452, %v1456
        %v1459 = vadd.f32 %v1451, %v1457
        %v1460 = vpack.c.bf16 %v1459, %v1459
        %v1461 = vld [vmem:[%s13] sm:$0xf]
        %v1462 = vld [vmem:[%s13 + $0x4] sm:$0xf]
        %v1463 = vld [vmem:[%s13 + $0x8] sm:$0xf]
        %v1464 = vld [vmem:[%s13 + $0xc] sm:$0xf]
        %v1465 = vld [vmem:[%s14] sm:$0x1]
        %v1467 = vlaneseq
        %v1468 = vshrl.u32 %v1467, 7
        %v1469 = vsub.s32 0, %v1468
        %v1470 = vrot.slane %v1465, %v1469
        %v1476 = vunpack.c.l.b16 %v1461
        %v1477 = vunpack.c.l.b16 %v1462
        %v1478 = vunpack.c.l.b16 %v1463
        %v1479 = vunpack.c.l.b16 %v1464
        %v1480 = vpack.c.b16 %v1477, %v1476
        %v1481 = vpack.c.b16 %v1479, %v1478
        %v1485 = vsel %vm1020, %v1460, 0
        %1487 = vmatprep.subr.bf16.mxu0 0
        %1488 = vmatpush1.bf16.msra.mxu0 %v1480
        %1489 = vmatprep.subr.bf16.mxu0 0
        %1490 = vmatpush1.bf16.msra.mxu0 %v1481
        %1491 = vmatprep.subr.bf16.mxu0 0
        %1492 = vmatpush1.bf16.msra.mxu0 0
        %1493 = vmatprep.subr.bf16.mxu0 0
        %1494 = vmatpush1.bf16.msra.mxu0 0
        %1495 = vmatprep.subr.bf16.mxu0 0
        %1496 = vmatpush1.bf16.msra.mxu0 0
        %1497 = vmatprep.subr.bf16.mxu0 0
        %1498 = vmatpush1.bf16.msra.mxu0 0
        %1499 = vmatprep.subr.bf16.mxu0 0
        %1500 = vmatpush1.bf16.msra.mxu0 0
        %1501 = vmatprep.subr.bf16.mxu0 0
        %1502 = vmatpush1.bf16.msra.mxu0 0
        %1503 = vmatprep.subr.bf16.mxu0 0
        %1504 = vmatpush1.bf16.msra.mxu0 0
        %1505 = vmatprep.subr.bf16.mxu0 0
        %1506 = vmatpush1.bf16.msra.mxu0 0
        %1507 = vmatprep.subr.bf16.mxu0 0
        %1508 = vmatpush1.bf16.msra.mxu0 0
        %1509 = vmatprep.subr.bf16.mxu0 0
        %1510 = vmatpush1.bf16.msra.mxu0 0
        %1511 = vmatprep.subr.bf16.mxu0 0
        %1512 = vmatpush1.bf16.msra.mxu0 0
        %1513 = vmatprep.subr.bf16.mxu0 0
        %1514 = vmatpush1.bf16.msra.mxu0 0
        %1515 = vmatprep.subr.bf16.mxu0 0
        %1516 = vmatpush1.bf16.msra.mxu0 0
        %1517 = vmatprep.subr.bf16.mxu0 0
        %1518 = vmatpush1.bf16.msra.mxu0 0
        %1519 = vmatprep.mubr.bf16.mxu0 0
        %1520 = vmatmul.mubr.bf16.gmra.mrb[0].mxu0 %v1485
        %v1521 = vpop.f32.mrb[0].mxu0
        %v1522 = vadd.f32 %v1470, %v1521
        %v1523 = vpop.f32.mrb[0].mxu0
        %v1524 = vpop.f32.mrb[0].mxu0
        %v1525 = vpop.f32.mrb[0].mxu0
        %1526 = vdwg.mxu0
        %v1527 = vmul.f32 %v1522, 0.25
        %v1528 = vpack.c.bf16 %v1527, %v1527
        %v1529 = vpack.c.bf16 %v977, %v976
        %v1530 = vld [vmem:[%s15] sm:$0xf]
        %v1531 = vld [vmem:[%s15 + $0x4] sm:$0xf]
        %v1532 = vld [vmem:[%s15 + $0x8] sm:$0xf]
        %v1533 = vld [vmem:[%s15 + $0xc] sm:$0xf]
        %v1534 = vld [vmem:[%s16] sm:$0x1]
        %v1536 = vlaneseq
        %v1537 = vshrl.u32 %v1536, 7
        %v1538 = vsub.s32 0, %v1537
        %v1539 = vrot.slane %v1534, %v1538
        %v1545 = vunpack.c.l.b16 %v1530
        %v1546 = vunpack.c.l.b16 %v1531
        %v1547 = vunpack.c.l.b16 %v1532
        %v1548 = vunpack.c.l.b16 %v1533
        %v1549 = vpack.c.b16 %v1546, %v1545
        %v1550 = vpack.c.b16 %v1548, %v1547
        %v1554 = vsel %vm1020, %v1529, 0
        %1556 = vmatprep.subr.bf16.mxu0 0
        %1557 = vmatpush1.bf16.msra.mxu0 %v1549
        %1558 = vmatprep.subr.bf16.mxu0 0
        %1559 = vmatpush1.bf16.msra.mxu0 %v1550
        %1560 = vmatprep.subr.bf16.mxu0 0
        %1561 = vmatpush1.bf16.msra.mxu0 0
        %1562 = vmatprep.subr.bf16.mxu0 0
        %1563 = vmatpush1.bf16.msra.mxu0 0
        %1564 = vmatprep.subr.bf16.mxu0 0
        %1565 = vmatpush1.bf16.msra.mxu0 0
        %1566 = vmatprep.subr.bf16.mxu0 0
        %1567 = vmatpush1.bf16.msra.mxu0 0
        %1568 = vmatprep.subr.bf16.mxu0 0
        %1569 = vmatpush1.bf16.msra.mxu0 0
        %1570 = vmatprep.subr.bf16.mxu0 0
        %1571 = vmatpush1.bf16.msra.mxu0 0
        %1572 = vmatprep.subr.bf16.mxu0 0
        %1573 = vmatpush1.bf16.msra.mxu0 0
        %1574 = vmatprep.subr.bf16.mxu0 0
        %1575 = vmatpush1.bf16.msra.mxu0 0
        %1576 = vmatprep.subr.bf16.mxu0 0
        %1577 = vmatpush1.bf16.msra.mxu0 0
        %1578 = vmatprep.subr.bf16.mxu0 0
        %1579 = vmatpush1.bf16.msra.mxu0 0
        %1580 = vmatprep.subr.bf16.mxu0 0
        %1581 = vmatpush1.bf16.msra.mxu0 0
        %1582 = vmatprep.subr.bf16.mxu0 0
        %1583 = vmatpush1.bf16.msra.mxu0 0
        %1584 = vmatprep.subr.bf16.mxu0 0
        %1585 = vmatpush1.bf16.msra.mxu0 0
        %1586 = vmatprep.subr.bf16.mxu0 0
        %1587 = vmatpush1.bf16.msra.mxu0 0
        %1588 = vmatprep.mubr.bf16.mxu0 0
        %1589 = vmatmul.mubr.bf16.gmra.mrb[0].mxu0 %v1554
        %v1590 = vpop.f32.mrb[0].mxu0
        %v1591 = vadd.f32 %v1539, %v1590
        %v1592 = vpop.f32.mrb[0].mxu0
        %v1593 = vpop.f32.mrb[0].mxu0
        %v1594 = vadd.f32 %v1539, %v1593
        %v1595 = vpop.f32.mrb[0].mxu0
        %1596 = vdwg.mxu0
        %v1597 = vpack.c.bf16 %v1594, %v1591
        %v1599 = vlaneseq
        %v1600 = vshrl.u32 %v1599, 7
        %v1601 = vsub.s32 0, %v1600
        %v1602 = vrot.slane %v995, %v1601
        %v1605 = vsel %vm1134, %v1528, 0
        %v1608 = vsel %vm1134, %v1597, 0
        %1610 = vmatprep.subr.bf16.mxu0 0
        %1611 = vmatpush1.bf16.xpose.msra.mxu0 %v1608
        %1612 = vmatprep.subr.bf16.mxu0 0
        %1613 = vmatpush1.bf16.xpose.msra.mxu0 0
        %1614 = vmatprep.subr.bf16.mxu0 0
        %1615 = vmatpush1.bf16.xpose.msra.mxu0 0
        %1616 = vmatprep.subr.bf16.mxu0 0
        %1617 = vmatpush1.bf16.xpose.msra.mxu0 0
        %1618 = vmatprep.subr.bf16.mxu0 0
        %1619 = vmatpush1.bf16.xpose.msra.mxu0 0
        %1620 = vmatprep.subr.bf16.mxu0 0
        %1621 = vmatpush1.bf16.xpose.msra.mxu0 0
        %1622 = vmatprep.subr.bf16.mxu0 0
        %1623 = vmatpush1.bf16.xpose.msra.mxu0 0
        %1624 = vmatprep.subr.bf16.mxu0 0
        %1625 = vmatpush1.bf16.xpose.msra.mxu0 0
        %1626 = vmatprep.subr.bf16.mxu0 0
        %1627 = vmatpush1.bf16.xpose.msra.mxu0 0
        %1628 = vmatprep.subr.bf16.mxu0 0
        %1629 = vmatpush1.bf16.xpose.msra.mxu0 0
        %1630 = vmatprep.subr.bf16.mxu0 0
        %1631 = vmatpush1.bf16.xpose.msra.mxu0 0
        %1632 = vmatprep.subr.bf16.mxu0 0
        %1633 = vmatpush1.bf16.xpose.msra.mxu0 0
        %1634 = vmatprep.subr.bf16.mxu0 0
        %1635 = vmatpush1.bf16.xpose.msra.mxu0 0
        %1636 = vmatprep.subr.bf16.mxu0 0
        %1637 = vmatpush1.bf16.xpose.msra.mxu0 0
        %1638 = vmatprep.subr.bf16.mxu0 0
        %1639 = vmatpush1.bf16.xpose.msra.mxu0 0
        %1640 = vmatprep.subr.bf16.mxu0 0
        %1641 = vmatpush1.bf16.xpose.msra.mxu0 0
        %1642 = vmatprep.mubr.bf16.mxu0 0
        %1643 = vmatmul.mubr.bf16.gmra.mrb[0].mxu0 %v1605
        %v1644 = vpop.f32.mrb[0].mxu0
        %v1645 = vadd.f32 %v1602, %v1644
        %v1646 = vpop.f32.mrb[0].mxu0
        %v1647 = vpop.f32.mrb[0].mxu0
        %v1648 = vpop.f32.mrb[0].mxu0
        %1649 = vdwg.mxu0
        %vm1650 = vcmask 80896
        %v1651 = vsel %vm1650, %v1645, -inf
        %1652 = vmax.xlane.f32.xlu0 %v1651
        %v1653 = vpop.xlane.xlu0 %1652
        %v1654 = vsub.f32 %v1645, %v1653
        %v1655 = vmul.f32 %v1654, 1.442695
        %v1656 = vpow.pop %v1655
        %v1657 = vsel %vm1650, %v1656, 0.0
        %1658 = vadd.xlane.f32.xlu0 %v1657
        %v1659 = vpop.xlane.xlu0 %1658
        %v1660 = vrcp.pop %v1659
        %v1661 = vmul.f32 1.0, %v1660
        %v1662 = vmul.f32 %v1656, %v1661
        %v1663 = vpack.c.bf16 %v1662, %v1662
        %1665 = vrot.lane.b32.xlu0 %v1597, 96
        %v1666 = vpop.permute.xlu0 %1665
        %v1668 = vsel %vm1650, %v1663, 0
        %vm1670 = vcmask 1044480
        %v1672 = vsel %vm1670, %v1666, 0
        %1674 = vmatprep.subr.bf16.mxu0 0
        %1675 = vmatpush1.bf16.msra.mxu0 %v1672
        %1676 = vmatprep.subr.bf16.mxu0 0
        %1677 = vmatpush1.bf16.msra.mxu0 0
        %1678 = vmatprep.subr.bf16.mxu0 0
        %1679 = vmatpush1.bf16.msra.mxu0 0
        %1680 = vmatprep.subr.bf16.mxu0 0
        %1681 = vmatpush1.bf16.msra.mxu0 0
        %1682 = vmatprep.subr.bf16.mxu0 0
        %1683 = vmatpush1.bf16.msra.mxu0 0
        %1684 = vmatprep.subr.bf16.mxu0 0
        %1685 = vmatpush1.bf16.msra.mxu0 0
        %1686 = vmatprep.subr.bf16.mxu0 0
        %1687 = vmatpush1.bf16.msra.mxu0 0
        %1688 = vmatprep.subr.bf16.mxu0 0
        %1689 = vmatpush1.bf16.msra.mxu0 0
        %1690 = vmatprep.subr.bf16.mxu0 0
        %1691 = vmatpush1.bf16.msra.mxu0 0
        %1692 = vmatprep.subr.bf16.mxu0 0
        %1693 = vmatpush1.bf16.msra.mxu0 0
        %1694 = vmatprep.subr.bf16.mxu0 0
        %1695 = vmatpush1.bf16.msra.mxu0 0
        %1696 = vmatprep.subr.bf16.mxu0 0
        %1697 = vmatpush1.bf16.msra.mxu0 0
        %1698 = vmatprep.subr.bf16.mxu0 0
        %1699 = vmatpush1.bf16.msra.mxu0 0
        %1700 = vmatprep.subr.bf16.mxu0 0
        %1701 = vmatpush1.bf16.msra.mxu0 0
        %1702 = vmatprep.subr.bf16.mxu0 0
        %1703 = vmatpush1.bf16.msra.mxu0 0
        %1704 = vmatprep.subr.bf16.mxu0 0
        %1705 = vmatpush1.bf16.msra.mxu0 0
        %1706 = vmatprep.mubr.bf16.mxu0 0
        %1707 = vmatmul.mubr.bf16.gmra.mrb[0].mxu0 %v1668
        %v1708 = vpop.f32.mrb[0].mxu0
        %v1709 = vadd.f32 0.0, %v1708
        %v1710 = vpop.f32.mrb[0].mxu0
        %v1711 = vpop.f32.mrb[0].mxu0
        %v1712 = vpop.f32.mrb[0].mxu0
        %1713 = vdwg.mxu0
        %1715 = vrot.lane.b32.xlu0 %v1528, 112
        %v1716 = vpop.permute.xlu0 %1715
        %1717 = vrot.lane.b32.xlu0 %v1597, 112
        %v1718 = vpop.permute.xlu0 %1717
        %v1720 = vsel %vm1134, %v1716, 0
        %v1723 = vsel %vm1134, %v1718, 0
        %1725 = vmatprep.subr.bf16.mxu0 0
        %1726 = vmatpush1.bf16.xpose.msra.mxu0 %v1723
        %1727 = vmatprep.subr.bf16.mxu0 0
        %1728 = vmatpush1.bf16.xpose.msra.mxu0 0
        %1729 = vmatprep.subr.bf16.mxu0 0
        %1730 = vmatpush1.bf16.xpose.msra.mxu0 0
        %1731 = vmatprep.subr.bf16.mxu0 0
        %1732 = vmatpush1.bf16.xpose.msra.mxu0 0
        %1733 = vmatprep.subr.bf16.mxu0 0
        %1734 = vmatpush1.bf16.xpose.msra.mxu0 0
        %1735 = vmatprep.subr.bf16.mxu0 0
        %1736 = vmatpush1.bf16.xpose.msra.mxu0 0
        %1737 = vmatprep.subr.bf16.mxu0 0
        %1738 = vmatpush1.bf16.xpose.msra.mxu0 0
        %1739 = vmatprep.subr.bf16.mxu0 0
        %1740 = vmatpush1.bf16.xpose.msra.mxu0 0
        %1741 = vmatprep.subr.bf16.mxu0 0
        %1742 = vmatpush1.bf16.xpose.msra.mxu0 0
        %1743 = vmatprep.subr.bf16.mxu0 0
        %1744 = vmatpush1.bf16.xpose.msra.mxu0 0
        %1745 = vmatprep.subr.bf16.mxu0 0
        %1746 = vmatpush1.bf16.xpose.msra.mxu0 0
        %1747 = vmatprep.subr.bf16.mxu0 0
        %1748 = vmatpush1.bf16.xpose.msra.mxu0 0
        %1749 = vmatprep.subr.bf16.mxu0 0
        %1750 = vmatpush1.bf16.xpose.msra.mxu0 0
        %1751 = vmatprep.subr.bf16.mxu0 0
        %1752 = vmatpush1.bf16.xpose.msra.mxu0 0
        %1753 = vmatprep.subr.bf16.mxu0 0
        %1754 = vmatpush1.bf16.xpose.msra.mxu0 0
        %1755 = vmatprep.subr.bf16.mxu0 0
        %1756 = vmatpush1.bf16.xpose.msra.mxu0 0
        %1757 = vmatprep.mubr.bf16.mxu0 0
        %1758 = vmatmul.mubr.bf16.gmra.mrb[0].mxu0 %v1720
        %v1759 = vpop.f32.mrb[0].mxu0
        %v1760 = vadd.f32 %v1602, %v1759
        %v1761 = vpop.f32.mrb[0].mxu0
        %v1762 = vpop.f32.mrb[0].mxu0
        %v1763 = vpop.f32.mrb[0].mxu0
        %1764 = vdwg.mxu0
        %v1765 = vsel %vm1650, %v1760, -inf
        %1766 = vmax.xlane.f32.xlu0 %v1765
        %v1767 = vpop.xlane.xlu0 %1766
        %v1768 = vsub.f32 %v1760, %v1767
        %v1769 = vmul.f32 %v1768, 1.442695
        %v1770 = vpow.pop %v1769
        %v1771 = vsel %vm1650, %v1770, 0.0
        %1772 = vadd.xlane.f32.xlu0 %v1771
        %v1773 = vpop.xlane.xlu0 %1772
        %v1774 = vrcp.pop %v1773
        %v1775 = vmul.f32 1.0, %v1774
        %v1776 = vmul.f32 %v1770, %v1775
        %v1777 = vpack.c.bf16 %v1776, %v1776
        %1778 = vrot.lane.b32.xlu0 %v1597, 80
        %v1779 = vpop.permute.xlu0 %1778
        %v1781 = vsel %vm1650, %v1777, 0
        %v1784 = vsel %vm1670, %v1779, 0
        %1786 = vmatprep.subr.bf16.mxu0 0
        %1787 = vmatpush1.bf16.msra.mxu0 %v1784
        %1788 = vmatprep.subr.bf16.mxu0 0
        %1789 = vmatpush1.bf16.msra.mxu0 0
        %1790 = vmatprep.subr.bf16.mxu0 0
        %1791 = vmatpush1.bf16.msra.mxu0 0
        %1792 = vmatprep.subr.bf16.mxu0 0
        %1793 = vmatpush1.bf16.msra.mxu0 0
        %1794 = vmatprep.subr.bf16.mxu0 0
        %1795 = vmatpush1.bf16.msra.mxu0 0
        %1796 = vmatprep.subr.bf16.mxu0 0
        %1797 = vmatpush1.bf16.msra.mxu0 0
        %1798 = vmatprep.subr.bf16.mxu0 0
        %1799 = vmatpush1.bf16.msra.mxu0 0
        %1800 = vmatprep.subr.bf16.mxu0 0
        %1801 = vmatpush1.bf16.msra.mxu0 0
        %1802 = vmatprep.subr.bf16.mxu0 0
        %1803 = vmatpush1.bf16.msra.mxu0 0
        %1804 = vmatprep.subr.bf16.mxu0 0
        %1805 = vmatpush1.bf16.msra.mxu0 0
        %1806 = vmatprep.subr.bf16.mxu0 0
        %1807 = vmatpush1.bf16.msra.mxu0 0
        %1808 = vmatprep.subr.bf16.mxu0 0
        %1809 = vmatpush1.bf16.msra.mxu0 0
        %1810 = vmatprep.subr.bf16.mxu0 0
        %1811 = vmatpush1.bf16.msra.mxu0 0
        %1812 = vmatprep.subr.bf16.mxu0 0
        %1813 = vmatpush1.bf16.msra.mxu0 0
        %1814 = vmatprep.subr.bf16.mxu0 0
        %1815 = vmatpush1.bf16.msra.mxu0 0
        %1816 = vmatprep.subr.bf16.mxu0 0
        %1817 = vmatpush1.bf16.msra.mxu0 0
        %1818 = vmatprep.mubr.bf16.mxu0 0
        %1819 = vmatmul.mubr.bf16.gmra.mrb[0].mxu0 %v1781
        %v1820 = vpop.f32.mrb[0].mxu0
        %v1821 = vadd.f32 0.0, %v1820
        %v1822 = vpop.f32.mrb[0].mxu0
        %v1823 = vpop.f32.mrb[0].mxu0
        %v1824 = vpop.f32.mrb[0].mxu0
        %1825 = vdwg.mxu0
        %1827 = vrot.lane.b32.xlu0 %v1821, 16
        %v1828 = vpop.permute.xlu0 %1827
        %v1830 = vsel %vm1134, %v1709, %v1828
        %v1831 = vpack.c.bf16 %v1830, %v1830
        %v1832 = vld [vmem:[%s17] sm:$0xf]
        %v1833 = vld [vmem:[%s17 + $0x4] sm:$0xf]
        %v1834 = vld [vmem:[%s17 + $0x8] sm:$0xf]
        %v1835 = vld [vmem:[%s17 + $0xc] sm:$0xf]
        %v1836 = vld [vmem:[%s18] sm:$0x1]
        %v1838 = vlaneseq
        %v1839 = vshrl.u32 %v1838, 7
        %v1840 = vsub.s32 0, %v1839
        %v1841 = vrot.slane %v1836, %v1840
        %v1847 = vunpack.c.l.b16 %v1832
        %v1848 = vunpack.c.l.b16 %v1833
        %v1849 = vunpack.c.l.b16 %v1834
        %v1850 = vunpack.c.l.b16 %v1835
        %v1851 = vpack.c.b16 %v1848, %v1847
        %v1852 = vpack.c.b16 %v1850, %v1849
        %v1856 = vsel %vm1020, %v1831, 0
        %1858 = vmatprep.subr.bf16.mxu0 0
        %1859 = vmatpush1.bf16.msra.mxu0 %v1851
        %1860 = vmatprep.subr.bf16.mxu0 0
        %1861 = vmatpush1.bf16.msra.mxu0 %v1852
        %1862 = vmatprep.subr.bf16.mxu0 0
        %1863 = vmatpush1.bf16.msra.mxu0 0
        %1864 = vmatprep.subr.bf16.mxu0 0
        %1865 = vmatpush1.bf16.msra.mxu0 0
        %1866 = vmatprep.subr.bf16.mxu0 0
        %1867 = vmatpush1.bf16.msra.mxu0 0
        %1868 = vmatprep.subr.bf16.mxu0 0
        %1869 = vmatpush1.bf16.msra.mxu0 0
        %1870 = vmatprep.subr.bf16.mxu0 0
        %1871 = vmatpush1.bf16.msra.mxu0 0
        %1872 = vmatprep.subr.bf16.mxu0 0
        %1873 = vmatpush1.bf16.msra.mxu0 0
        %1874 = vmatprep.subr.bf16.mxu0 0
        %1875 = vmatpush1.bf16.msra.mxu0 0
        %1876 = vmatprep.subr.bf16.mxu0 0
        %1877 = vmatpush1.bf16.msra.mxu0 0
        %1878 = vmatprep.subr.bf16.mxu0 0
        %1879 = vmatpush1.bf16.msra.mxu0 0
        %1880 = vmatprep.subr.bf16.mxu0 0
        %1881 = vmatpush1.bf16.msra.mxu0 0
        %1882 = vmatprep.subr.bf16.mxu0 0
        %1883 = vmatpush1.bf16.msra.mxu0 0
        %1884 = vmatprep.subr.bf16.mxu0 0
        %1885 = vmatpush1.bf16.msra.mxu0 0
        %1886 = vmatprep.subr.bf16.mxu0 0
        %1887 = vmatpush1.bf16.msra.mxu0 0
        %1888 = vmatprep.subr.bf16.mxu0 0
        %1889 = vmatpush1.bf16.msra.mxu0 0
        %1890 = vmatprep.mubr.bf16.mxu0 0
        %1891 = vmatmul.mubr.bf16.gmra.mrb[0].mxu0 %v1856
        %v1892 = vpop.f32.mrb[0].mxu0
        %v1893 = vadd.f32 %v1841, %v1892
        %v1894 = vpop.f32.mrb[0].mxu0
        %v1895 = vpop.f32.mrb[0].mxu0
        %v1896 = vpop.f32.mrb[0].mxu0
        %1897 = vdwg.mxu0
        %v1898 = vadd.f32 %v1893, %v1459
        %v1899 = vsel %vm1020, %v1898, 0.0
        %1900 = vadd.xlane.f32.xlu0 %v1899
        %v1901 = vpop.xlane.xlu0 %1900
        %v1902 = vmul.f32 %v1901, %v1433
        %v1903 = vsub.f32 %v1898, %v1902
        %v1904 = vmul.f32 %v1903, %v1903
        %v1905 = vsel %vm1020, %v1904, 0.0
        %1906 = vadd.xlane.f32.xlu0 %v1905
        %v1907 = vpop.xlane.xlu0 %1906
        %v1908 = vmul.f32 %v1907, %v1433
        %v1909 = vadd.f32 %v1908, 1e-05
        %v1910 = vrsqrt.pop %v1909
        %v1911 = vmul.f32 %v1903, %v1910
        %v1912 = vld [vmem:[%s19] sm:$0x1]
        %v1914 = vlaneseq
        %v1915 = vshrl.u32 %v1914, 7
        %v1916 = vsub.s32 0, %v1915
        %v1917 = vrot.slane %v1912, %v1916
        %v1919 = vmul.f32 %v1911, %v1917
        %v1920 = vld [vmem:[#allocation2] sm:$0x1]
        %v1922 = vlaneseq
        %v1923 = vshrl.u32 %v1922, 7
        %v1924 = vsub.s32 0, %v1923
        %v1925 = vrot.slane %v1920, %v1924
        %v1927 = vadd.f32 %v1919, %v1925
        %v1928 = vpack.c.bf16 %v1927, %v1927
        %v1929 = vld [vmem:[%s21] sm:$0xf]
        %v1930 = vld [vmem:[%s21 + $0x4] sm:$0xf]
        %v1931 = vld [vmem:[%s21 + $0x8] sm:$0xf]
        %v1932 = vld [vmem:[%s21 + $0xc] sm:$0xf]
        %v1933 = vld [vmem:[#allocation4] sm:$0x1]
        %v1935 = vlaneseq
        %v1936 = vshrl.u32 %v1935, 7
        %v1937 = vsub.s32 0, %v1936
        %v1938 = vrot.slane %v1933, %v1937
        %v1944 = vunpack.c.l.b16 %v1929
        %v1945 = vunpack.c.l.b16 %v1930
        %v1946 = vunpack.c.l.b16 %v1931
        %v1947 = vunpack.c.l.b16 %v1932
        %v1948 = vpack.c.b16 %v1945, %v1944
        %v1949 = vpack.c.b16 %v1947, %v1946
        %v1953 = vsel %vm1020, %v1928, 0
        %1955 = vmatprep.subr.bf16.mxu0 0
        %1956 = vmatpush1.bf16.msra.mxu0 %v1948
        %1957 = vmatprep.subr.bf16.mxu0 0
        %1958 = vmatpush1.bf16.msra.mxu0 %v1949
        %1959 = vmatprep.subr.bf16.mxu0 0
        %1960 = vmatpush1.bf16.msra.mxu0 0
        %1961 = vmatprep.subr.bf16.mxu0 0
        %1962 = vmatpush1.bf16.msra.mxu0 0
        %1963 = vmatprep.subr.bf16.mxu0 0
        %1964 = vmatpush1.bf16.msra.mxu0 0
        %1965 = vmatprep.subr.bf16.mxu0 0
        %1966 = vmatpush1.bf16.msra.mxu0 0
        %1967 = vmatprep.subr.bf16.mxu0 0
        %1968 = vmatpush1.bf16.msra.mxu0 0
        %1969 = vmatprep.subr.bf16.mxu0 0
        %1970 = vmatpush1.bf16.msra.mxu0 0
        %1971 = vmatprep.subr.bf16.mxu0 0
        %1972 = vmatpush1.bf16.msra.mxu0 0
        %1973 = vmatprep.subr.bf16.mxu0 0
        %1974 = vmatpush1.bf16.msra.mxu0 0
        %1975 = vmatprep.subr.bf16.mxu0 0
        %1976 = vmatpush1.bf16.msra.mxu0 0
        %1977 = vmatprep.subr.bf16.mxu0 0
        %1978 = vmatpush1.bf16.msra.mxu0 0
        %1979 = vmatprep.subr.bf16.mxu0 0
        %1980 = vmatpush1.bf16.msra.mxu0 0
        %1981 = vmatprep.subr.bf16.mxu0 0
        %1982 = vmatpush1.bf16.msra.mxu0 0
        %1983 = vmatprep.subr.bf16.mxu0 0
        %1984 = vmatpush1.bf16.msra.mxu0 0
        %1985 = vmatprep.subr.bf16.mxu0 0
        %1986 = vmatpush1.bf16.msra.mxu0 0
        %1987 = vmatprep.mubr.bf16.mxu0 0
        %1988 = vmatmul.mubr.bf16.gmra.mrb[0].mxu0 %v1953
        %v1989 = vpop.f32.mrb[0].mxu0
        %v1990 = vadd.f32 %v1938, %v1989
        %v1991 = vpop.f32.mrb[0].mxu0
        %v1992 = vpop.f32.mrb[0].mxu0
        %v1993 = vpop.f32.mrb[0].mxu0
        %1994 = vdwg.mxu0
        %v1995 = vmax.f32 %v1990, 0.0
        %v1996 = vpack.c.bf16 %v1995, %v1995
        %v1997 = vld [vmem:[%s23] sm:$0xf]
        %v1998 = vld [vmem:[%s23 + $0x4] sm:$0xf]
        %v1999 = vld [vmem:[%s23 + $0x8] sm:$0xf]
        %v2000 = vld [vmem:[%s23 + $0xc] sm:$0xf]
        %v2001 = vld [vmem:[%s23 + $0x10] sm:$0xf]
        %v2002 = vld [vmem:[%s23 + $0x14] sm:$0xf]
        %v2003 = vld [vmem:[%s23 + $0x18] sm:$0xf]
        %v2004 = vld [vmem:[%s23 + $0x1c] sm:$0xf]
        %v2005 = vld [vmem:[#allocation6] sm:$0x1]
        %v2007 = vlaneseq
        %v2008 = vshrl.u32 %v2007, 7
        %v2009 = vsub.s32 0, %v2008
        %v2010 = vrot.slane %v2005, %v2009
        %v2020 = vunpack.c.l.b16 %v1997
        %v2021 = vunpack.c.l.b16 %v1998
        %v2022 = vunpack.c.l.b16 %v1999
        %v2023 = vunpack.c.l.b16 %v2000
        %v2024 = vunpack.c.l.b16 %v2001
        %v2025 = vunpack.c.l.b16 %v2002
        %v2026 = vunpack.c.l.b16 %v2003
        %v2027 = vunpack.c.l.b16 %v2004
        %v2028 = vpack.c.b16 %v2021, %v2020
        %v2029 = vpack.c.b16 %v2023, %v2022
        %v2030 = vpack.c.b16 %v2025, %v2024
        %v2031 = vpack.c.b16 %v2027, %v2026
        %vm2036 = vcmask 523264
        %v2038 = vsel %vm2036, %v1996, 0
        %2040 = vmatprep.subr.bf16.mxu0 0
        %2041 = vmatpush1.bf16.msra.mxu0 %v2028
        %2042 = vmatprep.subr.bf16.mxu0 0
        %2043 = vmatpush1.bf16.msra.mxu0 %v2029
        %2044 = vmatprep.subr.bf16.mxu0 0
        %2045 = vmatpush1.bf16.msra.mxu0 %v2030
        %2046 = vmatprep.subr.bf16.mxu0 0
        %2047 = vmatpush1.bf16.msra.mxu0 %v2031
        %2048 = vmatprep.subr.bf16.mxu0 0
        %2049 = vmatpush1.bf16.msra.mxu0 0
        %2050 = vmatprep.subr.bf16.mxu0 0
        %2051 = vmatpush1.bf16.msra.mxu0 0
        %2052 = vmatprep.subr.bf16.mxu0 0
        %2053 = vmatpush1.bf16.msra.mxu0 0
        %2054 = vmatprep.subr.bf16.mxu0 0
        %2055 = vmatpush1.bf16.msra.mxu0 0
        %2056 = vmatprep.subr.bf16.mxu0 0
        %2057 = vmatpush1.bf16.msra.mxu0 0
        %2058 = vmatprep.subr.bf16.mxu0 0
        %2059 = vmatpush1.bf16.msra.mxu0 0
        %2060 = vmatprep.subr.bf16.mxu0 0
        %2061 = vmatpush1.bf16.msra.mxu0 0
        %2062 = vmatprep.subr.bf16.mxu0 0
        %2063 = vmatpush1.bf16.msra.mxu0 0
        %2064 = vmatprep.subr.bf16.mxu0 0
        %2065 = vmatpush1.bf16.msra.mxu0 0
        %2066 = vmatprep.subr.bf16.mxu0 0
        %2067 = vmatpush1.bf16.msra.mxu0 0
        %2068 = vmatprep.subr.bf16.mxu0 0
        %2069 = vmatpush1.bf16.msra.mxu0 0
        %2070 = vmatprep.subr.bf16.mxu0 0
        %2071 = vmatpush1.bf16.msra.mxu0 0
        %2072 = vmatprep.mubr.bf16.mxu0 0
        %2073 = vmatmul.mubr.bf16.gmra.mrb[0].mxu0 %v2038
        %v2074 = vpop.f32.mrb[0].mxu0
        %v2075 = vadd.f32 %v2010, %v2074
        %v2076 = vpop.f32.mrb[0].mxu0
        %v2077 = vpop.f32.mrb[0].mxu0
        %v2078 = vpop.f32.mrb[0].mxu0
        %2079 = vdwg.mxu0
        %v2080 = vadd.f32 %v2075, %v1927
        %v2081 = vsel %vm1020, %v2080, 0.0
        %2082 = vadd.xlane.f32.xlu0 %v2081
        %v2083 = vpop.xlane.xlu0 %2082
        %v2084 = vmul.f32 %v2083, %v1433
        %v2085 = vsub.f32 %v2080, %v2084
        %v2086 = vmul.f32 %v2085, %v2085
        %v2087 = vsel %vm1020, %v2086, 0.0
        %2088 = vadd.xlane.f32.xlu0 %v2087
        %v2089 = vpop.xlane.xlu0 %2088
        %v2090 = vmul.f32 %v2089, %v1433
        %v2091 = vadd.f32 %v2090, 1e-05
        %v2092 = vrsqrt.pop %v2091
        %v2093 = vmul.f32 %v2085, %v2092
        %v2094 = vld [vmem:[#allocation7] sm:$0x1]
        %v2096 = vlaneseq
        %v2097 = vshrl.u32 %v2096, 7
        %v2098 = vsub.s32 0, %v2097
        %v2099 = vrot.slane %v2094, %v2098
        %v2101 = vmul.f32 %v2093, %v2099
        %v2102 = vld [vmem:[#allocation9] sm:$0x1]
        %v2104 = vlaneseq
        %v2105 = vshrl.u32 %v2104, 7
        %v2106 = vsub.s32 0, %v2105
        %v2107 = vrot.slane %v2102, %v2106
        %v2109 = vadd.f32 %v2101, %v2107
        %2110 = vst.msk [vmem:[%s972] sm:$0xff] %vm1020, %v2109
        %p2111 = scmp.lt.s32.totalorder %s45, 1
        %s2112 = scalar_select %p2111, %s45, 1
        %p2113 = scmp.lt.s32.totalorder %s46, 0
        %s2114 = scalar_select %p2113, %s46, 0
        %s2115 = sadd.s32 %s2114, %s2112
        %s2116 = smul.addr %s2115, 8
        %s2117 = scalar_lea.vmem %s27, %s2116
        // Predicated region
        $region149: #{decoder_forward.4} parent=127 // pred_check
          %p2118 = pneg %p667
        $region150: #{decoder_forward.4} parent=127 // pred_check_branch
          %2120 = sbr.rel (%p2118) target = $region152
        $region151: #{decoder_forward.4} parent=127 // pred_region
          _
        $region152: #{decoder_forward.4} parent=127 // pred_fallthru
          _
      $region128: #{decoder_forward.4} parent=5 // pred_fallthru
        _
      %p2121 = scmp.le.s32.totalorder 2, %s36
      // Predicated region
      $region153: #{decoder_forward.4} parent=5 // pred_check
        %p2122 = pneg %p2121
      $region154: #{decoder_forward.4} parent=5 // pred_check_branch
        %2124 = sbr.rel (%p2122) target = $region156
      $region155: #{decoder_forward.4} parent=5 // pred_region
        %s2125 = ssub.s32 %s36, 2
        // Predicated region
        $region157: #{decoder_forward.4} parent=155 // pred_check
          %p2126 = pneg %p673
        $region158: #{decoder_forward.4} parent=155 // pred_check_branch
          %2128 = sbr.rel (%p2126) target = $region160
        $region159: #{decoder_forward.4} parent=155 // pred_region
          %p2129 = scmp.lt.s32.totalorder %s47, 1
          %s2130 = scalar_select %p2129, %s47, 1
          %p2131 = scmp.lt.s32.totalorder %s48, 0
          %s2132 = scalar_select %p2131, %s48, 0
          %s2133 = sadd.s32 %s2132, %s2130
          %s2134 = smul.addr %s2133, 8
          %s2135 = scalar_lea.vmem %s27, %s2134
        $region160: #{decoder_forward.4} parent=155 // pred_fallthru
          _
      $region156: #{decoder_forward.4} parent=5 // pred_fallthru
        _
    $region6: #{decoder_forward.4} parent=1 // loop_footer
      %s40 = sadd.s32 1, %s36
    $region7: #{decoder_forward.4} parent=1 // loop_footer_branch
      %35 = sbr.rel target = $region3
    $region8: #{decoder_forward.4} parent=1 // loop_exit
      _
    %2136 = vsyncpa [#allocation3], 1
    %s2137 = scalar_lea.sflag [#allocation3], 1
    %2138 = vsyncpa %s2137, 1
    %2139 = vsyncpa [#allocation5], 1
    %2140 = vsyncpa [#allocation8], 1

</llo_original>
